<compile_context>
chip_gen: v7x
topology: tpu7x:2x2x1
jax: 0.10.0
libtpu: 0.0.40
codegen_flags: <defaults>
</compile_context>

<pallas_src>
import jax
import jax.numpy as jnp
from jax.experimental import pallas as pl
from jax.experimental.pallas import tpu as pltpu


def _asinh_kernel(x_ref, o_ref):
    x = x_ref[...].astype(jnp.float32)
    ax = jnp.abs(x)
    # sqrt(ax^2 + 1); for ax > 1e10 the +1 is below f32 precision anyway and
    # ax*ax may overflow to inf, so select ax directly (exact for ax > 2^12,
    # keeps the result finite/NaN-free up to ax ~ 1.7e38).
    sq = jnp.sqrt(ax * ax + 1.0)
    sq = jnp.where(ax > 1e10, ax, sq)
    # asinh(|x|) = log(|x| + sqrt(x^2+1)) = log1p(|x| + (sqrt(x^2+1) - 1))
    # The identity ax^2/(1+sq) == sq - 1 removes the divide -> only two EUP
    # pushes per element (sqrt, log1p).
    y = jnp.log1p(ax + (sq - 1.0))
    # Copy the sign bit of x onto y (cheaper than sign(x)*y: a single
    # AND/OR pair on the VPU, no compare-select-multiply chain).
    sign_bit = pltpu.bitcast(x, jnp.uint32) & jnp.uint32(0x80000000)
    signed = pltpu.bitcast(pltpu.bitcast(y, jnp.uint32) | sign_bit, jnp.float32)
    o_ref[...] = signed.astype(o_ref.dtype)


def _pick_slab(n, sub):
    """Lane-dense (rows, lane) view of the flat tensor, or None if awkward."""
    for lane in (4096, 2048, 1024, 512, 256, 128):
        if n % lane:
            continue
        rows = n // lane
        # Either clean sublane tiling (rows % sub == 0) or small enough that a
        # single full-extent block is legal (rows < sub).
        if rows % sub == 0 or rows < sub:
            return rows, lane
    return None


def _pick_tm(rows, lane, sub, total_bytes):
    """Rows per block: multiple of `sub` dividing `rows`, block <= ~4 MiB f32,
    and (for tensors > 1 MiB) at least 2 blocks so both v7x TCs get work."""
    if rows % sub != 0:
        return rows  # rows < sub: one full-extent block
    cap = max(sub, (1 << 20) // lane)          # <= 1 Mi f32 elems (~4 MiB) per buffer
    if total_bytes > (1 << 20) and rows >= 2 * sub:
        cap = min(cap, rows // 2)              # guarantee grid >= 2 (megacore / 2 TCs)
    cap = min(cap, rows)
    cap -= cap % sub
    cap = max(cap, sub)
    for tm in range(cap, 0, -sub):
        if rows % tm == 0:
            return tm
    return sub


def asinh_pallas(x):
    orig_shape = x.shape
    dtype = x.dtype
    n = x.size
    itemsize = jnp.dtype(dtype).itemsize

    # Non-float / exotic dtypes: let XLA handle promotion & math.
    if (not jnp.issubdtype(dtype, jnp.floating)) or itemsize not in (2, 4):
        return jnp.arcsinh(x)

    sub = 8 if itemsize == 4 else 16           # packed dtypes tile as (16,128)

    slab = _pick_slab(n, sub)
    # Tiny or non-128-divisible inputs: pallas_call launch + DMA pipeline setup
    # dominates; XLA's fused arcsinh is already at roofline for such sizes.
    if slab is None or n < 64 * 1024:
        return jnp.arcsinh(x)

    rows, lane = slab
    tm = _pick_tm(rows, lane, sub, n * itemsize)
    grid = (rows // tm,)

    x2d = x.reshape(rows, lane)

    out2d = pl.pallas_call(
        _asinh_kernel,
        out_shape=jax.ShapeDtypeStruct((rows, lane), dtype),
        grid_spec=pltpu.PrefetchScalarGridSpec(
            num_scalar_prefetch=0,
            grid=grid,
            in_specs=[pl.BlockSpec((tm, lane), lambda i: (i, 0))],
            out_specs=pl.BlockSpec((tm, lane), lambda i: (i, 0)),
        ),
        compiler_params=pltpu.CompilerParams(
            dimension_semantics=("parallel",),
            # Safe on v5e/v6e (128 MiB physical, raises the 16 MiB v5e default)
            # and equal to the v7x scoped default (32 of 64 MiB).
            vmem_limit_bytes=32 << 20,
        ),
        cost_estimate=pl.CostEstimate(
            flops=8 * n,
            transcendentals=2 * n,             # sqrt + log1p per element
            bytes_accessed=2 * n * itemsize,
        ),
    )(x2d)

    return out2d.reshape(orig_shape)


if __name__ == "__main__":
    key = jax.random.PRNGKey(0)
    k1, k2 = jax.random.split(key)

    # Small shape consistent with the module (takes the tiny-input fast path).
    x_small = jax.random.normal(k1, (2, 4, 16, 16), dtype=jnp.float32) * 3.0
    # Larger activation that exercises the Pallas kernel path.
    x_large = jax.random.normal(k2, (2, 4, 128, 128), dtype=jnp.float32) * 3.0

    for x in (x_small, x_large):
        y = asinh_pallas(x)
        jax.block_until_ready(y)
        y_ref = jnp.arcsinh(x)
        assert y.shape == x.shape and y.dtype == x.dtype
        assert float(jnp.max(jnp.abs(y - y_ref))) < 1e-5, "mismatch vs jnp.arcsinh"

    print("KERNEL_OK")
</pallas_src>

<mosaic_0001>
module attributes {stable_mosaic.version = 11 : i64} {
  func.func @_asinh_kernel(%arg0: i32, %arg1: memref<32x4096xf32, #tpu.memory_space<vmem>>, %arg2: memref<32x4096xf32, #tpu.memory_space<vmem>>) attributes {dimension_semantics = [#tpu.dimension_semantics<parallel>], iteration_bounds = array<i64: 1>, scalar_prefetch = 0 : i64, scratch_operands = 0 : i64, tpu.core_type = #tpu.core_type<tc>, window_params = [{transform_indices = @transform_0, window_bounds = array<i64: 32, 4096>}, {transform_indices = @transform_1, window_bounds = array<i64: 32, 4096>}]} {
    %c0 = arith.constant 0 : index
    %c0_0 = arith.constant 0 : index
    %0 = vector.load %arg1[%c0, %c0_0] : memref<32x4096xf32, #tpu.memory_space<vmem>>, vector<32x4096xf32>
    %1 = math.absf %0 : vector<32x4096xf32>
    %2 = arith.mulf %1, %1 : vector<32x4096xf32>
    %cst = arith.constant 1.000000e+00 : f32
    %3 = vector.broadcast %cst : f32 to vector<32x4096xf32>
    %4 = arith.addf %2, %3 : vector<32x4096xf32>
    %5 = math.sqrt %4 : vector<32x4096xf32>
    %cst_1 = arith.constant 1.000000e+10 : f32
    %6 = vector.broadcast %cst_1 : f32 to vector<32x4096xf32>
    %7 = arith.cmpf ogt, %1, %6 : vector<32x4096xf32>
    %8 = arith.select %7, %1, %5 : vector<32x4096xi1>, vector<32x4096xf32>
    %cst_2 = arith.constant 1.000000e+00 : f32
    %9 = vector.broadcast %cst_2 : f32 to vector<32x4096xf32>
    %10 = arith.subf %8, %9 : vector<32x4096xf32>
    %11 = arith.addf %1, %10 : vector<32x4096xf32>
    %12 = math.log1p %11 : vector<32x4096xf32>
    %13 = tpu.bitcast %0 : vector<32x4096xf32> -> vector<32x4096xi32>
    %c-2147483648_i32 = arith.constant -2147483648 : i32
    %14 = vector.broadcast %c-2147483648_i32 : i32 to vector<32x4096xi32>
    %15 = arith.andi %13, %14 : vector<32x4096xi32>
    %16 = tpu.bitcast %12 : vector<32x4096xf32> -> vector<32x4096xi32>
    %17 = arith.ori %16, %15 : vector<32x4096xi32>
    %18 = tpu.bitcast %17 : vector<32x4096xi32> -> vector<32x4096xf32>
    %c0_3 = arith.constant 0 : index
    %c0_4 = arith.constant 0 : index
    %19 = vector.load %arg2[%c0_3, %c0_4] : memref<32x4096xf32, #tpu.memory_space<vmem>>, vector<32x4096xf32>
    tpu.vector_store %arg2[%c0_3, %c0_4], %18 {strides = array<i32>} : memref<32x4096xf32, #tpu.memory_space<vmem>>, vector<32x4096xf32>,
    return
  }
  func.func @transform_0(%arg0: i32) -> (i32, i32) {
    %c0_i32 = arith.constant 0 : i32
    %c0_i32_0 = arith.constant 0 : i32
    return %arg0, %c0_i32 : i32, i32
  }
  func.func @transform_1(%arg0: i32) -> (i32, i32) {
    %c0_i32 = arith.constant 0 : i32
    %c0_i32_0 = arith.constant 0 : i32
    return %arg0, %c0_i32 : i32, i32
  }
}

</mosaic_0001>

<llo_original>
// kernel: tpu_custom_call.1
$region0: #{tpu_custom_call.1}
  #allocation0 [shape = 'u32[]', space=smem, size = 0x4, offset = 0x4, fixed_abs, tag = 'smem constant byte address 0x4 - core index']
  #allocation1 [shape = 'u32[144,128]{1,0:T(1,128)}', space=vmem, size = 0x12000, scoped, tag = 'internal scratch']
  %s0 = inlined_call_operand.hbm [shape: f32[32,4096], index: 0, kind: input, shape index: {}]
  %s1 = inlined_call_operand.hbm [shape: f32[32,4096], index: 1, kind: output, shape index: {}]
  %s2 = sld [smem:[#allocation0]]
  $region18: #{tpu_custom_call.1} parent=0
    _
  %s4 = ssub.s32 1, %s2
  %s5 = scalar_select 0, %s4, %s2
  $region1: #{tpu_custom_call.1} parent=0
    #allocation2 [shape = 'u8[524288]{0}', space=vmem, size = 0x80000, scoped, tag = 'input window, operand 0, single buffered']
    #allocation3 [shape = 's32[1]{0}', space=sflag, size = 0x4, scoped, tag = 'scoped memory for tpu_custom_call.1']
    #allocation4 [shape = 's32[1]{0}', space=sflag, size = 0x4, scoped, tag = 'scoped memory for tpu_custom_call.1']
    #allocation5 [shape = 'u8[524288]{0}', space=vmem, size = 0x80000, scoped, tag = 'output window, operand 0, single buffered']
    %6 = vsyncpa [#allocation3], 0
    %7 = vsyncpa [#allocation4], 0
    // Predicated region
    $region2: #{tpu_custom_call.1} parent=1 // pred_check
      _
    $region3: #{tpu_custom_call.1} parent=1 // pred_check_branch
      %9 = sbr.rel (0) target = $region5
    $region4: #{tpu_custom_call.1} parent=1 // pred_region
      %s11 = ssub.s32 16384, 16384
      %12 = vsyncadd [#allocation3], %s11
      %s13 = sshll.u32 [#allocation2], 4
      %s14 = int_to_ptr.vmem [resolvable:$true] %s13
      %19 = dma.hbm_to_vmem [thread:$0]  %s0, 16384, %s14, [#allocation3], 4096, 4096, 256
    $region5: #{tpu_custom_call.1} parent=1 // pred_fallthru
      _
    // Predicated region
    $region6: #{tpu_custom_call.1} parent=1 // pred_check
      _
    $region7: #{tpu_custom_call.1} parent=1 // pred_check_branch
      %21 = sbr.rel (0) target = $region9
    $region8: #{tpu_custom_call.1} parent=1 // pred_region
      %22 = dma.done [#allocation3], 16384
    $region9: #{tpu_custom_call.1} parent=1 // pred_fallthru
      _
    %v23 = vld [vmem:[#allocation2] sm:$0xff]
    %v24 = vld [vmem:[#allocation2 + $0x8] sm:$0xff]
    %v25 = vld [vmem:[#allocation2 + $0x10] sm:$0xff]
    %v26 = vld [vmem:[#allocation2 + $0x18] sm:$0xff]
    %v27 = vld [vmem:[#allocation2 + $0x20] sm:$0xff]
    %v28 = vld [vmem:[#allocation2 + $0x28] sm:$0xff]
    %v29 = vld [vmem:[#allocation2 + $0x30] sm:$0xff]
    %v30 = vld [vmem:[#allocation2 + $0x38] sm:$0xff]
    %v31 = vld [vmem:[#allocation2 + $0x40] sm:$0xff]
    %v32 = vld [vmem:[#allocation2 + $0x48] sm:$0xff]
    %v33 = vld [vmem:[#allocation2 + $0x50] sm:$0xff]
    %v34 = vld [vmem:[#allocation2 + $0x58] sm:$0xff]
    %v35 = vld [vmem:[#allocation2 + $0x60] sm:$0xff]
    %v36 = vld [vmem:[#allocation2 + $0x68] sm:$0xff]
    %v37 = vld [vmem:[#allocation2 + $0x70] sm:$0xff]
    %v38 = vld [vmem:[#allocation2 + $0x78] sm:$0xff]
    %v39 = vld [vmem:[#allocation2 + $0x80] sm:$0xff]
    %v40 = vld [vmem:[#allocation2 + $0x88] sm:$0xff]
    %v41 = vld [vmem:[#allocation2 + $0x90] sm:$0xff]
    %v42 = vld [vmem:[#allocation2 + $0x98] sm:$0xff]
    %v43 = vld [vmem:[#allocation2 + $0xa0] sm:$0xff]
    %v44 = vld [vmem:[#allocation2 + $0xa8] sm:$0xff]
    %v45 = vld [vmem:[#allocation2 + $0xb0] sm:$0xff]
    %v46 = vld [vmem:[#allocation2 + $0xb8] sm:$0xff]
    %v47 = vld [vmem:[#allocation2 + $0xc0] sm:$0xff]
    %v48 = vld [vmem:[#allocation2 + $0xc8] sm:$0xff]
    %v49 = vld [vmem:[#allocation2 + $0xd0] sm:$0xff]
    %v50 = vld [vmem:[#allocation2 + $0xd8] sm:$0xff]
    %v51 = vld [vmem:[#allocation2 + $0xe0] sm:$0xff]
    %v52 = vld [vmem:[#allocation2 + $0xe8] sm:$0xff]
    %v53 = vld [vmem:[#allocation2 + $0xf0] sm:$0xff]
    %v54 = vld [vmem:[#allocation2 + $0xf8] sm:$0xff]
    %v55 = vld [vmem:[#allocation2 + $0x100] sm:$0xff]
    %v56 = vld [vmem:[#allocation2 + $0x108] sm:$0xff]
    %v57 = vld [vmem:[#allocation2 + $0x110] sm:$0xff]
    %v58 = vld [vmem:[#allocation2 + $0x118] sm:$0xff]
    %v59 = vld [vmem:[#allocation2 + $0x120] sm:$0xff]
    %v60 = vld [vmem:[#allocation2 + $0x128] sm:$0xff]
    %v61 = vld [vmem:[#allocation2 + $0x130] sm:$0xff]
    %v62 = vld [vmem:[#allocation2 + $0x138] sm:$0xff]
    %v63 = vld [vmem:[#allocation2 + $0x140] sm:$0xff]
    %v64 = vld [vmem:[#allocation2 + $0x148] sm:$0xff]
    %v65 = vld [vmem:[#allocation2 + $0x150] sm:$0xff]
    %v66 = vld [vmem:[#allocation2 + $0x158] sm:$0xff]
    %v67 = vld [vmem:[#allocation2 + $0x160] sm:$0xff]
    %v68 = vld [vmem:[#allocation2 + $0x168] sm:$0xff]
    %v69 = vld [vmem:[#allocation2 + $0x170] sm:$0xff]
    %v70 = vld [vmem:[#allocation2 + $0x178] sm:$0xff]
    %v71 = vld [vmem:[#allocation2 + $0x180] sm:$0xff]
    %v72 = vld [vmem:[#allocation2 + $0x188] sm:$0xff]
    %v73 = vld [vmem:[#allocation2 + $0x190] sm:$0xff]
    %v74 = vld [vmem:[#allocation2 + $0x198] sm:$0xff]
    %v75 = vld [vmem:[#allocation2 + $0x1a0] sm:$0xff]
    %v76 = vld [vmem:[#allocation2 + $0x1a8] sm:$0xff]
    %v77 = vld [vmem:[#allocation2 + $0x1b0] sm:$0xff]
    %v78 = vld [vmem:[#allocation2 + $0x1b8] sm:$0xff]
    %v79 = vld [vmem:[#allocation2 + $0x1c0] sm:$0xff]
    %v80 = vld [vmem:[#allocation2 + $0x1c8] sm:$0xff]
    %v81 = vld [vmem:[#allocation2 + $0x1d0] sm:$0xff]
    %v82 = vld [vmem:[#allocation2 + $0x1d8] sm:$0xff]
    %v83 = vld [vmem:[#allocation2 + $0x1e0] sm:$0xff]
    %v84 = vld [vmem:[#allocation2 + $0x1e8] sm:$0xff]
    %v85 = vld [vmem:[#allocation2 + $0x1f0] sm:$0xff]
    %v86 = vld [vmem:[#allocation2 + $0x1f8] sm:$0xff]
    %v87 = vld [vmem:[#allocation2 + $0x200] sm:$0xff]
    %v88 = vld [vmem:[#allocation2 + $0x208] sm:$0xff]
    %v89 = vld [vmem:[#allocation2 + $0x210] sm:$0xff]
    %v90 = vld [vmem:[#allocation2 + $0x218] sm:$0xff]
    %v91 = vld [vmem:[#allocation2 + $0x220] sm:$0xff]
    %v92 = vld [vmem:[#allocation2 + $0x228] sm:$0xff]
    %v93 = vld [vmem:[#allocation2 + $0x230] sm:$0xff]
    %v94 = vld [vmem:[#allocation2 + $0x238] sm:$0xff]
    %v95 = vld [vmem:[#allocation2 + $0x240] sm:$0xff]
    %v96 = vld [vmem:[#allocation2 + $0x248] sm:$0xff]
    %v97 = vld [vmem:[#allocation2 + $0x250] sm:$0xff]
    %v98 = vld [vmem:[#allocation2 + $0x258] sm:$0xff]
    %v99 = vld [vmem:[#allocation2 + $0x260] sm:$0xff]
    %v100 = vld [vmem:[#allocation2 + $0x268] sm:$0xff]
    %v101 = vld [vmem:[#allocation2 + $0x270] sm:$0xff]
    %v102 = vld [vmem:[#allocation2 + $0x278] sm:$0xff]
    %v103 = vld [vmem:[#allocation2 + $0x280] sm:$0xff]
    %v104 = vld [vmem:[#allocation2 + $0x288] sm:$0xff]
    %v105 = vld [vmem:[#allocation2 + $0x290] sm:$0xff]
    %v106 = vld [vmem:[#allocation2 + $0x298] sm:$0xff]
    %v107 = vld [vmem:[#allocation2 + $0x2a0] sm:$0xff]
    %v108 = vld [vmem:[#allocation2 + $0x2a8] sm:$0xff]
    %v109 = vld [vmem:[#allocation2 + $0x2b0] sm:$0xff]
    %v110 = vld [vmem:[#allocation2 + $0x2b8] sm:$0xff]
    %v111 = vld [vmem:[#allocation2 + $0x2c0] sm:$0xff]
    %v112 = vld [vmem:[#allocation2 + $0x2c8] sm:$0xff]
    %v113 = vld [vmem:[#allocation2 + $0x2d0] sm:$0xff]
    %v114 = vld [vmem:[#allocation2 + $0x2d8] sm:$0xff]
    %v115 = vld [vmem:[#allocation2 + $0x2e0] sm:$0xff]
    %v116 = vld [vmem:[#allocation2 + $0x2e8] sm:$0xff]
    %v117 = vld [vmem:[#allocation2 + $0x2f0] sm:$0xff]
    %v118 = vld [vmem:[#allocation2 + $0x2f8] sm:$0xff]
    %v119 = vld [vmem:[#allocation2 + $0x300] sm:$0xff]
    %v120 = vld [vmem:[#allocation2 + $0x308] sm:$0xff]
    %v121 = vld [vmem:[#allocation2 + $0x310] sm:$0xff]
    %v122 = vld [vmem:[#allocation2 + $0x318] sm:$0xff]
    %v123 = vld [vmem:[#allocation2 + $0x320] sm:$0xff]
    %v124 = vld [vmem:[#allocation2 + $0x328] sm:$0xff]
    %v125 = vld [vmem:[#allocation2 + $0x330] sm:$0xff]
    %v126 = vld [vmem:[#allocation2 + $0x338] sm:$0xff]
    %v127 = vld [vmem:[#allocation2 + $0x340] sm:$0xff]
    %v128 = vld [vmem:[#allocation2 + $0x348] sm:$0xff]
    %v129 = vld [vmem:[#allocation2 + $0x350] sm:$0xff]
    %v130 = vld [vmem:[#allocation2 + $0x358] sm:$0xff]
    %v131 = vld [vmem:[#allocation2 + $0x360] sm:$0xff]
    %v132 = vld [vmem:[#allocation2 + $0x368] sm:$0xff]
    %v133 = vld [vmem:[#allocation2 + $0x370] sm:$0xff]
    %v134 = vld [vmem:[#allocation2 + $0x378] sm:$0xff]
    %v135 = vld [vmem:[#allocation2 + $0x380] sm:$0xff]
    %v136 = vld [vmem:[#allocation2 + $0x388] sm:$0xff]
    %v137 = vld [vmem:[#allocation2 + $0x390] sm:$0xff]
    %v138 = vld [vmem:[#allocation2 + $0x398] sm:$0xff]
    %v139 = vld [vmem:[#allocation2 + $0x3a0] sm:$0xff]
    %v140 = vld [vmem:[#allocation2 + $0x3a8] sm:$0xff]
    %v141 = vld [vmem:[#allocation2 + $0x3b0] sm:$0xff]
    %v142 = vld [vmem:[#allocation2 + $0x3b8] sm:$0xff]
    %v143 = vld [vmem:[#allocation2 + $0x3c0] sm:$0xff]
    %v144 = vld [vmem:[#allocation2 + $0x3c8] sm:$0xff]
    %v145 = vld [vmem:[#allocation2 + $0x3d0] sm:$0xff]
    %v146 = vld [vmem:[#allocation2 + $0x3d8] sm:$0xff]
    %v147 = vld [vmem:[#allocation2 + $0x3e0] sm:$0xff]
    %v148 = vld [vmem:[#allocation2 + $0x3e8] sm:$0xff]
    %v149 = vld [vmem:[#allocation2 + $0x3f0] sm:$0xff]
    %v150 = vld [vmem:[#allocation2 + $0x3f8] sm:$0xff]
    %v151 = vand.u32 2147483647, %v23
    %v152 = vand.u32 2147483647, %v24
    %v153 = vand.u32 2147483647, %v25
    %v154 = vand.u32 2147483647, %v26
    %v155 = vand.u32 2147483647, %v27
    %v156 = vand.u32 2147483647, %v28
    %v157 = vand.u32 2147483647, %v29
    %v158 = vand.u32 2147483647, %v30
    %v159 = vand.u32 2147483647, %v31
    %v160 = vand.u32 2147483647, %v32
    %v161 = vand.u32 2147483647, %v33
    %v162 = vand.u32 2147483647, %v34
    %v163 = vand.u32 2147483647, %v35
    %v164 = vand.u32 2147483647, %v36
    %v165 = vand.u32 2147483647, %v37
    %v166 = vand.u32 2147483647, %v38
    %v167 = vand.u32 2147483647, %v39
    %v168 = vand.u32 2147483647, %v40
    %v169 = vand.u32 2147483647, %v41
    %v170 = vand.u32 2147483647, %v42
    %v171 = vand.u32 2147483647, %v43
    %v172 = vand.u32 2147483647, %v44
    %v173 = vand.u32 2147483647, %v45
    %v174 = vand.u32 2147483647, %v46
    %v175 = vand.u32 2147483647, %v47
    %v176 = vand.u32 2147483647, %v48
    %v177 = vand.u32 2147483647, %v49
    %v178 = vand.u32 2147483647, %v50
    %v179 = vand.u32 2147483647, %v51
    %v180 = vand.u32 2147483647, %v52
    %v181 = vand.u32 2147483647, %v53
    %v182 = vand.u32 2147483647, %v54
    %v183 = vand.u32 2147483647, %v55
    %v184 = vand.u32 2147483647, %v56
    %v185 = vand.u32 2147483647, %v57
    %v186 = vand.u32 2147483647, %v58
    %v187 = vand.u32 2147483647, %v59
    %v188 = vand.u32 2147483647, %v60
    %v189 = vand.u32 2147483647, %v61
    %v190 = vand.u32 2147483647, %v62
    %v191 = vand.u32 2147483647, %v63
    %v192 = vand.u32 2147483647, %v64
    %v193 = vand.u32 2147483647, %v65
    %v194 = vand.u32 2147483647, %v66
    %v195 = vand.u32 2147483647, %v67
    %v196 = vand.u32 2147483647, %v68
    %v197 = vand.u32 2147483647, %v69
    %v198 = vand.u32 2147483647, %v70
    %v199 = vand.u32 2147483647, %v71
    %v200 = vand.u32 2147483647, %v72
    %v201 = vand.u32 2147483647, %v73
    %v202 = vand.u32 2147483647, %v74
    %v203 = vand.u32 2147483647, %v75
    %v204 = vand.u32 2147483647, %v76
    %v205 = vand.u32 2147483647, %v77
    %v206 = vand.u32 2147483647, %v78
    %v207 = vand.u32 2147483647, %v79
    %v208 = vand.u32 2147483647, %v80
    %v209 = vand.u32 2147483647, %v81
    %v210 = vand.u32 2147483647, %v82
    %v211 = vand.u32 2147483647, %v83
    %v212 = vand.u32 2147483647, %v84
    %v213 = vand.u32 2147483647, %v85
    %v214 = vand.u32 2147483647, %v86
    %v215 = vand.u32 2147483647, %v87
    %v216 = vand.u32 2147483647, %v88
    %v217 = vand.u32 2147483647, %v89
    %v218 = vand.u32 2147483647, %v90
    %v219 = vand.u32 2147483647, %v91
    %v220 = vand.u32 2147483647, %v92
    %v221 = vand.u32 2147483647, %v93
    %v222 = vand.u32 2147483647, %v94
    %v223 = vand.u32 2147483647, %v95
    %v224 = vand.u32 2147483647, %v96
    %v225 = vand.u32 2147483647, %v97
    %v226 = vand.u32 2147483647, %v98
    %v227 = vand.u32 2147483647, %v99
    %v228 = vand.u32 2147483647, %v100
    %v229 = vand.u32 2147483647, %v101
    %v230 = vand.u32 2147483647, %v102
    %v231 = vand.u32 2147483647, %v103
    %v232 = vand.u32 2147483647, %v104
    %v233 = vand.u32 2147483647, %v105
    %v234 = vand.u32 2147483647, %v106
    %v235 = vand.u32 2147483647, %v107
    %v236 = vand.u32 2147483647, %v108
    %v237 = vand.u32 2147483647, %v109
    %v238 = vand.u32 2147483647, %v110
    %v239 = vand.u32 2147483647, %v111
    %v240 = vand.u32 2147483647, %v112
    %v241 = vand.u32 2147483647, %v113
    %v242 = vand.u32 2147483647, %v114
    %v243 = vand.u32 2147483647, %v115
    %v244 = vand.u32 2147483647, %v116
    %v245 = vand.u32 2147483647, %v117
    %v246 = vand.u32 2147483647, %v118
    %v247 = vand.u32 2147483647, %v119
    %v248 = vand.u32 2147483647, %v120
    %v249 = vand.u32 2147483647, %v121
    %v250 = vand.u32 2147483647, %v122
    %v251 = vand.u32 2147483647, %v123
    %v252 = vand.u32 2147483647, %v124
    %v253 = vand.u32 2147483647, %v125
    %v254 = vand.u32 2147483647, %v126
    %v255 = vand.u32 2147483647, %v127
    %v256 = vand.u32 2147483647, %v128
    %v257 = vand.u32 2147483647, %v129
    %v258 = vand.u32 2147483647, %v130
    %v259 = vand.u32 2147483647, %v131
    %v260 = vand.u32 2147483647, %v132
    %v261 = vand.u32 2147483647, %v133
    %v262 = vand.u32 2147483647, %v134
    %v263 = vand.u32 2147483647, %v135
    %v264 = vand.u32 2147483647, %v136
    %v265 = vand.u32 2147483647, %v137
    %v266 = vand.u32 2147483647, %v138
    %v267 = vand.u32 2147483647, %v139
    %v268 = vand.u32 2147483647, %v140
    %v269 = vand.u32 2147483647, %v141
    %v270 = vand.u32 2147483647, %v142
    %v271 = vand.u32 2147483647, %v143
    %v272 = vand.u32 2147483647, %v144
    %v273 = vand.u32 2147483647, %v145
    %v274 = vand.u32 2147483647, %v146
    %v275 = vand.u32 2147483647, %v147
    %v276 = vand.u32 2147483647, %v148
    %v277 = vand.u32 2147483647, %v149
    %v278 = vand.u32 2147483647, %v150
    %v279 = vmul.f32 %v151, %v151
    %v280 = vmul.f32 %v152, %v152
    %v281 = vmul.f32 %v153, %v153
    %v282 = vmul.f32 %v154, %v154
    %v283 = vmul.f32 %v155, %v155
    %v284 = vmul.f32 %v156, %v156
    %v285 = vmul.f32 %v157, %v157
    %v286 = vmul.f32 %v158, %v158
    %v287 = vmul.f32 %v159, %v159
    %v288 = vmul.f32 %v160, %v160
    %v289 = vmul.f32 %v161, %v161
    %v290 = vmul.f32 %v162, %v162
    %v291 = vmul.f32 %v163, %v163
    %v292 = vmul.f32 %v164, %v164
    %v293 = vmul.f32 %v165, %v165
    %v294 = vmul.f32 %v166, %v166
    %v295 = vmul.f32 %v167, %v167
    %v296 = vmul.f32 %v168, %v168
    %v297 = vmul.f32 %v169, %v169
    %v298 = vmul.f32 %v170, %v170
    %v299 = vmul.f32 %v171, %v171
    %v300 = vmul.f32 %v172, %v172
    %v301 = vmul.f32 %v173, %v173
    %v302 = vmul.f32 %v174, %v174
    %v303 = vmul.f32 %v175, %v175
    %v304 = vmul.f32 %v176, %v176
    %v305 = vmul.f32 %v177, %v177
    %v306 = vmul.f32 %v178, %v178
    %v307 = vmul.f32 %v179, %v179
    %v308 = vmul.f32 %v180, %v180
    %v309 = vmul.f32 %v181, %v181
    %v310 = vmul.f32 %v182, %v182
    %v311 = vmul.f32 %v183, %v183
    %v312 = vmul.f32 %v184, %v184
    %v313 = vmul.f32 %v185, %v185
    %v314 = vmul.f32 %v186, %v186
    %v315 = vmul.f32 %v187, %v187
    %v316 = vmul.f32 %v188, %v188
    %v317 = vmul.f32 %v189, %v189
    %v318 = vmul.f32 %v190, %v190
    %v319 = vmul.f32 %v191, %v191
    %v320 = vmul.f32 %v192, %v192
    %v321 = vmul.f32 %v193, %v193
    %v322 = vmul.f32 %v194, %v194
    %v323 = vmul.f32 %v195, %v195
    %v324 = vmul.f32 %v196, %v196
    %v325 = vmul.f32 %v197, %v197
    %v326 = vmul.f32 %v198, %v198
    %v327 = vmul.f32 %v199, %v199
    %v328 = vmul.f32 %v200, %v200
    %v329 = vmul.f32 %v201, %v201
    %v330 = vmul.f32 %v202, %v202
    %v331 = vmul.f32 %v203, %v203
    %v332 = vmul.f32 %v204, %v204
    %v333 = vmul.f32 %v205, %v205
    %v334 = vmul.f32 %v206, %v206
    %v335 = vmul.f32 %v207, %v207
    %v336 = vmul.f32 %v208, %v208
    %v337 = vmul.f32 %v209, %v209
    %v338 = vmul.f32 %v210, %v210
    %v339 = vmul.f32 %v211, %v211
    %v340 = vmul.f32 %v212, %v212
    %v341 = vmul.f32 %v213, %v213
    %v342 = vmul.f32 %v214, %v214
    %v343 = vmul.f32 %v215, %v215
    %v344 = vmul.f32 %v216, %v216
    %v345 = vmul.f32 %v217, %v217
    %v346 = vmul.f32 %v218, %v218
    %v347 = vmul.f32 %v219, %v219
    %v348 = vmul.f32 %v220, %v220
    %v349 = vmul.f32 %v221, %v221
    %v350 = vmul.f32 %v222, %v222
    %v351 = vmul.f32 %v223, %v223
    %v352 = vmul.f32 %v224, %v224
    %v353 = vmul.f32 %v225, %v225
    %v354 = vmul.f32 %v226, %v226
    %v355 = vmul.f32 %v227, %v227
    %v356 = vmul.f32 %v228, %v228
    %v357 = vmul.f32 %v229, %v229
    %v358 = vmul.f32 %v230, %v230
    %v359 = vmul.f32 %v231, %v231
    %v360 = vmul.f32 %v232, %v232
    %v361 = vmul.f32 %v233, %v233
    %v362 = vmul.f32 %v234, %v234
    %v363 = vmul.f32 %v235, %v235
    %v364 = vmul.f32 %v236, %v236
    %v365 = vmul.f32 %v237, %v237
    %v366 = vmul.f32 %v238, %v238
    %v367 = vmul.f32 %v239, %v239
    %v368 = vmul.f32 %v240, %v240
    %v369 = vmul.f32 %v241, %v241
    %v370 = vmul.f32 %v242, %v242
    %v371 = vmul.f32 %v243, %v243
    %v372 = vmul.f32 %v244, %v244
    %v373 = vmul.f32 %v245, %v245
    %v374 = vmul.f32 %v246, %v246
    %v375 = vmul.f32 %v247, %v247
    %v376 = vmul.f32 %v248, %v248
    %v377 = vmul.f32 %v249, %v249
    %v378 = vmul.f32 %v250, %v250
    %v379 = vmul.f32 %v251, %v251
    %v380 = vmul.f32 %v252, %v252
    %v381 = vmul.f32 %v253, %v253
    %v382 = vmul.f32 %v254, %v254
    %v383 = vmul.f32 %v255, %v255
    %v384 = vmul.f32 %v256, %v256
    %v385 = vmul.f32 %v257, %v257
    %v386 = vmul.f32 %v258, %v258
    %v387 = vmul.f32 %v259, %v259
    %v388 = vmul.f32 %v260, %v260
    %v389 = vmul.f32 %v261, %v261
    %v390 = vmul.f32 %v262, %v262
    %v391 = vmul.f32 %v263, %v263
    %v392 = vmul.f32 %v264, %v264
    %v393 = vmul.f32 %v265, %v265
    %v394 = vmul.f32 %v266, %v266
    %v395 = vmul.f32 %v267, %v267
    %v396 = vmul.f32 %v268, %v268
    %v397 = vmul.f32 %v269, %v269
    %v398 = vmul.f32 %v270, %v270
    %v399 = vmul.f32 %v271, %v271
    %v400 = vmul.f32 %v272, %v272
    %v401 = vmul.f32 %v273, %v273
    %v402 = vmul.f32 %v274, %v274
    %v403 = vmul.f32 %v275, %v275
    %v404 = vmul.f32 %v276, %v276
    %v405 = vmul.f32 %v277, %v277
    %v406 = vmul.f32 %v278, %v278
    %v407 = vadd.f32 %v279, 1.0
    %v408 = vadd.f32 %v280, 1.0
    %v409 = vadd.f32 %v281, 1.0
    %v410 = vadd.f32 %v282, 1.0
    %v411 = vadd.f32 %v283, 1.0
    %v412 = vadd.f32 %v284, 1.0
    %v413 = vadd.f32 %v285, 1.0
    %v414 = vadd.f32 %v286, 1.0
    %v415 = vadd.f32 %v287, 1.0
    %v416 = vadd.f32 %v288, 1.0
    %v417 = vadd.f32 %v289, 1.0
    %v418 = vadd.f32 %v290, 1.0
    %v419 = vadd.f32 %v291, 1.0
    %v420 = vadd.f32 %v292, 1.0
    %v421 = vadd.f32 %v293, 1.0
    %v422 = vadd.f32 %v294, 1.0
    %v423 = vadd.f32 %v295, 1.0
    %v424 = vadd.f32 %v296, 1.0
    %v425 = vadd.f32 %v297, 1.0
    %v426 = vadd.f32 %v298, 1.0
    %v427 = vadd.f32 %v299, 1.0
    %v428 = vadd.f32 %v300, 1.0
    %v429 = vadd.f32 %v301, 1.0
    %v430 = vadd.f32 %v302, 1.0
    %v431 = vadd.f32 %v303, 1.0
    %v432 = vadd.f32 %v304, 1.0
    %v433 = vadd.f32 %v305, 1.0
    %v434 = vadd.f32 %v306, 1.0
    %v435 = vadd.f32 %v307, 1.0
    %v436 = vadd.f32 %v308, 1.0
    %v437 = vadd.f32 %v309, 1.0
    %v438 = vadd.f32 %v310, 1.0
    %v439 = vadd.f32 %v311, 1.0
    %v440 = vadd.f32 %v312, 1.0
    %v441 = vadd.f32 %v313, 1.0
    %v442 = vadd.f32 %v314, 1.0
    %v443 = vadd.f32 %v315, 1.0
    %v444 = vadd.f32 %v316, 1.0
    %v445 = vadd.f32 %v317, 1.0
    %v446 = vadd.f32 %v318, 1.0
    %v447 = vadd.f32 %v319, 1.0
    %v448 = vadd.f32 %v320, 1.0
    %v449 = vadd.f32 %v321, 1.0
    %v450 = vadd.f32 %v322, 1.0
    %v451 = vadd.f32 %v323, 1.0
    %v452 = vadd.f32 %v324, 1.0
    %v453 = vadd.f32 %v325, 1.0
    %v454 = vadd.f32 %v326, 1.0
    %v455 = vadd.f32 %v327, 1.0
    %v456 = vadd.f32 %v328, 1.0
    %v457 = vadd.f32 %v329, 1.0
    %v458 = vadd.f32 %v330, 1.0
    %v459 = vadd.f32 %v331, 1.0
    %v460 = vadd.f32 %v332, 1.0
    %v461 = vadd.f32 %v333, 1.0
    %v462 = vadd.f32 %v334, 1.0
    %v463 = vadd.f32 %v335, 1.0
    %v464 = vadd.f32 %v336, 1.0
    %v465 = vadd.f32 %v337, 1.0
    %v466 = vadd.f32 %v338, 1.0
    %v467 = vadd.f32 %v339, 1.0
    %v468 = vadd.f32 %v340, 1.0
    %v469 = vadd.f32 %v341, 1.0
    %v470 = vadd.f32 %v342, 1.0
    %v471 = vadd.f32 %v343, 1.0
    %v472 = vadd.f32 %v344, 1.0
    %v473 = vadd.f32 %v345, 1.0
    %v474 = vadd.f32 %v346, 1.0
    %v475 = vadd.f32 %v347, 1.0
    %v476 = vadd.f32 %v348, 1.0
    %v477 = vadd.f32 %v349, 1.0
    %v478 = vadd.f32 %v350, 1.0
    %v479 = vadd.f32 %v351, 1.0
    %v480 = vadd.f32 %v352, 1.0
    %v481 = vadd.f32 %v353, 1.0
    %v482 = vadd.f32 %v354, 1.0
    %v483 = vadd.f32 %v355, 1.0
    %v484 = vadd.f32 %v356, 1.0
    %v485 = vadd.f32 %v357, 1.0
    %v486 = vadd.f32 %v358, 1.0
    %v487 = vadd.f32 %v359, 1.0
    %v488 = vadd.f32 %v360, 1.0
    %v489 = vadd.f32 %v361, 1.0
    %v490 = vadd.f32 %v362, 1.0
    %v491 = vadd.f32 %v363, 1.0
    %v492 = vadd.f32 %v364, 1.0
    %v493 = vadd.f32 %v365, 1.0
    %v494 = vadd.f32 %v366, 1.0
    %v495 = vadd.f32 %v367, 1.0
    %v496 = vadd.f32 %v368, 1.0
    %v497 = vadd.f32 %v369, 1.0
    %v498 = vadd.f32 %v370, 1.0
    %v499 = vadd.f32 %v371, 1.0
    %v500 = vadd.f32 %v372, 1.0
    %v501 = vadd.f32 %v373, 1.0
    %v502 = vadd.f32 %v374, 1.0
    %v503 = vadd.f32 %v375, 1.0
    %v504 = vadd.f32 %v376, 1.0
    %v505 = vadd.f32 %v377, 1.0
    %v506 = vadd.f32 %v378, 1.0
    %v507 = vadd.f32 %v379, 1.0
    %v508 = vadd.f32 %v380, 1.0
    %v509 = vadd.f32 %v381, 1.0
    %v510 = vadd.f32 %v382, 1.0
    %v511 = vadd.f32 %v383, 1.0
    %v512 = vadd.f32 %v384, 1.0
    %v513 = vadd.f32 %v385, 1.0
    %v514 = vadd.f32 %v386, 1.0
    %v515 = vadd.f32 %v387, 1.0
    %v516 = vadd.f32 %v388, 1.0
    %v517 = vadd.f32 %v389, 1.0
    %v518 = vadd.f32 %v390, 1.0
    %v519 = vadd.f32 %v391, 1.0
    %v520 = vadd.f32 %v392, 1.0
    %v521 = vadd.f32 %v393, 1.0
    %v522 = vadd.f32 %v394, 1.0
    %v523 = vadd.f32 %v395, 1.0
    %v524 = vadd.f32 %v396, 1.0
    %v525 = vadd.f32 %v397, 1.0
    %v526 = vadd.f32 %v398, 1.0
    %v527 = vadd.f32 %v399, 1.0
    %v528 = vadd.f32 %v400, 1.0
    %v529 = vadd.f32 %v401, 1.0
    %v530 = vadd.f32 %v402, 1.0
    %v531 = vadd.f32 %v403, 1.0
    %v532 = vadd.f32 %v404, 1.0
    %v533 = vadd.f32 %v405, 1.0
    %v534 = vadd.f32 %v406, 1.0
    %v535 = vrsqrt.pop %v407
    %v536 = vmul.f32 %v407, %v535
    %vm537 = vcmp.eq.f32.partialorder %v407, inf
    %v538 = vsel %vm537, %v407, %v536
    %vm539 = vcmp.eq.f32.partialorder %v407, 0.0
    %v540 = vand.u32 %v407, 2147483648
    %v541 = vsel %vm539, %v540, %v538
    %v542 = vrsqrt.pop %v408
    %v543 = vmul.f32 %v408, %v542
    %vm544 = vcmp.eq.f32.partialorder %v408, inf
    %v545 = vsel %vm544, %v408, %v543
    %vm546 = vcmp.eq.f32.partialorder %v408, 0.0
    %v547 = vand.u32 %v408, 2147483648
    %v548 = vsel %vm546, %v547, %v545
    %v549 = vrsqrt.pop %v409
    %v550 = vmul.f32 %v409, %v549
    %vm551 = vcmp.eq.f32.partialorder %v409, inf
    %v552 = vsel %vm551, %v409, %v550
    %vm553 = vcmp.eq.f32.partialorder %v409, 0.0
    %v554 = vand.u32 %v409, 2147483648
    %v555 = vsel %vm553, %v554, %v552
    %v556 = vrsqrt.pop %v410
    %v557 = vmul.f32 %v410, %v556
    %vm558 = vcmp.eq.f32.partialorder %v410, inf
    %v559 = vsel %vm558, %v410, %v557
    %vm560 = vcmp.eq.f32.partialorder %v410, 0.0
    %v561 = vand.u32 %v410, 2147483648
    %v562 = vsel %vm560, %v561, %v559
    %v563 = vrsqrt.pop %v411
    %v564 = vmul.f32 %v411, %v563
    %vm565 = vcmp.eq.f32.partialorder %v411, inf
    %v566 = vsel %vm565, %v411, %v564
    %vm567 = vcmp.eq.f32.partialorder %v411, 0.0
    %v568 = vand.u32 %v411, 2147483648
    %v569 = vsel %vm567, %v568, %v566
    %v570 = vrsqrt.pop %v412
    %v571 = vmul.f32 %v412, %v570
    %vm572 = vcmp.eq.f32.partialorder %v412, inf
    %v573 = vsel %vm572, %v412, %v571
    %vm574 = vcmp.eq.f32.partialorder %v412, 0.0
    %v575 = vand.u32 %v412, 2147483648
    %v576 = vsel %vm574, %v575, %v573
    %v577 = vrsqrt.pop %v413
    %v578 = vmul.f32 %v413, %v577
    %vm579 = vcmp.eq.f32.partialorder %v413, inf
    %v580 = vsel %vm579, %v413, %v578
    %vm581 = vcmp.eq.f32.partialorder %v413, 0.0
    %v582 = vand.u32 %v413, 2147483648
    %v583 = vsel %vm581, %v582, %v580
    %v584 = vrsqrt.pop %v414
    %v585 = vmul.f32 %v414, %v584
    %vm586 = vcmp.eq.f32.partialorder %v414, inf
    %v587 = vsel %vm586, %v414, %v585
    %vm588 = vcmp.eq.f32.partialorder %v414, 0.0
    %v589 = vand.u32 %v414, 2147483648
    %v590 = vsel %vm588, %v589, %v587
    %v591 = vrsqrt.pop %v415
    %v592 = vmul.f32 %v415, %v591
    %vm593 = vcmp.eq.f32.partialorder %v415, inf
    %v594 = vsel %vm593, %v415, %v592
    %vm595 = vcmp.eq.f32.partialorder %v415, 0.0
    %v596 = vand.u32 %v415, 2147483648
    %v597 = vsel %vm595, %v596, %v594
    %v598 = vrsqrt.pop %v416
    %v599 = vmul.f32 %v416, %v598
    %vm600 = vcmp.eq.f32.partialorder %v416, inf
    %v601 = vsel %vm600, %v416, %v599
    %vm602 = vcmp.eq.f32.partialorder %v416, 0.0
    %v603 = vand.u32 %v416, 2147483648
    %v604 = vsel %vm602, %v603, %v601
    %v605 = vrsqrt.pop %v417
    %v606 = vmul.f32 %v417, %v605
    %vm607 = vcmp.eq.f32.partialorder %v417, inf
    %v608 = vsel %vm607, %v417, %v606
    %vm609 = vcmp.eq.f32.partialorder %v417, 0.0
    %v610 = vand.u32 %v417, 2147483648
    %v611 = vsel %vm609, %v610, %v608
    %v612 = vrsqrt.pop %v418
    %v613 = vmul.f32 %v418, %v612
    %vm614 = vcmp.eq.f32.partialorder %v418, inf
    %v615 = vsel %vm614, %v418, %v613
    %vm616 = vcmp.eq.f32.partialorder %v418, 0.0
    %v617 = vand.u32 %v418, 2147483648
    %v618 = vsel %vm616, %v617, %v615
    %v619 = vrsqrt.pop %v419
    %v620 = vmul.f32 %v419, %v619
    %vm621 = vcmp.eq.f32.partialorder %v419, inf
    %v622 = vsel %vm621, %v419, %v620
    %vm623 = vcmp.eq.f32.partialorder %v419, 0.0
    %v624 = vand.u32 %v419, 2147483648
    %v625 = vsel %vm623, %v624, %v622
    %v626 = vrsqrt.pop %v420
    %v627 = vmul.f32 %v420, %v626
    %vm628 = vcmp.eq.f32.partialorder %v420, inf
    %v629 = vsel %vm628, %v420, %v627
    %vm630 = vcmp.eq.f32.partialorder %v420, 0.0
    %v631 = vand.u32 %v420, 2147483648
    %v632 = vsel %vm630, %v631, %v629
    %v633 = vrsqrt.pop %v421
    %v634 = vmul.f32 %v421, %v633
    %vm635 = vcmp.eq.f32.partialorder %v421, inf
    %v636 = vsel %vm635, %v421, %v634
    %vm637 = vcmp.eq.f32.partialorder %v421, 0.0
    %v638 = vand.u32 %v421, 2147483648
    %v639 = vsel %vm637, %v638, %v636
    %v640 = vrsqrt.pop %v422
    %v641 = vmul.f32 %v422, %v640
    %vm642 = vcmp.eq.f32.partialorder %v422, inf
    %v643 = vsel %vm642, %v422, %v641
    %vm644 = vcmp.eq.f32.partialorder %v422, 0.0
    %v645 = vand.u32 %v422, 2147483648
    %v646 = vsel %vm644, %v645, %v643
    %v647 = vrsqrt.pop %v423
    %v648 = vmul.f32 %v423, %v647
    %vm649 = vcmp.eq.f32.partialorder %v423, inf
    %v650 = vsel %vm649, %v423, %v648
    %vm651 = vcmp.eq.f32.partialorder %v423, 0.0
    %v652 = vand.u32 %v423, 2147483648
    %v653 = vsel %vm651, %v652, %v650
    %v654 = vrsqrt.pop %v424
    %v655 = vmul.f32 %v424, %v654
    %vm656 = vcmp.eq.f32.partialorder %v424, inf
    %v657 = vsel %vm656, %v424, %v655
    %vm658 = vcmp.eq.f32.partialorder %v424, 0.0
    %v659 = vand.u32 %v424, 2147483648
    %v660 = vsel %vm658, %v659, %v657
    %v661 = vrsqrt.pop %v425
    %v662 = vmul.f32 %v425, %v661
    %vm663 = vcmp.eq.f32.partialorder %v425, inf
    %v664 = vsel %vm663, %v425, %v662
    %vm665 = vcmp.eq.f32.partialorder %v425, 0.0
    %v666 = vand.u32 %v425, 2147483648
    %v667 = vsel %vm665, %v666, %v664
    %v668 = vrsqrt.pop %v426
    %v669 = vmul.f32 %v426, %v668
    %vm670 = vcmp.eq.f32.partialorder %v426, inf
    %v671 = vsel %vm670, %v426, %v669
    %vm672 = vcmp.eq.f32.partialorder %v426, 0.0
    %v673 = vand.u32 %v426, 2147483648
    %v674 = vsel %vm672, %v673, %v671
    %v675 = vrsqrt.pop %v427
    %v676 = vmul.f32 %v427, %v675
    %vm677 = vcmp.eq.f32.partialorder %v427, inf
    %v678 = vsel %vm677, %v427, %v676
    %vm679 = vcmp.eq.f32.partialorder %v427, 0.0
    %v680 = vand.u32 %v427, 2147483648
    %v681 = vsel %vm679, %v680, %v678
    %v682 = vrsqrt.pop %v428
    %v683 = vmul.f32 %v428, %v682
    %vm684 = vcmp.eq.f32.partialorder %v428, inf
    %v685 = vsel %vm684, %v428, %v683
    %vm686 = vcmp.eq.f32.partialorder %v428, 0.0
    %v687 = vand.u32 %v428, 2147483648
    %v688 = vsel %vm686, %v687, %v685
    %v689 = vrsqrt.pop %v429
    %v690 = vmul.f32 %v429, %v689
    %vm691 = vcmp.eq.f32.partialorder %v429, inf
    %v692 = vsel %vm691, %v429, %v690
    %vm693 = vcmp.eq.f32.partialorder %v429, 0.0
    %v694 = vand.u32 %v429, 2147483648
    %v695 = vsel %vm693, %v694, %v692
    %v696 = vrsqrt.pop %v430
    %v697 = vmul.f32 %v430, %v696
    %vm698 = vcmp.eq.f32.partialorder %v430, inf
    %v699 = vsel %vm698, %v430, %v697
    %vm700 = vcmp.eq.f32.partialorder %v430, 0.0
    %v701 = vand.u32 %v430, 2147483648
    %v702 = vsel %vm700, %v701, %v699
    %v703 = vrsqrt.pop %v431
    %v704 = vmul.f32 %v431, %v703
    %vm705 = vcmp.eq.f32.partialorder %v431, inf
    %v706 = vsel %vm705, %v431, %v704
    %vm707 = vcmp.eq.f32.partialorder %v431, 0.0
    %v708 = vand.u32 %v431, 2147483648
    %v709 = vsel %vm707, %v708, %v706
    %v710 = vrsqrt.pop %v432
    %v711 = vmul.f32 %v432, %v710
    %vm712 = vcmp.eq.f32.partialorder %v432, inf
    %v713 = vsel %vm712, %v432, %v711
    %vm714 = vcmp.eq.f32.partialorder %v432, 0.0
    %v715 = vand.u32 %v432, 2147483648
    %v716 = vsel %vm714, %v715, %v713
    %v717 = vrsqrt.pop %v433
    %v718 = vmul.f32 %v433, %v717
    %vm719 = vcmp.eq.f32.partialorder %v433, inf
    %v720 = vsel %vm719, %v433, %v718
    %vm721 = vcmp.eq.f32.partialorder %v433, 0.0
    %v722 = vand.u32 %v433, 2147483648
    %v723 = vsel %vm721, %v722, %v720
    %v724 = vrsqrt.pop %v434
    %v725 = vmul.f32 %v434, %v724
    %vm726 = vcmp.eq.f32.partialorder %v434, inf
    %v727 = vsel %vm726, %v434, %v725
    %vm728 = vcmp.eq.f32.partialorder %v434, 0.0
    %v729 = vand.u32 %v434, 2147483648
    %v730 = vsel %vm728, %v729, %v727
    %v731 = vrsqrt.pop %v435
    %v732 = vmul.f32 %v435, %v731
    %vm733 = vcmp.eq.f32.partialorder %v435, inf
    %v734 = vsel %vm733, %v435, %v732
    %vm735 = vcmp.eq.f32.partialorder %v435, 0.0
    %v736 = vand.u32 %v435, 2147483648
    %v737 = vsel %vm735, %v736, %v734
    %v738 = vrsqrt.pop %v436
    %v739 = vmul.f32 %v436, %v738
    %vm740 = vcmp.eq.f32.partialorder %v436, inf
    %v741 = vsel %vm740, %v436, %v739
    %vm742 = vcmp.eq.f32.partialorder %v436, 0.0
    %v743 = vand.u32 %v436, 2147483648
    %v744 = vsel %vm742, %v743, %v741
    %v745 = vrsqrt.pop %v437
    %v746 = vmul.f32 %v437, %v745
    %vm747 = vcmp.eq.f32.partialorder %v437, inf
    %v748 = vsel %vm747, %v437, %v746
    %vm749 = vcmp.eq.f32.partialorder %v437, 0.0
    %v750 = vand.u32 %v437, 2147483648
    %v751 = vsel %vm749, %v750, %v748
    %v752 = vrsqrt.pop %v438
    %v753 = vmul.f32 %v438, %v752
    %vm754 = vcmp.eq.f32.partialorder %v438, inf
    %v755 = vsel %vm754, %v438, %v753
    %vm756 = vcmp.eq.f32.partialorder %v438, 0.0
    %v757 = vand.u32 %v438, 2147483648
    %v758 = vsel %vm756, %v757, %v755
    %v759 = vrsqrt.pop %v439
    %v760 = vmul.f32 %v439, %v759
    %vm761 = vcmp.eq.f32.partialorder %v439, inf
    %v762 = vsel %vm761, %v439, %v760
    %vm763 = vcmp.eq.f32.partialorder %v439, 0.0
    %v764 = vand.u32 %v439, 2147483648
    %v765 = vsel %vm763, %v764, %v762
    %v766 = vrsqrt.pop %v440
    %v767 = vmul.f32 %v440, %v766
    %vm768 = vcmp.eq.f32.partialorder %v440, inf
    %v769 = vsel %vm768, %v440, %v767
    %vm770 = vcmp.eq.f32.partialorder %v440, 0.0
    %v771 = vand.u32 %v440, 2147483648
    %v772 = vsel %vm770, %v771, %v769
    %v773 = vrsqrt.pop %v441
    %v774 = vmul.f32 %v441, %v773
    %vm775 = vcmp.eq.f32.partialorder %v441, inf
    %v776 = vsel %vm775, %v441, %v774
    %vm777 = vcmp.eq.f32.partialorder %v441, 0.0
    %v778 = vand.u32 %v441, 2147483648
    %v779 = vsel %vm777, %v778, %v776
    %v780 = vrsqrt.pop %v442
    %v781 = vmul.f32 %v442, %v780
    %vm782 = vcmp.eq.f32.partialorder %v442, inf
    %v783 = vsel %vm782, %v442, %v781
    %vm784 = vcmp.eq.f32.partialorder %v442, 0.0
    %v785 = vand.u32 %v442, 2147483648
    %v786 = vsel %vm784, %v785, %v783
    %v787 = vrsqrt.pop %v443
    %v788 = vmul.f32 %v443, %v787
    %vm789 = vcmp.eq.f32.partialorder %v443, inf
    %v790 = vsel %vm789, %v443, %v788
    %vm791 = vcmp.eq.f32.partialorder %v443, 0.0
    %v792 = vand.u32 %v443, 2147483648
    %v793 = vsel %vm791, %v792, %v790
    %v794 = vrsqrt.pop %v444
    %v795 = vmul.f32 %v444, %v794
    %vm796 = vcmp.eq.f32.partialorder %v444, inf
    %v797 = vsel %vm796, %v444, %v795
    %vm798 = vcmp.eq.f32.partialorder %v444, 0.0
    %v799 = vand.u32 %v444, 2147483648
    %v800 = vsel %vm798, %v799, %v797
    %v801 = vrsqrt.pop %v445
    %v802 = vmul.f32 %v445, %v801
    %vm803 = vcmp.eq.f32.partialorder %v445, inf
    %v804 = vsel %vm803, %v445, %v802
    %vm805 = vcmp.eq.f32.partialorder %v445, 0.0
    %v806 = vand.u32 %v445, 2147483648
    %v807 = vsel %vm805, %v806, %v804
    %v808 = vrsqrt.pop %v446
    %v809 = vmul.f32 %v446, %v808
    %vm810 = vcmp.eq.f32.partialorder %v446, inf
    %v811 = vsel %vm810, %v446, %v809
    %vm812 = vcmp.eq.f32.partialorder %v446, 0.0
    %v813 = vand.u32 %v446, 2147483648
    %v814 = vsel %vm812, %v813, %v811
    %v815 = vrsqrt.pop %v447
    %v816 = vmul.f32 %v447, %v815
    %vm817 = vcmp.eq.f32.partialorder %v447, inf
    %v818 = vsel %vm817, %v447, %v816
    %vm819 = vcmp.eq.f32.partialorder %v447, 0.0
    %v820 = vand.u32 %v447, 2147483648
    %v821 = vsel %vm819, %v820, %v818
    %v822 = vrsqrt.pop %v448
    %v823 = vmul.f32 %v448, %v822
    %vm824 = vcmp.eq.f32.partialorder %v448, inf
    %v825 = vsel %vm824, %v448, %v823
    %vm826 = vcmp.eq.f32.partialorder %v448, 0.0
    %v827 = vand.u32 %v448, 2147483648
    %v828 = vsel %vm826, %v827, %v825
    %v829 = vrsqrt.pop %v449
    %v830 = vmul.f32 %v449, %v829
    %vm831 = vcmp.eq.f32.partialorder %v449, inf
    %v832 = vsel %vm831, %v449, %v830
    %vm833 = vcmp.eq.f32.partialorder %v449, 0.0
    %v834 = vand.u32 %v449, 2147483648
    %v835 = vsel %vm833, %v834, %v832
    %v836 = vrsqrt.pop %v450
    %v837 = vmul.f32 %v450, %v836
    %vm838 = vcmp.eq.f32.partialorder %v450, inf
    %v839 = vsel %vm838, %v450, %v837
    %vm840 = vcmp.eq.f32.partialorder %v450, 0.0
    %v841 = vand.u32 %v450, 2147483648
    %v842 = vsel %vm840, %v841, %v839
    %v843 = vrsqrt.pop %v451
    %v844 = vmul.f32 %v451, %v843
    %vm845 = vcmp.eq.f32.partialorder %v451, inf
    %v846 = vsel %vm845, %v451, %v844
    %vm847 = vcmp.eq.f32.partialorder %v451, 0.0
    %v848 = vand.u32 %v451, 2147483648
    %v849 = vsel %vm847, %v848, %v846
    %v850 = vrsqrt.pop %v452
    %v851 = vmul.f32 %v452, %v850
    %vm852 = vcmp.eq.f32.partialorder %v452, inf
    %v853 = vsel %vm852, %v452, %v851
    %vm854 = vcmp.eq.f32.partialorder %v452, 0.0
    %v855 = vand.u32 %v452, 2147483648
    %v856 = vsel %vm854, %v855, %v853
    %v857 = vrsqrt.pop %v453
    %v858 = vmul.f32 %v453, %v857
    %vm859 = vcmp.eq.f32.partialorder %v453, inf
    %v860 = vsel %vm859, %v453, %v858
    %vm861 = vcmp.eq.f32.partialorder %v453, 0.0
    %v862 = vand.u32 %v453, 2147483648
    %v863 = vsel %vm861, %v862, %v860
    %v864 = vrsqrt.pop %v454
    %v865 = vmul.f32 %v454, %v864
    %vm866 = vcmp.eq.f32.partialorder %v454, inf
    %v867 = vsel %vm866, %v454, %v865
    %vm868 = vcmp.eq.f32.partialorder %v454, 0.0
    %v869 = vand.u32 %v454, 2147483648
    %v870 = vsel %vm868, %v869, %v867
    %v871 = vrsqrt.pop %v455
    %v872 = vmul.f32 %v455, %v871
    %vm873 = vcmp.eq.f32.partialorder %v455, inf
    %v874 = vsel %vm873, %v455, %v872
    %vm875 = vcmp.eq.f32.partialorder %v455, 0.0
    %v876 = vand.u32 %v455, 2147483648
    %v877 = vsel %vm875, %v876, %v874
    %v878 = vrsqrt.pop %v456
    %v879 = vmul.f32 %v456, %v878
    %vm880 = vcmp.eq.f32.partialorder %v456, inf
    %v881 = vsel %vm880, %v456, %v879
    %vm882 = vcmp.eq.f32.partialorder %v456, 0.0
    %v883 = vand.u32 %v456, 2147483648
    %v884 = vsel %vm882, %v883, %v881
    %v885 = vrsqrt.pop %v457
    %v886 = vmul.f32 %v457, %v885
    %vm887 = vcmp.eq.f32.partialorder %v457, inf
    %v888 = vsel %vm887, %v457, %v886
    %vm889 = vcmp.eq.f32.partialorder %v457, 0.0
    %v890 = vand.u32 %v457, 2147483648
    %v891 = vsel %vm889, %v890, %v888
    %v892 = vrsqrt.pop %v458
    %v893 = vmul.f32 %v458, %v892
    %vm894 = vcmp.eq.f32.partialorder %v458, inf
    %v895 = vsel %vm894, %v458, %v893
    %vm896 = vcmp.eq.f32.partialorder %v458, 0.0
    %v897 = vand.u32 %v458, 2147483648
    %v898 = vsel %vm896, %v897, %v895
    %v899 = vrsqrt.pop %v459
    %v900 = vmul.f32 %v459, %v899
    %vm901 = vcmp.eq.f32.partialorder %v459, inf
    %v902 = vsel %vm901, %v459, %v900
    %vm903 = vcmp.eq.f32.partialorder %v459, 0.0
    %v904 = vand.u32 %v459, 2147483648
    %v905 = vsel %vm903, %v904, %v902
    %v906 = vrsqrt.pop %v460
    %v907 = vmul.f32 %v460, %v906
    %vm908 = vcmp.eq.f32.partialorder %v460, inf
    %v909 = vsel %vm908, %v460, %v907
    %vm910 = vcmp.eq.f32.partialorder %v460, 0.0
    %v911 = vand.u32 %v460, 2147483648
    %v912 = vsel %vm910, %v911, %v909
    %v913 = vrsqrt.pop %v461
    %v914 = vmul.f32 %v461, %v913
    %vm915 = vcmp.eq.f32.partialorder %v461, inf
    %v916 = vsel %vm915, %v461, %v914
    %vm917 = vcmp.eq.f32.partialorder %v461, 0.0
    %v918 = vand.u32 %v461, 2147483648
    %v919 = vsel %vm917, %v918, %v916
    %v920 = vrsqrt.pop %v462
    %v921 = vmul.f32 %v462, %v920
    %vm922 = vcmp.eq.f32.partialorder %v462, inf
    %v923 = vsel %vm922, %v462, %v921
    %vm924 = vcmp.eq.f32.partialorder %v462, 0.0
    %v925 = vand.u32 %v462, 2147483648
    %v926 = vsel %vm924, %v925, %v923
    %v927 = vrsqrt.pop %v463
    %v928 = vmul.f32 %v463, %v927
    %vm929 = vcmp.eq.f32.partialorder %v463, inf
    %v930 = vsel %vm929, %v463, %v928
    %vm931 = vcmp.eq.f32.partialorder %v463, 0.0
    %v932 = vand.u32 %v463, 2147483648
    %v933 = vsel %vm931, %v932, %v930
    %v934 = vrsqrt.pop %v464
    %v935 = vmul.f32 %v464, %v934
    %vm936 = vcmp.eq.f32.partialorder %v464, inf
    %v937 = vsel %vm936, %v464, %v935
    %vm938 = vcmp.eq.f32.partialorder %v464, 0.0
    %v939 = vand.u32 %v464, 2147483648
    %v940 = vsel %vm938, %v939, %v937
    %v941 = vrsqrt.pop %v465
    %v942 = vmul.f32 %v465, %v941
    %vm943 = vcmp.eq.f32.partialorder %v465, inf
    %v944 = vsel %vm943, %v465, %v942
    %vm945 = vcmp.eq.f32.partialorder %v465, 0.0
    %v946 = vand.u32 %v465, 2147483648
    %v947 = vsel %vm945, %v946, %v944
    %v948 = vrsqrt.pop %v466
    %v949 = vmul.f32 %v466, %v948
    %vm950 = vcmp.eq.f32.partialorder %v466, inf
    %v951 = vsel %vm950, %v466, %v949
    %vm952 = vcmp.eq.f32.partialorder %v466, 0.0
    %v953 = vand.u32 %v466, 2147483648
    %v954 = vsel %vm952, %v953, %v951
    %v955 = vrsqrt.pop %v467
    %v956 = vmul.f32 %v467, %v955
    %vm957 = vcmp.eq.f32.partialorder %v467, inf
    %v958 = vsel %vm957, %v467, %v956
    %vm959 = vcmp.eq.f32.partialorder %v467, 0.0
    %v960 = vand.u32 %v467, 2147483648
    %v961 = vsel %vm959, %v960, %v958
    %v962 = vrsqrt.pop %v468
    %v963 = vmul.f32 %v468, %v962
    %vm964 = vcmp.eq.f32.partialorder %v468, inf
    %v965 = vsel %vm964, %v468, %v963
    %vm966 = vcmp.eq.f32.partialorder %v468, 0.0
    %v967 = vand.u32 %v468, 2147483648
    %v968 = vsel %vm966, %v967, %v965
    %v969 = vrsqrt.pop %v469
    %v970 = vmul.f32 %v469, %v969
    %vm971 = vcmp.eq.f32.partialorder %v469, inf
    %v972 = vsel %vm971, %v469, %v970
    %vm973 = vcmp.eq.f32.partialorder %v469, 0.0
    %v974 = vand.u32 %v469, 2147483648
    %v975 = vsel %vm973, %v974, %v972
    %v976 = vrsqrt.pop %v470
    %v977 = vmul.f32 %v470, %v976
    %vm978 = vcmp.eq.f32.partialorder %v470, inf
    %v979 = vsel %vm978, %v470, %v977
    %vm980 = vcmp.eq.f32.partialorder %v470, 0.0
    %v981 = vand.u32 %v470, 2147483648
    %v982 = vsel %vm980, %v981, %v979
    %v983 = vrsqrt.pop %v471
    %v984 = vmul.f32 %v471, %v983
    %vm985 = vcmp.eq.f32.partialorder %v471, inf
    %v986 = vsel %vm985, %v471, %v984
    %vm987 = vcmp.eq.f32.partialorder %v471, 0.0
    %v988 = vand.u32 %v471, 2147483648
    %v989 = vsel %vm987, %v988, %v986
    %v990 = vrsqrt.pop %v472
    %v991 = vmul.f32 %v472, %v990
    %vm992 = vcmp.eq.f32.partialorder %v472, inf
    %v993 = vsel %vm992, %v472, %v991
    %vm994 = vcmp.eq.f32.partialorder %v472, 0.0
    %v995 = vand.u32 %v472, 2147483648
    %v996 = vsel %vm994, %v995, %v993
    %v997 = vrsqrt.pop %v473
    %v998 = vmul.f32 %v473, %v997
    %vm999 = vcmp.eq.f32.partialorder %v473, inf
    %v1000 = vsel %vm999, %v473, %v998
    %vm1001 = vcmp.eq.f32.partialorder %v473, 0.0
    %v1002 = vand.u32 %v473, 2147483648
    %v1003 = vsel %vm1001, %v1002, %v1000
    %v1004 = vrsqrt.pop %v474
    %v1005 = vmul.f32 %v474, %v1004
    %vm1006 = vcmp.eq.f32.partialorder %v474, inf
    %v1007 = vsel %vm1006, %v474, %v1005
    %vm1008 = vcmp.eq.f32.partialorder %v474, 0.0
    %v1009 = vand.u32 %v474, 2147483648
    %v1010 = vsel %vm1008, %v1009, %v1007
    %v1011 = vrsqrt.pop %v475
    %v1012 = vmul.f32 %v475, %v1011
    %vm1013 = vcmp.eq.f32.partialorder %v475, inf
    %v1014 = vsel %vm1013, %v475, %v1012
    %vm1015 = vcmp.eq.f32.partialorder %v475, 0.0
    %v1016 = vand.u32 %v475, 2147483648
    %v1017 = vsel %vm1015, %v1016, %v1014
    %v1018 = vrsqrt.pop %v476
    %v1019 = vmul.f32 %v476, %v1018
    %vm1020 = vcmp.eq.f32.partialorder %v476, inf
    %v1021 = vsel %vm1020, %v476, %v1019
    %vm1022 = vcmp.eq.f32.partialorder %v476, 0.0
    %v1023 = vand.u32 %v476, 2147483648
    %v1024 = vsel %vm1022, %v1023, %v1021
    %v1025 = vrsqrt.pop %v477
    %v1026 = vmul.f32 %v477, %v1025
    %vm1027 = vcmp.eq.f32.partialorder %v477, inf
    %v1028 = vsel %vm1027, %v477, %v1026
    %vm1029 = vcmp.eq.f32.partialorder %v477, 0.0
    %v1030 = vand.u32 %v477, 2147483648
    %v1031 = vsel %vm1029, %v1030, %v1028
    %v1032 = vrsqrt.pop %v478
    %v1033 = vmul.f32 %v478, %v1032
    %vm1034 = vcmp.eq.f32.partialorder %v478, inf
    %v1035 = vsel %vm1034, %v478, %v1033
    %vm1036 = vcmp.eq.f32.partialorder %v478, 0.0
    %v1037 = vand.u32 %v478, 2147483648
    %v1038 = vsel %vm1036, %v1037, %v1035
    %v1039 = vrsqrt.pop %v479
    %v1040 = vmul.f32 %v479, %v1039
    %vm1041 = vcmp.eq.f32.partialorder %v479, inf
    %v1042 = vsel %vm1041, %v479, %v1040
    %vm1043 = vcmp.eq.f32.partialorder %v479, 0.0
    %v1044 = vand.u32 %v479, 2147483648
    %v1045 = vsel %vm1043, %v1044, %v1042
    %v1046 = vrsqrt.pop %v480
    %v1047 = vmul.f32 %v480, %v1046
    %vm1048 = vcmp.eq.f32.partialorder %v480, inf
    %v1049 = vsel %vm1048, %v480, %v1047
    %vm1050 = vcmp.eq.f32.partialorder %v480, 0.0
    %v1051 = vand.u32 %v480, 2147483648
    %v1052 = vsel %vm1050, %v1051, %v1049
    %v1053 = vrsqrt.pop %v481
    %v1054 = vmul.f32 %v481, %v1053
    %vm1055 = vcmp.eq.f32.partialorder %v481, inf
    %v1056 = vsel %vm1055, %v481, %v1054
    %vm1057 = vcmp.eq.f32.partialorder %v481, 0.0
    %v1058 = vand.u32 %v481, 2147483648
    %v1059 = vsel %vm1057, %v1058, %v1056
    %v1060 = vrsqrt.pop %v482
    %v1061 = vmul.f32 %v482, %v1060
    %vm1062 = vcmp.eq.f32.partialorder %v482, inf
    %v1063 = vsel %vm1062, %v482, %v1061
    %vm1064 = vcmp.eq.f32.partialorder %v482, 0.0
    %v1065 = vand.u32 %v482, 2147483648
    %v1066 = vsel %vm1064, %v1065, %v1063
    %v1067 = vrsqrt.pop %v483
    %v1068 = vmul.f32 %v483, %v1067
    %vm1069 = vcmp.eq.f32.partialorder %v483, inf
    %v1070 = vsel %vm1069, %v483, %v1068
    %vm1071 = vcmp.eq.f32.partialorder %v483, 0.0
    %v1072 = vand.u32 %v483, 2147483648
    %v1073 = vsel %vm1071, %v1072, %v1070
    %v1074 = vrsqrt.pop %v484
    %v1075 = vmul.f32 %v484, %v1074
    %vm1076 = vcmp.eq.f32.partialorder %v484, inf
    %v1077 = vsel %vm1076, %v484, %v1075
    %vm1078 = vcmp.eq.f32.partialorder %v484, 0.0
    %v1079 = vand.u32 %v484, 2147483648
    %v1080 = vsel %vm1078, %v1079, %v1077
    %v1081 = vrsqrt.pop %v485
    %v1082 = vmul.f32 %v485, %v1081
    %vm1083 = vcmp.eq.f32.partialorder %v485, inf
    %v1084 = vsel %vm1083, %v485, %v1082
    %vm1085 = vcmp.eq.f32.partialorder %v485, 0.0
    %v1086 = vand.u32 %v485, 2147483648
    %v1087 = vsel %vm1085, %v1086, %v1084
    %v1088 = vrsqrt.pop %v486
    %v1089 = vmul.f32 %v486, %v1088
    %vm1090 = vcmp.eq.f32.partialorder %v486, inf
    %v1091 = vsel %vm1090, %v486, %v1089
    %vm1092 = vcmp.eq.f32.partialorder %v486, 0.0
    %v1093 = vand.u32 %v486, 2147483648
    %v1094 = vsel %vm1092, %v1093, %v1091
    %v1095 = vrsqrt.pop %v487
    %v1096 = vmul.f32 %v487, %v1095
    %vm1097 = vcmp.eq.f32.partialorder %v487, inf
    %v1098 = vsel %vm1097, %v487, %v1096
    %vm1099 = vcmp.eq.f32.partialorder %v487, 0.0
    %v1100 = vand.u32 %v487, 2147483648
    %v1101 = vsel %vm1099, %v1100, %v1098
    %v1102 = vrsqrt.pop %v488
    %v1103 = vmul.f32 %v488, %v1102
    %vm1104 = vcmp.eq.f32.partialorder %v488, inf
    %v1105 = vsel %vm1104, %v488, %v1103
    %vm1106 = vcmp.eq.f32.partialorder %v488, 0.0
    %v1107 = vand.u32 %v488, 2147483648
    %v1108 = vsel %vm1106, %v1107, %v1105
    %v1109 = vrsqrt.pop %v489
    %v1110 = vmul.f32 %v489, %v1109
    %vm1111 = vcmp.eq.f32.partialorder %v489, inf
    %v1112 = vsel %vm1111, %v489, %v1110
    %vm1113 = vcmp.eq.f32.partialorder %v489, 0.0
    %v1114 = vand.u32 %v489, 2147483648
    %v1115 = vsel %vm1113, %v1114, %v1112
    %v1116 = vrsqrt.pop %v490
    %v1117 = vmul.f32 %v490, %v1116
    %vm1118 = vcmp.eq.f32.partialorder %v490, inf
    %v1119 = vsel %vm1118, %v490, %v1117
    %vm1120 = vcmp.eq.f32.partialorder %v490, 0.0
    %v1121 = vand.u32 %v490, 2147483648
    %v1122 = vsel %vm1120, %v1121, %v1119
    %v1123 = vrsqrt.pop %v491
    %v1124 = vmul.f32 %v491, %v1123
    %vm1125 = vcmp.eq.f32.partialorder %v491, inf
    %v1126 = vsel %vm1125, %v491, %v1124
    %vm1127 = vcmp.eq.f32.partialorder %v491, 0.0
    %v1128 = vand.u32 %v491, 2147483648
    %v1129 = vsel %vm1127, %v1128, %v1126
    %v1130 = vrsqrt.pop %v492
    %v1131 = vmul.f32 %v492, %v1130
    %vm1132 = vcmp.eq.f32.partialorder %v492, inf
    %v1133 = vsel %vm1132, %v492, %v1131
    %vm1134 = vcmp.eq.f32.partialorder %v492, 0.0
    %v1135 = vand.u32 %v492, 2147483648
    %v1136 = vsel %vm1134, %v1135, %v1133
    %v1137 = vrsqrt.pop %v493
    %v1138 = vmul.f32 %v493, %v1137
    %vm1139 = vcmp.eq.f32.partialorder %v493, inf
    %v1140 = vsel %vm1139, %v493, %v1138
    %vm1141 = vcmp.eq.f32.partialorder %v493, 0.0
    %v1142 = vand.u32 %v493, 2147483648
    %v1143 = vsel %vm1141, %v1142, %v1140
    %v1144 = vrsqrt.pop %v494
    %v1145 = vmul.f32 %v494, %v1144
    %vm1146 = vcmp.eq.f32.partialorder %v494, inf
    %v1147 = vsel %vm1146, %v494, %v1145
    %vm1148 = vcmp.eq.f32.partialorder %v494, 0.0
    %v1149 = vand.u32 %v494, 2147483648
    %v1150 = vsel %vm1148, %v1149, %v1147
    %v1151 = vrsqrt.pop %v495
    %v1152 = vmul.f32 %v495, %v1151
    %vm1153 = vcmp.eq.f32.partialorder %v495, inf
    %v1154 = vsel %vm1153, %v495, %v1152
    %vm1155 = vcmp.eq.f32.partialorder %v495, 0.0
    %v1156 = vand.u32 %v495, 2147483648
    %v1157 = vsel %vm1155, %v1156, %v1154
    %v1158 = vrsqrt.pop %v496
    %v1159 = vmul.f32 %v496, %v1158
    %vm1160 = vcmp.eq.f32.partialorder %v496, inf
    %v1161 = vsel %vm1160, %v496, %v1159
    %vm1162 = vcmp.eq.f32.partialorder %v496, 0.0
    %v1163 = vand.u32 %v496, 2147483648
    %v1164 = vsel %vm1162, %v1163, %v1161
    %v1165 = vrsqrt.pop %v497
    %v1166 = vmul.f32 %v497, %v1165
    %vm1167 = vcmp.eq.f32.partialorder %v497, inf
    %v1168 = vsel %vm1167, %v497, %v1166
    %vm1169 = vcmp.eq.f32.partialorder %v497, 0.0
    %v1170 = vand.u32 %v497, 2147483648
    %v1171 = vsel %vm1169, %v1170, %v1168
    %v1172 = vrsqrt.pop %v498
    %v1173 = vmul.f32 %v498, %v1172
    %vm1174 = vcmp.eq.f32.partialorder %v498, inf
    %v1175 = vsel %vm1174, %v498, %v1173
    %vm1176 = vcmp.eq.f32.partialorder %v498, 0.0
    %v1177 = vand.u32 %v498, 2147483648
    %v1178 = vsel %vm1176, %v1177, %v1175
    %v1179 = vrsqrt.pop %v499
    %v1180 = vmul.f32 %v499, %v1179
    %vm1181 = vcmp.eq.f32.partialorder %v499, inf
    %v1182 = vsel %vm1181, %v499, %v1180
    %vm1183 = vcmp.eq.f32.partialorder %v499, 0.0
    %v1184 = vand.u32 %v499, 2147483648
    %v1185 = vsel %vm1183, %v1184, %v1182
    %v1186 = vrsqrt.pop %v500
    %v1187 = vmul.f32 %v500, %v1186
    %vm1188 = vcmp.eq.f32.partialorder %v500, inf
    %v1189 = vsel %vm1188, %v500, %v1187
    %vm1190 = vcmp.eq.f32.partialorder %v500, 0.0
    %v1191 = vand.u32 %v500, 2147483648
    %v1192 = vsel %vm1190, %v1191, %v1189
    %v1193 = vrsqrt.pop %v501
    %v1194 = vmul.f32 %v501, %v1193
    %vm1195 = vcmp.eq.f32.partialorder %v501, inf
    %v1196 = vsel %vm1195, %v501, %v1194
    %vm1197 = vcmp.eq.f32.partialorder %v501, 0.0
    %v1198 = vand.u32 %v501, 2147483648
    %v1199 = vsel %vm1197, %v1198, %v1196
    %v1200 = vrsqrt.pop %v502
    %v1201 = vmul.f32 %v502, %v1200
    %vm1202 = vcmp.eq.f32.partialorder %v502, inf
    %v1203 = vsel %vm1202, %v502, %v1201
    %vm1204 = vcmp.eq.f32.partialorder %v502, 0.0
    %v1205 = vand.u32 %v502, 2147483648
    %v1206 = vsel %vm1204, %v1205, %v1203
    %v1207 = vrsqrt.pop %v503
    %v1208 = vmul.f32 %v503, %v1207
    %vm1209 = vcmp.eq.f32.partialorder %v503, inf
    %v1210 = vsel %vm1209, %v503, %v1208
    %vm1211 = vcmp.eq.f32.partialorder %v503, 0.0
    %v1212 = vand.u32 %v503, 2147483648
    %v1213 = vsel %vm1211, %v1212, %v1210
    %v1214 = vrsqrt.pop %v504
    %v1215 = vmul.f32 %v504, %v1214
    %vm1216 = vcmp.eq.f32.partialorder %v504, inf
    %v1217 = vsel %vm1216, %v504, %v1215
    %vm1218 = vcmp.eq.f32.partialorder %v504, 0.0
    %v1219 = vand.u32 %v504, 2147483648
    %v1220 = vsel %vm1218, %v1219, %v1217
    %v1221 = vrsqrt.pop %v505
    %v1222 = vmul.f32 %v505, %v1221
    %vm1223 = vcmp.eq.f32.partialorder %v505, inf
    %v1224 = vsel %vm1223, %v505, %v1222
    %vm1225 = vcmp.eq.f32.partialorder %v505, 0.0
    %v1226 = vand.u32 %v505, 2147483648
    %v1227 = vsel %vm1225, %v1226, %v1224
    %v1228 = vrsqrt.pop %v506
    %v1229 = vmul.f32 %v506, %v1228
    %vm1230 = vcmp.eq.f32.partialorder %v506, inf
    %v1231 = vsel %vm1230, %v506, %v1229
    %vm1232 = vcmp.eq.f32.partialorder %v506, 0.0
    %v1233 = vand.u32 %v506, 2147483648
    %v1234 = vsel %vm1232, %v1233, %v1231
    %v1235 = vrsqrt.pop %v507
    %v1236 = vmul.f32 %v507, %v1235
    %vm1237 = vcmp.eq.f32.partialorder %v507, inf
    %v1238 = vsel %vm1237, %v507, %v1236
    %vm1239 = vcmp.eq.f32.partialorder %v507, 0.0
    %v1240 = vand.u32 %v507, 2147483648
    %v1241 = vsel %vm1239, %v1240, %v1238
    %v1242 = vrsqrt.pop %v508
    %v1243 = vmul.f32 %v508, %v1242
    %vm1244 = vcmp.eq.f32.partialorder %v508, inf
    %v1245 = vsel %vm1244, %v508, %v1243
    %vm1246 = vcmp.eq.f32.partialorder %v508, 0.0
    %v1247 = vand.u32 %v508, 2147483648
    %v1248 = vsel %vm1246, %v1247, %v1245
    %v1249 = vrsqrt.pop %v509
    %v1250 = vmul.f32 %v509, %v1249
    %vm1251 = vcmp.eq.f32.partialorder %v509, inf
    %v1252 = vsel %vm1251, %v509, %v1250
    %vm1253 = vcmp.eq.f32.partialorder %v509, 0.0
    %v1254 = vand.u32 %v509, 2147483648
    %v1255 = vsel %vm1253, %v1254, %v1252
    %v1256 = vrsqrt.pop %v510
    %v1257 = vmul.f32 %v510, %v1256
    %vm1258 = vcmp.eq.f32.partialorder %v510, inf
    %v1259 = vsel %vm1258, %v510, %v1257
    %vm1260 = vcmp.eq.f32.partialorder %v510, 0.0
    %v1261 = vand.u32 %v510, 2147483648
    %v1262 = vsel %vm1260, %v1261, %v1259
    %v1263 = vrsqrt.pop %v511
    %v1264 = vmul.f32 %v511, %v1263
    %vm1265 = vcmp.eq.f32.partialorder %v511, inf
    %v1266 = vsel %vm1265, %v511, %v1264
    %vm1267 = vcmp.eq.f32.partialorder %v511, 0.0
    %v1268 = vand.u32 %v511, 2147483648
    %v1269 = vsel %vm1267, %v1268, %v1266
    %v1270 = vrsqrt.pop %v512
    %v1271 = vmul.f32 %v512, %v1270
    %vm1272 = vcmp.eq.f32.partialorder %v512, inf
    %v1273 = vsel %vm1272, %v512, %v1271
    %vm1274 = vcmp.eq.f32.partialorder %v512, 0.0
    %v1275 = vand.u32 %v512, 2147483648
    %v1276 = vsel %vm1274, %v1275, %v1273
    %v1277 = vrsqrt.pop %v513
    %v1278 = vmul.f32 %v513, %v1277
    %vm1279 = vcmp.eq.f32.partialorder %v513, inf
    %v1280 = vsel %vm1279, %v513, %v1278
    %vm1281 = vcmp.eq.f32.partialorder %v513, 0.0
    %v1282 = vand.u32 %v513, 2147483648
    %v1283 = vsel %vm1281, %v1282, %v1280
    %v1284 = vrsqrt.pop %v514
    %v1285 = vmul.f32 %v514, %v1284
    %vm1286 = vcmp.eq.f32.partialorder %v514, inf
    %v1287 = vsel %vm1286, %v514, %v1285
    %vm1288 = vcmp.eq.f32.partialorder %v514, 0.0
    %v1289 = vand.u32 %v514, 2147483648
    %v1290 = vsel %vm1288, %v1289, %v1287
    %v1291 = vrsqrt.pop %v515
    %v1292 = vmul.f32 %v515, %v1291
    %vm1293 = vcmp.eq.f32.partialorder %v515, inf
    %v1294 = vsel %vm1293, %v515, %v1292
    %vm1295 = vcmp.eq.f32.partialorder %v515, 0.0
    %v1296 = vand.u32 %v515, 2147483648
    %v1297 = vsel %vm1295, %v1296, %v1294
    %v1298 = vrsqrt.pop %v516
    %v1299 = vmul.f32 %v516, %v1298
    %vm1300 = vcmp.eq.f32.partialorder %v516, inf
    %v1301 = vsel %vm1300, %v516, %v1299
    %vm1302 = vcmp.eq.f32.partialorder %v516, 0.0
    %v1303 = vand.u32 %v516, 2147483648
    %v1304 = vsel %vm1302, %v1303, %v1301
    %v1305 = vrsqrt.pop %v517
    %v1306 = vmul.f32 %v517, %v1305
    %vm1307 = vcmp.eq.f32.partialorder %v517, inf
    %v1308 = vsel %vm1307, %v517, %v1306
    %vm1309 = vcmp.eq.f32.partialorder %v517, 0.0
    %v1310 = vand.u32 %v517, 2147483648
    %v1311 = vsel %vm1309, %v1310, %v1308
    %v1312 = vrsqrt.pop %v518
    %v1313 = vmul.f32 %v518, %v1312
    %vm1314 = vcmp.eq.f32.partialorder %v518, inf
    %v1315 = vsel %vm1314, %v518, %v1313
    %vm1316 = vcmp.eq.f32.partialorder %v518, 0.0
    %v1317 = vand.u32 %v518, 2147483648
    %v1318 = vsel %vm1316, %v1317, %v1315
    %v1319 = vrsqrt.pop %v519
    %v1320 = vmul.f32 %v519, %v1319
    %vm1321 = vcmp.eq.f32.partialorder %v519, inf
    %v1322 = vsel %vm1321, %v519, %v1320
    %vm1323 = vcmp.eq.f32.partialorder %v519, 0.0
    %v1324 = vand.u32 %v519, 2147483648
    %v1325 = vsel %vm1323, %v1324, %v1322
    %v1326 = vrsqrt.pop %v520
    %v1327 = vmul.f32 %v520, %v1326
    %vm1328 = vcmp.eq.f32.partialorder %v520, inf
    %v1329 = vsel %vm1328, %v520, %v1327
    %vm1330 = vcmp.eq.f32.partialorder %v520, 0.0
    %v1331 = vand.u32 %v520, 2147483648
    %v1332 = vsel %vm1330, %v1331, %v1329
    %v1333 = vrsqrt.pop %v521
    %v1334 = vmul.f32 %v521, %v1333
    %vm1335 = vcmp.eq.f32.partialorder %v521, inf
    %v1336 = vsel %vm1335, %v521, %v1334
    %vm1337 = vcmp.eq.f32.partialorder %v521, 0.0
    %v1338 = vand.u32 %v521, 2147483648
    %v1339 = vsel %vm1337, %v1338, %v1336
    %v1340 = vrsqrt.pop %v522
    %v1341 = vmul.f32 %v522, %v1340
    %vm1342 = vcmp.eq.f32.partialorder %v522, inf
    %v1343 = vsel %vm1342, %v522, %v1341
    %vm1344 = vcmp.eq.f32.partialorder %v522, 0.0
    %v1345 = vand.u32 %v522, 2147483648
    %v1346 = vsel %vm1344, %v1345, %v1343
    %v1347 = vrsqrt.pop %v523
    %v1348 = vmul.f32 %v523, %v1347
    %vm1349 = vcmp.eq.f32.partialorder %v523, inf
    %v1350 = vsel %vm1349, %v523, %v1348
    %vm1351 = vcmp.eq.f32.partialorder %v523, 0.0
    %v1352 = vand.u32 %v523, 2147483648
    %v1353 = vsel %vm1351, %v1352, %v1350
    %v1354 = vrsqrt.pop %v524
    %v1355 = vmul.f32 %v524, %v1354
    %vm1356 = vcmp.eq.f32.partialorder %v524, inf
    %v1357 = vsel %vm1356, %v524, %v1355
    %vm1358 = vcmp.eq.f32.partialorder %v524, 0.0
    %v1359 = vand.u32 %v524, 2147483648
    %v1360 = vsel %vm1358, %v1359, %v1357
    %v1361 = vrsqrt.pop %v525
    %v1362 = vmul.f32 %v525, %v1361
    %vm1363 = vcmp.eq.f32.partialorder %v525, inf
    %v1364 = vsel %vm1363, %v525, %v1362
    %vm1365 = vcmp.eq.f32.partialorder %v525, 0.0
    %v1366 = vand.u32 %v525, 2147483648
    %v1367 = vsel %vm1365, %v1366, %v1364
    %v1368 = vrsqrt.pop %v526
    %v1369 = vmul.f32 %v526, %v1368
    %vm1370 = vcmp.eq.f32.partialorder %v526, inf
    %v1371 = vsel %vm1370, %v526, %v1369
    %vm1372 = vcmp.eq.f32.partialorder %v526, 0.0
    %v1373 = vand.u32 %v526, 2147483648
    %v1374 = vsel %vm1372, %v1373, %v1371
    %v1375 = vrsqrt.pop %v527
    %v1376 = vmul.f32 %v527, %v1375
    %vm1377 = vcmp.eq.f32.partialorder %v527, inf
    %v1378 = vsel %vm1377, %v527, %v1376
    %vm1379 = vcmp.eq.f32.partialorder %v527, 0.0
    %v1380 = vand.u32 %v527, 2147483648
    %v1381 = vsel %vm1379, %v1380, %v1378
    %v1382 = vrsqrt.pop %v528
    %v1383 = vmul.f32 %v528, %v1382
    %vm1384 = vcmp.eq.f32.partialorder %v528, inf
    %v1385 = vsel %vm1384, %v528, %v1383
    %vm1386 = vcmp.eq.f32.partialorder %v528, 0.0
    %v1387 = vand.u32 %v528, 2147483648
    %v1388 = vsel %vm1386, %v1387, %v1385
    %v1389 = vrsqrt.pop %v529
    %v1390 = vmul.f32 %v529, %v1389
    %vm1391 = vcmp.eq.f32.partialorder %v529, inf
    %v1392 = vsel %vm1391, %v529, %v1390
    %vm1393 = vcmp.eq.f32.partialorder %v529, 0.0
    %v1394 = vand.u32 %v529, 2147483648
    %v1395 = vsel %vm1393, %v1394, %v1392
    %v1396 = vrsqrt.pop %v530
    %v1397 = vmul.f32 %v530, %v1396
    %vm1398 = vcmp.eq.f32.partialorder %v530, inf
    %v1399 = vsel %vm1398, %v530, %v1397
    %vm1400 = vcmp.eq.f32.partialorder %v530, 0.0
    %v1401 = vand.u32 %v530, 2147483648
    %v1402 = vsel %vm1400, %v1401, %v1399
    %v1403 = vrsqrt.pop %v531
    %v1404 = vmul.f32 %v531, %v1403
    %vm1405 = vcmp.eq.f32.partialorder %v531, inf
    %v1406 = vsel %vm1405, %v531, %v1404
    %vm1407 = vcmp.eq.f32.partialorder %v531, 0.0
    %v1408 = vand.u32 %v531, 2147483648
    %v1409 = vsel %vm1407, %v1408, %v1406
    %v1410 = vrsqrt.pop %v532
    %v1411 = vmul.f32 %v532, %v1410
    %vm1412 = vcmp.eq.f32.partialorder %v532, inf
    %v1413 = vsel %vm1412, %v532, %v1411
    %vm1414 = vcmp.eq.f32.partialorder %v532, 0.0
    %v1415 = vand.u32 %v532, 2147483648
    %v1416 = vsel %vm1414, %v1415, %v1413
    %v1417 = vrsqrt.pop %v533
    %v1418 = vmul.f32 %v533, %v1417
    %vm1419 = vcmp.eq.f32.partialorder %v533, inf
    %v1420 = vsel %vm1419, %v533, %v1418
    %vm1421 = vcmp.eq.f32.partialorder %v533, 0.0
    %v1422 = vand.u32 %v533, 2147483648
    %v1423 = vsel %vm1421, %v1422, %v1420
    %v1424 = vrsqrt.pop %v534
    %v1425 = vmul.f32 %v534, %v1424
    %vm1426 = vcmp.eq.f32.partialorder %v534, inf
    %v1427 = vsel %vm1426, %v534, %v1425
    %vm1428 = vcmp.eq.f32.partialorder %v534, 0.0
    %v1429 = vand.u32 %v534, 2147483648
    %v1430 = vsel %vm1428, %v1429, %v1427
    %vm1431 = vcmp.gt.f32.partialorder %v151, 1e+10
    %vm1432 = vcmp.gt.f32.partialorder %v152, 1e+10
    %vm1433 = vcmp.gt.f32.partialorder %v153, 1e+10
    %vm1434 = vcmp.gt.f32.partialorder %v154, 1e+10
    %vm1435 = vcmp.gt.f32.partialorder %v155, 1e+10
    %vm1436 = vcmp.gt.f32.partialorder %v156, 1e+10
    %vm1437 = vcmp.gt.f32.partialorder %v157, 1e+10
    %vm1438 = vcmp.gt.f32.partialorder %v158, 1e+10
    %vm1439 = vcmp.gt.f32.partialorder %v159, 1e+10
    %vm1440 = vcmp.gt.f32.partialorder %v160, 1e+10
    %vm1441 = vcmp.gt.f32.partialorder %v161, 1e+10
    %vm1442 = vcmp.gt.f32.partialorder %v162, 1e+10
    %vm1443 = vcmp.gt.f32.partialorder %v163, 1e+10
    %vm1444 = vcmp.gt.f32.partialorder %v164, 1e+10
    %vm1445 = vcmp.gt.f32.partialorder %v165, 1e+10
    %vm1446 = vcmp.gt.f32.partialorder %v166, 1e+10
    %vm1447 = vcmp.gt.f32.partialorder %v167, 1e+10
    %vm1448 = vcmp.gt.f32.partialorder %v168, 1e+10
    %vm1449 = vcmp.gt.f32.partialorder %v169, 1e+10
    %vm1450 = vcmp.gt.f32.partialorder %v170, 1e+10
    %vm1451 = vcmp.gt.f32.partialorder %v171, 1e+10
    %vm1452 = vcmp.gt.f32.partialorder %v172, 1e+10
    %vm1453 = vcmp.gt.f32.partialorder %v173, 1e+10
    %vm1454 = vcmp.gt.f32.partialorder %v174, 1e+10
    %vm1455 = vcmp.gt.f32.partialorder %v175, 1e+10
    %vm1456 = vcmp.gt.f32.partialorder %v176, 1e+10
    %vm1457 = vcmp.gt.f32.partialorder %v177, 1e+10
    %vm1458 = vcmp.gt.f32.partialorder %v178, 1e+10
    %vm1459 = vcmp.gt.f32.partialorder %v179, 1e+10
    %vm1460 = vcmp.gt.f32.partialorder %v180, 1e+10
    %vm1461 = vcmp.gt.f32.partialorder %v181, 1e+10
    %vm1462 = vcmp.gt.f32.partialorder %v182, 1e+10
    %vm1463 = vcmp.gt.f32.partialorder %v183, 1e+10
    %vm1464 = vcmp.gt.f32.partialorder %v184, 1e+10
    %vm1465 = vcmp.gt.f32.partialorder %v185, 1e+10
    %vm1466 = vcmp.gt.f32.partialorder %v186, 1e+10
    %vm1467 = vcmp.gt.f32.partialorder %v187, 1e+10
    %vm1468 = vcmp.gt.f32.partialorder %v188, 1e+10
    %vm1469 = vcmp.gt.f32.partialorder %v189, 1e+10
    %vm1470 = vcmp.gt.f32.partialorder %v190, 1e+10
    %vm1471 = vcmp.gt.f32.partialorder %v191, 1e+10
    %vm1472 = vcmp.gt.f32.partialorder %v192, 1e+10
    %vm1473 = vcmp.gt.f32.partialorder %v193, 1e+10
    %vm1474 = vcmp.gt.f32.partialorder %v194, 1e+10
    %vm1475 = vcmp.gt.f32.partialorder %v195, 1e+10
    %vm1476 = vcmp.gt.f32.partialorder %v196, 1e+10
    %vm1477 = vcmp.gt.f32.partialorder %v197, 1e+10
    %vm1478 = vcmp.gt.f32.partialorder %v198, 1e+10
    %vm1479 = vcmp.gt.f32.partialorder %v199, 1e+10
    %vm1480 = vcmp.gt.f32.partialorder %v200, 1e+10
    %vm1481 = vcmp.gt.f32.partialorder %v201, 1e+10
    %vm1482 = vcmp.gt.f32.partialorder %v202, 1e+10
    %vm1483 = vcmp.gt.f32.partialorder %v203, 1e+10
    %vm1484 = vcmp.gt.f32.partialorder %v204, 1e+10
    %vm1485 = vcmp.gt.f32.partialorder %v205, 1e+10
    %vm1486 = vcmp.gt.f32.partialorder %v206, 1e+10
    %vm1487 = vcmp.gt.f32.partialorder %v207, 1e+10
    %vm1488 = vcmp.gt.f32.partialorder %v208, 1e+10
    %vm1489 = vcmp.gt.f32.partialorder %v209, 1e+10
    %vm1490 = vcmp.gt.f32.partialorder %v210, 1e+10
    %vm1491 = vcmp.gt.f32.partialorder %v211, 1e+10
    %vm1492 = vcmp.gt.f32.partialorder %v212, 1e+10
    %vm1493 = vcmp.gt.f32.partialorder %v213, 1e+10
    %vm1494 = vcmp.gt.f32.partialorder %v214, 1e+10
    %vm1495 = vcmp.gt.f32.partialorder %v215, 1e+10
    %vm1496 = vcmp.gt.f32.partialorder %v216, 1e+10
    %vm1497 = vcmp.gt.f32.partialorder %v217, 1e+10
    %vm1498 = vcmp.gt.f32.partialorder %v218, 1e+10
    %vm1499 = vcmp.gt.f32.partialorder %v219, 1e+10
    %vm1500 = vcmp.gt.f32.partialorder %v220, 1e+10
    %vm1501 = vcmp.gt.f32.partialorder %v221, 1e+10
    %vm1502 = vcmp.gt.f32.partialorder %v222, 1e+10
    %vm1503 = vcmp.gt.f32.partialorder %v223, 1e+10
    %vm1504 = vcmp.gt.f32.partialorder %v224, 1e+10
    %vm1505 = vcmp.gt.f32.partialorder %v225, 1e+10
    %vm1506 = vcmp.gt.f32.partialorder %v226, 1e+10
    %vm1507 = vcmp.gt.f32.partialorder %v227, 1e+10
    %vm1508 = vcmp.gt.f32.partialorder %v228, 1e+10
    %vm1509 = vcmp.gt.f32.partialorder %v229, 1e+10
    %vm1510 = vcmp.gt.f32.partialorder %v230, 1e+10
    %vm1511 = vcmp.gt.f32.partialorder %v231, 1e+10
    %vm1512 = vcmp.gt.f32.partialorder %v232, 1e+10
    %vm1513 = vcmp.gt.f32.partialorder %v233, 1e+10
    %vm1514 = vcmp.gt.f32.partialorder %v234, 1e+10
    %vm1515 = vcmp.gt.f32.partialorder %v235, 1e+10
    %vm1516 = vcmp.gt.f32.partialorder %v236, 1e+10
    %vm1517 = vcmp.gt.f32.partialorder %v237, 1e+10
    %vm1518 = vcmp.gt.f32.partialorder %v238, 1e+10
    %vm1519 = vcmp.gt.f32.partialorder %v239, 1e+10
    %vm1520 = vcmp.gt.f32.partialorder %v240, 1e+10
    %vm1521 = vcmp.gt.f32.partialorder %v241, 1e+10
    %vm1522 = vcmp.gt.f32.partialorder %v242, 1e+10
    %vm1523 = vcmp.gt.f32.partialorder %v243, 1e+10
    %vm1524 = vcmp.gt.f32.partialorder %v244, 1e+10
    %vm1525 = vcmp.gt.f32.partialorder %v245, 1e+10
    %vm1526 = vcmp.gt.f32.partialorder %v246, 1e+10
    %vm1527 = vcmp.gt.f32.partialorder %v247, 1e+10
    %vm1528 = vcmp.gt.f32.partialorder %v248, 1e+10
    %vm1529 = vcmp.gt.f32.partialorder %v249, 1e+10
    %vm1530 = vcmp.gt.f32.partialorder %v250, 1e+10
    %vm1531 = vcmp.gt.f32.partialorder %v251, 1e+10
    %vm1532 = vcmp.gt.f32.partialorder %v252, 1e+10
    %vm1533 = vcmp.gt.f32.partialorder %v253, 1e+10
    %vm1534 = vcmp.gt.f32.partialorder %v254, 1e+10
    %vm1535 = vcmp.gt.f32.partialorder %v255, 1e+10
    %vm1536 = vcmp.gt.f32.partialorder %v256, 1e+10
    %vm1537 = vcmp.gt.f32.partialorder %v257, 1e+10
    %vm1538 = vcmp.gt.f32.partialorder %v258, 1e+10
    %vm1539 = vcmp.gt.f32.partialorder %v259, 1e+10
    %vm1540 = vcmp.gt.f32.partialorder %v260, 1e+10
    %vm1541 = vcmp.gt.f32.partialorder %v261, 1e+10
    %vm1542 = vcmp.gt.f32.partialorder %v262, 1e+10
    %vm1543 = vcmp.gt.f32.partialorder %v263, 1e+10
    %vm1544 = vcmp.gt.f32.partialorder %v264, 1e+10
    %vm1545 = vcmp.gt.f32.partialorder %v265, 1e+10
    %vm1546 = vcmp.gt.f32.partialorder %v266, 1e+10
    %vm1547 = vcmp.gt.f32.partialorder %v267, 1e+10
    %vm1548 = vcmp.gt.f32.partialorder %v268, 1e+10
    %vm1549 = vcmp.gt.f32.partialorder %v269, 1e+10
    %vm1550 = vcmp.gt.f32.partialorder %v270, 1e+10
    %vm1551 = vcmp.gt.f32.partialorder %v271, 1e+10
    %vm1552 = vcmp.gt.f32.partialorder %v272, 1e+10
    %vm1553 = vcmp.gt.f32.partialorder %v273, 1e+10
    %vm1554 = vcmp.gt.f32.partialorder %v274, 1e+10
    %vm1555 = vcmp.gt.f32.partialorder %v275, 1e+10
    %vm1556 = vcmp.gt.f32.partialorder %v276, 1e+10
    %vm1557 = vcmp.gt.f32.partialorder %v277, 1e+10
    %vm1558 = vcmp.gt.f32.partialorder %v278, 1e+10
    %v1559 = vsel %vm1431, %v151, %v541
    %v1560 = vsel %vm1432, %v152, %v548
    %v1561 = vsel %vm1433, %v153, %v555
    %v1562 = vsel %vm1434, %v154, %v562
    %v1563 = vsel %vm1435, %v155, %v569
    %v1564 = vsel %vm1436, %v156, %v576
    %v1565 = vsel %vm1437, %v157, %v583
    %v1566 = vsel %vm1438, %v158, %v590
    %v1567 = vsel %vm1439, %v159, %v597
    %v1568 = vsel %vm1440, %v160, %v604
    %v1569 = vsel %vm1441, %v161, %v611
    %v1570 = vsel %vm1442, %v162, %v618
    %v1571 = vsel %vm1443, %v163, %v625
    %v1572 = vsel %vm1444, %v164, %v632
    %v1573 = vsel %vm1445, %v165, %v639
    %v1574 = vsel %vm1446, %v166, %v646
    %v1575 = vsel %vm1447, %v167, %v653
    %v1576 = vsel %vm1448, %v168, %v660
    %v1577 = vsel %vm1449, %v169, %v667
    %v1578 = vsel %vm1450, %v170, %v674
    %v1579 = vsel %vm1451, %v171, %v681
    %v1580 = vsel %vm1452, %v172, %v688
    %v1581 = vsel %vm1453, %v173, %v695
    %v1582 = vsel %vm1454, %v174, %v702
    %v1583 = vsel %vm1455, %v175, %v709
    %v1584 = vsel %vm1456, %v176, %v716
    %v1585 = vsel %vm1457, %v177, %v723
    %v1586 = vsel %vm1458, %v178, %v730
    %v1587 = vsel %vm1459, %v179, %v737
    %v1588 = vsel %vm1460, %v180, %v744
    %v1589 = vsel %vm1461, %v181, %v751
    %v1590 = vsel %vm1462, %v182, %v758
    %v1591 = vsel %vm1463, %v183, %v765
    %v1592 = vsel %vm1464, %v184, %v772
    %v1593 = vsel %vm1465, %v185, %v779
    %v1594 = vsel %vm1466, %v186, %v786
    %v1595 = vsel %vm1467, %v187, %v793
    %v1596 = vsel %vm1468, %v188, %v800
    %v1597 = vsel %vm1469, %v189, %v807
    %v1598 = vsel %vm1470, %v190, %v814
    %v1599 = vsel %vm1471, %v191, %v821
    %v1600 = vsel %vm1472, %v192, %v828
    %v1601 = vsel %vm1473, %v193, %v835
    %v1602 = vsel %vm1474, %v194, %v842
    %v1603 = vsel %vm1475, %v195, %v849
    %v1604 = vsel %vm1476, %v196, %v856
    %v1605 = vsel %vm1477, %v197, %v863
    %v1606 = vsel %vm1478, %v198, %v870
    %v1607 = vsel %vm1479, %v199, %v877
    %v1608 = vsel %vm1480, %v200, %v884
    %v1609 = vsel %vm1481, %v201, %v891
    %v1610 = vsel %vm1482, %v202, %v898
    %v1611 = vsel %vm1483, %v203, %v905
    %v1612 = vsel %vm1484, %v204, %v912
    %v1613 = vsel %vm1485, %v205, %v919
    %v1614 = vsel %vm1486, %v206, %v926
    %v1615 = vsel %vm1487, %v207, %v933
    %v1616 = vsel %vm1488, %v208, %v940
    %v1617 = vsel %vm1489, %v209, %v947
    %v1618 = vsel %vm1490, %v210, %v954
    %v1619 = vsel %vm1491, %v211, %v961
    %v1620 = vsel %vm1492, %v212, %v968
    %v1621 = vsel %vm1493, %v213, %v975
    %v1622 = vsel %vm1494, %v214, %v982
    %v1623 = vsel %vm1495, %v215, %v989
    %v1624 = vsel %vm1496, %v216, %v996
    %v1625 = vsel %vm1497, %v217, %v1003
    %v1626 = vsel %vm1498, %v218, %v1010
    %v1627 = vsel %vm1499, %v219, %v1017
    %v1628 = vsel %vm1500, %v220, %v1024
    %v1629 = vsel %vm1501, %v221, %v1031
    %v1630 = vsel %vm1502, %v222, %v1038
    %v1631 = vsel %vm1503, %v223, %v1045
    %v1632 = vsel %vm1504, %v224, %v1052
    %v1633 = vsel %vm1505, %v225, %v1059
    %v1634 = vsel %vm1506, %v226, %v1066
    %v1635 = vsel %vm1507, %v227, %v1073
    %v1636 = vsel %vm1508, %v228, %v1080
    %v1637 = vsel %vm1509, %v229, %v1087
    %v1638 = vsel %vm1510, %v230, %v1094
    %v1639 = vsel %vm1511, %v231, %v1101
    %v1640 = vsel %vm1512, %v232, %v1108
    %v1641 = vsel %vm1513, %v233, %v1115
    %v1642 = vsel %vm1514, %v234, %v1122
    %v1643 = vsel %vm1515, %v235, %v1129
    %v1644 = vsel %vm1516, %v236, %v1136
    %v1645 = vsel %vm1517, %v237, %v1143
    %v1646 = vsel %vm1518, %v238, %v1150
    %v1647 = vsel %vm1519, %v239, %v1157
    %v1648 = vsel %vm1520, %v240, %v1164
    %v1649 = vsel %vm1521, %v241, %v1171
    %v1650 = vsel %vm1522, %v242, %v1178
    %v1651 = vsel %vm1523, %v243, %v1185
    %v1652 = vsel %vm1524, %v244, %v1192
    %v1653 = vsel %vm1525, %v245, %v1199
    %v1654 = vsel %vm1526, %v246, %v1206
    %v1655 = vsel %vm1527, %v247, %v1213
    %v1656 = vsel %vm1528, %v248, %v1220
    %v1657 = vsel %vm1529, %v249, %v1227
    %v1658 = vsel %vm1530, %v250, %v1234
    %v1659 = vsel %vm1531, %v251, %v1241
    %v1660 = vsel %vm1532, %v252, %v1248
    %v1661 = vsel %vm1533, %v253, %v1255
    %v1662 = vsel %vm1534, %v254, %v1262
    %v1663 = vsel %vm1535, %v255, %v1269
    %v1664 = vsel %vm1536, %v256, %v1276
    %v1665 = vsel %vm1537, %v257, %v1283
    %v1666 = vsel %vm1538, %v258, %v1290
    %v1667 = vsel %vm1539, %v259, %v1297
    %v1668 = vsel %vm1540, %v260, %v1304
    %v1669 = vsel %vm1541, %v261, %v1311
    %v1670 = vsel %vm1542, %v262, %v1318
    %v1671 = vsel %vm1543, %v263, %v1325
    %v1672 = vsel %vm1544, %v264, %v1332
    %v1673 = vsel %vm1545, %v265, %v1339
    %v1674 = vsel %vm1546, %v266, %v1346
    %v1675 = vsel %vm1547, %v267, %v1353
    %v1676 = vsel %vm1548, %v268, %v1360
    %v1677 = vsel %vm1549, %v269, %v1367
    %v1678 = vsel %vm1550, %v270, %v1374
    %v1679 = vsel %vm1551, %v271, %v1381
    %v1680 = vsel %vm1552, %v272, %v1388
    %v1681 = vsel %vm1553, %v273, %v1395
    %v1682 = vsel %vm1554, %v274, %v1402
    %v1683 = vsel %vm1555, %v275, %v1409
    %v1684 = vsel %vm1556, %v276, %v1416
    %v1685 = vsel %vm1557, %v277, %v1423
    %v1686 = vsel %vm1558, %v278, %v1430
    %v1687 = vsub.f32 %v1559, 1.0
    %v1688 = vsub.f32 %v1560, 1.0
    %v1689 = vsub.f32 %v1561, 1.0
    %v1690 = vsub.f32 %v1562, 1.0
    %v1691 = vsub.f32 %v1563, 1.0
    %v1692 = vsub.f32 %v1564, 1.0
    %v1693 = vsub.f32 %v1565, 1.0
    %v1694 = vsub.f32 %v1566, 1.0
    %v1695 = vsub.f32 %v1567, 1.0
    %v1696 = vsub.f32 %v1568, 1.0
    %v1697 = vsub.f32 %v1569, 1.0
    %v1698 = vsub.f32 %v1570, 1.0
    %v1699 = vsub.f32 %v1571, 1.0
    %v1700 = vsub.f32 %v1572, 1.0
    %v1701 = vsub.f32 %v1573, 1.0
    %v1702 = vsub.f32 %v1574, 1.0
    %v1703 = vsub.f32 %v1575, 1.0
    %v1704 = vsub.f32 %v1576, 1.0
    %v1705 = vsub.f32 %v1577, 1.0
    %v1706 = vsub.f32 %v1578, 1.0
    %v1707 = vsub.f32 %v1579, 1.0
    %v1708 = vsub.f32 %v1580, 1.0
    %v1709 = vsub.f32 %v1581, 1.0
    %v1710 = vsub.f32 %v1582, 1.0
    %v1711 = vsub.f32 %v1583, 1.0
    %v1712 = vsub.f32 %v1584, 1.0
    %v1713 = vsub.f32 %v1585, 1.0
    %v1714 = vsub.f32 %v1586, 1.0
    %v1715 = vsub.f32 %v1587, 1.0
    %v1716 = vsub.f32 %v1588, 1.0
    %v1717 = vsub.f32 %v1589, 1.0
    %v1718 = vsub.f32 %v1590, 1.0
    %v1719 = vsub.f32 %v1591, 1.0
    %v1720 = vsub.f32 %v1592, 1.0
    %v1721 = vsub.f32 %v1593, 1.0
    %v1722 = vsub.f32 %v1594, 1.0
    %v1723 = vsub.f32 %v1595, 1.0
    %v1724 = vsub.f32 %v1596, 1.0
    %v1725 = vsub.f32 %v1597, 1.0
    %v1726 = vsub.f32 %v1598, 1.0
    %v1727 = vsub.f32 %v1599, 1.0
    %v1728 = vsub.f32 %v1600, 1.0
    %v1729 = vsub.f32 %v1601, 1.0
    %v1730 = vsub.f32 %v1602, 1.0
    %v1731 = vsub.f32 %v1603, 1.0
    %v1732 = vsub.f32 %v1604, 1.0
    %v1733 = vsub.f32 %v1605, 1.0
    %v1734 = vsub.f32 %v1606, 1.0
    %v1735 = vsub.f32 %v1607, 1.0
    %v1736 = vsub.f32 %v1608, 1.0
    %v1737 = vsub.f32 %v1609, 1.0
    %v1738 = vsub.f32 %v1610, 1.0
    %v1739 = vsub.f32 %v1611, 1.0
    %v1740 = vsub.f32 %v1612, 1.0
    %v1741 = vsub.f32 %v1613, 1.0
    %v1742 = vsub.f32 %v1614, 1.0
    %v1743 = vsub.f32 %v1615, 1.0
    %v1744 = vsub.f32 %v1616, 1.0
    %v1745 = vsub.f32 %v1617, 1.0
    %v1746 = vsub.f32 %v1618, 1.0
    %v1747 = vsub.f32 %v1619, 1.0
    %v1748 = vsub.f32 %v1620, 1.0
    %v1749 = vsub.f32 %v1621, 1.0
    %v1750 = vsub.f32 %v1622, 1.0
    %v1751 = vsub.f32 %v1623, 1.0
    %v1752 = vsub.f32 %v1624, 1.0
    %v1753 = vsub.f32 %v1625, 1.0
    %v1754 = vsub.f32 %v1626, 1.0
    %v1755 = vsub.f32 %v1627, 1.0
    %v1756 = vsub.f32 %v1628, 1.0
    %v1757 = vsub.f32 %v1629, 1.0
    %v1758 = vsub.f32 %v1630, 1.0
    %v1759 = vsub.f32 %v1631, 1.0
    %v1760 = vsub.f32 %v1632, 1.0
    %v1761 = vsub.f32 %v1633, 1.0
    %v1762 = vsub.f32 %v1634, 1.0
    %v1763 = vsub.f32 %v1635, 1.0
    %v1764 = vsub.f32 %v1636, 1.0
    %v1765 = vsub.f32 %v1637, 1.0
    %v1766 = vsub.f32 %v1638, 1.0
    %v1767 = vsub.f32 %v1639, 1.0
    %v1768 = vsub.f32 %v1640, 1.0
    %v1769 = vsub.f32 %v1641, 1.0
    %v1770 = vsub.f32 %v1642, 1.0
    %v1771 = vsub.f32 %v1643, 1.0
    %v1772 = vsub.f32 %v1644, 1.0
    %v1773 = vsub.f32 %v1645, 1.0
    %v1774 = vsub.f32 %v1646, 1.0
    %v1775 = vsub.f32 %v1647, 1.0
    %v1776 = vsub.f32 %v1648, 1.0
    %v1777 = vsub.f32 %v1649, 1.0
    %v1778 = vsub.f32 %v1650, 1.0
    %v1779 = vsub.f32 %v1651, 1.0
    %v1780 = vsub.f32 %v1652, 1.0
    %v1781 = vsub.f32 %v1653, 1.0
    %v1782 = vsub.f32 %v1654, 1.0
    %v1783 = vsub.f32 %v1655, 1.0
    %v1784 = vsub.f32 %v1656, 1.0
    %v1785 = vsub.f32 %v1657, 1.0
    %v1786 = vsub.f32 %v1658, 1.0
    %v1787 = vsub.f32 %v1659, 1.0
    %v1788 = vsub.f32 %v1660, 1.0
    %v1789 = vsub.f32 %v1661, 1.0
    %v1790 = vsub.f32 %v1662, 1.0
    %v1791 = vsub.f32 %v1663, 1.0
    %v1792 = vsub.f32 %v1664, 1.0
    %v1793 = vsub.f32 %v1665, 1.0
    %v1794 = vsub.f32 %v1666, 1.0
    %v1795 = vsub.f32 %v1667, 1.0
    %v1796 = vsub.f32 %v1668, 1.0
    %v1797 = vsub.f32 %v1669, 1.0
    %v1798 = vsub.f32 %v1670, 1.0
    %v1799 = vsub.f32 %v1671, 1.0
    %v1800 = vsub.f32 %v1672, 1.0
    %v1801 = vsub.f32 %v1673, 1.0
    %v1802 = vsub.f32 %v1674, 1.0
    %v1803 = vsub.f32 %v1675, 1.0
    %v1804 = vsub.f32 %v1676, 1.0
    %v1805 = vsub.f32 %v1677, 1.0
    %v1806 = vsub.f32 %v1678, 1.0
    %v1807 = vsub.f32 %v1679, 1.0
    %v1808 = vsub.f32 %v1680, 1.0
    %v1809 = vsub.f32 %v1681, 1.0
    %v1810 = vsub.f32 %v1682, 1.0
    %v1811 = vsub.f32 %v1683, 1.0
    %v1812 = vsub.f32 %v1684, 1.0
    %v1813 = vsub.f32 %v1685, 1.0
    %v1814 = vsub.f32 %v1686, 1.0
    %v1815 = vadd.f32 %v151, %v1687
    %v1816 = vadd.f32 %v152, %v1688
    %v1817 = vadd.f32 %v153, %v1689
    %v1818 = vadd.f32 %v154, %v1690
    %v1819 = vadd.f32 %v155, %v1691
    %v1820 = vadd.f32 %v156, %v1692
    %v1821 = vadd.f32 %v157, %v1693
    %v1822 = vadd.f32 %v158, %v1694
    %v1823 = vadd.f32 %v159, %v1695
    %v1824 = vadd.f32 %v160, %v1696
    %v1825 = vadd.f32 %v161, %v1697
    %v1826 = vadd.f32 %v162, %v1698
    %v1827 = vadd.f32 %v163, %v1699
    %v1828 = vadd.f32 %v164, %v1700
    %v1829 = vadd.f32 %v165, %v1701
    %v1830 = vadd.f32 %v166, %v1702
    %v1831 = vadd.f32 %v167, %v1703
    %v1832 = vadd.f32 %v168, %v1704
    %v1833 = vadd.f32 %v169, %v1705
    %v1834 = vadd.f32 %v170, %v1706
    %v1835 = vadd.f32 %v171, %v1707
    %v1836 = vadd.f32 %v172, %v1708
    %v1837 = vadd.f32 %v173, %v1709
    %v1838 = vadd.f32 %v174, %v1710
    %v1839 = vadd.f32 %v175, %v1711
    %v1840 = vadd.f32 %v176, %v1712
    %v1841 = vadd.f32 %v177, %v1713
    %v1842 = vadd.f32 %v178, %v1714
    %v1843 = vadd.f32 %v179, %v1715
    %v1844 = vadd.f32 %v180, %v1716
    %v1845 = vadd.f32 %v181, %v1717
    %v1846 = vadd.f32 %v182, %v1718
    %v1847 = vadd.f32 %v183, %v1719
    %v1848 = vadd.f32 %v184, %v1720
    %v1849 = vadd.f32 %v185, %v1721
    %v1850 = vadd.f32 %v186, %v1722
    %v1851 = vadd.f32 %v187, %v1723
    %v1852 = vadd.f32 %v188, %v1724
    %v1853 = vadd.f32 %v189, %v1725
    %v1854 = vadd.f32 %v190, %v1726
    %v1855 = vadd.f32 %v191, %v1727
    %v1856 = vadd.f32 %v192, %v1728
    %v1857 = vadd.f32 %v193, %v1729
    %v1858 = vadd.f32 %v194, %v1730
    %v1859 = vadd.f32 %v195, %v1731
    %v1860 = vadd.f32 %v196, %v1732
    %v1861 = vadd.f32 %v197, %v1733
    %v1862 = vadd.f32 %v198, %v1734
    %v1863 = vadd.f32 %v199, %v1735
    %v1864 = vadd.f32 %v200, %v1736
    %v1865 = vadd.f32 %v201, %v1737
    %v1866 = vadd.f32 %v202, %v1738
    %v1867 = vadd.f32 %v203, %v1739
    %v1868 = vadd.f32 %v204, %v1740
    %v1869 = vadd.f32 %v205, %v1741
    %v1870 = vadd.f32 %v206, %v1742
    %v1871 = vadd.f32 %v207, %v1743
    %v1872 = vadd.f32 %v208, %v1744
    %v1873 = vadd.f32 %v209, %v1745
    %v1874 = vadd.f32 %v210, %v1746
    %v1875 = vadd.f32 %v211, %v1747
    %v1876 = vadd.f32 %v212, %v1748
    %v1877 = vadd.f32 %v213, %v1749
    %v1878 = vadd.f32 %v214, %v1750
    %v1879 = vadd.f32 %v215, %v1751
    %v1880 = vadd.f32 %v216, %v1752
    %v1881 = vadd.f32 %v217, %v1753
    %v1882 = vadd.f32 %v218, %v1754
    %v1883 = vadd.f32 %v219, %v1755
    %v1884 = vadd.f32 %v220, %v1756
    %v1885 = vadd.f32 %v221, %v1757
    %v1886 = vadd.f32 %v222, %v1758
    %v1887 = vadd.f32 %v223, %v1759
    %v1888 = vadd.f32 %v224, %v1760
    %v1889 = vadd.f32 %v225, %v1761
    %v1890 = vadd.f32 %v226, %v1762
    %v1891 = vadd.f32 %v227, %v1763
    %v1892 = vadd.f32 %v228, %v1764
    %v1893 = vadd.f32 %v229, %v1765
    %v1894 = vadd.f32 %v230, %v1766
    %v1895 = vadd.f32 %v231, %v1767
    %v1896 = vadd.f32 %v232, %v1768
    %v1897 = vadd.f32 %v233, %v1769
    %v1898 = vadd.f32 %v234, %v1770
    %v1899 = vadd.f32 %v235, %v1771
    %v1900 = vadd.f32 %v236, %v1772
    %v1901 = vadd.f32 %v237, %v1773
    %v1902 = vadd.f32 %v238, %v1774
    %v1903 = vadd.f32 %v239, %v1775
    %v1904 = vadd.f32 %v240, %v1776
    %v1905 = vadd.f32 %v241, %v1777
    %v1906 = vadd.f32 %v242, %v1778
    %v1907 = vadd.f32 %v243, %v1779
    %v1908 = vadd.f32 %v244, %v1780
    %v1909 = vadd.f32 %v245, %v1781
    %v1910 = vadd.f32 %v246, %v1782
    %v1911 = vadd.f32 %v247, %v1783
    %v1912 = vadd.f32 %v248, %v1784
    %v1913 = vadd.f32 %v249, %v1785
    %v1914 = vadd.f32 %v250, %v1786
    %v1915 = vadd.f32 %v251, %v1787
    %v1916 = vadd.f32 %v252, %v1788
    %v1917 = vadd.f32 %v253, %v1789
    %v1918 = vadd.f32 %v254, %v1790
    %v1919 = vadd.f32 %v255, %v1791
    %v1920 = vadd.f32 %v256, %v1792
    %v1921 = vadd.f32 %v257, %v1793
    %v1922 = vadd.f32 %v258, %v1794
    %v1923 = vadd.f32 %v259, %v1795
    %v1924 = vadd.f32 %v260, %v1796
    %v1925 = vadd.f32 %v261, %v1797
    %v1926 = vadd.f32 %v262, %v1798
    %v1927 = vadd.f32 %v263, %v1799
    %v1928 = vadd.f32 %v264, %v1800
    %v1929 = vadd.f32 %v265, %v1801
    %v1930 = vadd.f32 %v266, %v1802
    %v1931 = vadd.f32 %v267, %v1803
    %v1932 = vadd.f32 %v268, %v1804
    %v1933 = vadd.f32 %v269, %v1805
    %v1934 = vadd.f32 %v270, %v1806
    %v1935 = vadd.f32 %v271, %v1807
    %v1936 = vadd.f32 %v272, %v1808
    %v1937 = vadd.f32 %v273, %v1809
    %v1938 = vadd.f32 %v274, %v1810
    %v1939 = vadd.f32 %v275, %v1811
    %v1940 = vadd.f32 %v276, %v1812
    %v1941 = vadd.f32 %v277, %v1813
    %v1942 = vadd.f32 %v278, %v1814
    %v1943 = vadd.f32 %v1815, 1.0
    %v1944 = vlog2.pop %v1943
    %v1945 = vmul.f32 %v1944, 0.6931472
    %v1946 = vmul.f32 -0.5, %v1815
    %v1947 = vadd.f32 %v1946, 1.0
    %v1948 = vmul.f32 %v1947, %v1815
    %v1949 = vand.u32 2147483647, %v1815
    %vm1950 = vcmp.lt.f32.partialorder %v1949, 0.0004427343
    %v1951 = vsel %vm1950, %v1948, %v1945
    %v1952 = vadd.f32 %v1816, 1.0
    %v1953 = vlog2.pop %v1952
    %v1954 = vmul.f32 %v1953, 0.6931472
    %v1955 = vmul.f32 -0.5, %v1816
    %v1956 = vadd.f32 %v1955, 1.0
    %v1957 = vmul.f32 %v1956, %v1816
    %v1958 = vand.u32 2147483647, %v1816
    %vm1959 = vcmp.lt.f32.partialorder %v1958, 0.0004427343
    %v1960 = vsel %vm1959, %v1957, %v1954
    %v1961 = vadd.f32 %v1817, 1.0
    %v1962 = vlog2.pop %v1961
    %v1963 = vmul.f32 %v1962, 0.6931472
    %v1964 = vmul.f32 -0.5, %v1817
    %v1965 = vadd.f32 %v1964, 1.0
    %v1966 = vmul.f32 %v1965, %v1817
    %v1967 = vand.u32 2147483647, %v1817
    %vm1968 = vcmp.lt.f32.partialorder %v1967, 0.0004427343
    %v1969 = vsel %vm1968, %v1966, %v1963
    %v1970 = vadd.f32 %v1818, 1.0
    %v1971 = vlog2.pop %v1970
    %v1972 = vmul.f32 %v1971, 0.6931472
    %v1973 = vmul.f32 -0.5, %v1818
    %v1974 = vadd.f32 %v1973, 1.0
    %v1975 = vmul.f32 %v1974, %v1818
    %v1976 = vand.u32 2147483647, %v1818
    %vm1977 = vcmp.lt.f32.partialorder %v1976, 0.0004427343
    %v1978 = vsel %vm1977, %v1975, %v1972
    %v1979 = vadd.f32 %v1819, 1.0
    %v1980 = vlog2.pop %v1979
    %v1981 = vmul.f32 %v1980, 0.6931472
    %v1982 = vmul.f32 -0.5, %v1819
    %v1983 = vadd.f32 %v1982, 1.0
    %v1984 = vmul.f32 %v1983, %v1819
    %v1985 = vand.u32 2147483647, %v1819
    %vm1986 = vcmp.lt.f32.partialorder %v1985, 0.0004427343
    %v1987 = vsel %vm1986, %v1984, %v1981
    %v1988 = vadd.f32 %v1820, 1.0
    %v1989 = vlog2.pop %v1988
    %v1990 = vmul.f32 %v1989, 0.6931472
    %v1991 = vmul.f32 -0.5, %v1820
    %v1992 = vadd.f32 %v1991, 1.0
    %v1993 = vmul.f32 %v1992, %v1820
    %v1994 = vand.u32 2147483647, %v1820
    %vm1995 = vcmp.lt.f32.partialorder %v1994, 0.0004427343
    %v1996 = vsel %vm1995, %v1993, %v1990
    %v1997 = vadd.f32 %v1821, 1.0
    %v1998 = vlog2.pop %v1997
    %v1999 = vmul.f32 %v1998, 0.6931472
    %v2000 = vmul.f32 -0.5, %v1821
    %v2001 = vadd.f32 %v2000, 1.0
    %v2002 = vmul.f32 %v2001, %v1821
    %v2003 = vand.u32 2147483647, %v1821
    %vm2004 = vcmp.lt.f32.partialorder %v2003, 0.0004427343
    %v2005 = vsel %vm2004, %v2002, %v1999
    %v2006 = vadd.f32 %v1822, 1.0
    %v2007 = vlog2.pop %v2006
    %v2008 = vmul.f32 %v2007, 0.6931472
    %v2009 = vmul.f32 -0.5, %v1822
    %v2010 = vadd.f32 %v2009, 1.0
    %v2011 = vmul.f32 %v2010, %v1822
    %v2012 = vand.u32 2147483647, %v1822
    %vm2013 = vcmp.lt.f32.partialorder %v2012, 0.0004427343
    %v2014 = vsel %vm2013, %v2011, %v2008
    %v2015 = vadd.f32 %v1823, 1.0
    %v2016 = vlog2.pop %v2015
    %v2017 = vmul.f32 %v2016, 0.6931472
    %v2018 = vmul.f32 -0.5, %v1823
    %v2019 = vadd.f32 %v2018, 1.0
    %v2020 = vmul.f32 %v2019, %v1823
    %v2021 = vand.u32 2147483647, %v1823
    %vm2022 = vcmp.lt.f32.partialorder %v2021, 0.0004427343
    %v2023 = vsel %vm2022, %v2020, %v2017
    %v2024 = vadd.f32 %v1824, 1.0
    %v2025 = vlog2.pop %v2024
    %v2026 = vmul.f32 %v2025, 0.6931472
    %v2027 = vmul.f32 -0.5, %v1824
    %v2028 = vadd.f32 %v2027, 1.0
    %v2029 = vmul.f32 %v2028, %v1824
    %v2030 = vand.u32 2147483647, %v1824
    %vm2031 = vcmp.lt.f32.partialorder %v2030, 0.0004427343
    %v2032 = vsel %vm2031, %v2029, %v2026
    %v2033 = vadd.f32 %v1825, 1.0
    %v2034 = vlog2.pop %v2033
    %v2035 = vmul.f32 %v2034, 0.6931472
    %v2036 = vmul.f32 -0.5, %v1825
    %v2037 = vadd.f32 %v2036, 1.0
    %v2038 = vmul.f32 %v2037, %v1825
    %v2039 = vand.u32 2147483647, %v1825
    %vm2040 = vcmp.lt.f32.partialorder %v2039, 0.0004427343
    %v2041 = vsel %vm2040, %v2038, %v2035
    %v2042 = vadd.f32 %v1826, 1.0
    %v2043 = vlog2.pop %v2042
    %v2044 = vmul.f32 %v2043, 0.6931472
    %v2045 = vmul.f32 -0.5, %v1826
    %v2046 = vadd.f32 %v2045, 1.0
    %v2047 = vmul.f32 %v2046, %v1826
    %v2048 = vand.u32 2147483647, %v1826
    %vm2049 = vcmp.lt.f32.partialorder %v2048, 0.0004427343
    %v2050 = vsel %vm2049, %v2047, %v2044
    %v2051 = vadd.f32 %v1827, 1.0
    %v2052 = vlog2.pop %v2051
    %v2053 = vmul.f32 %v2052, 0.6931472
    %v2054 = vmul.f32 -0.5, %v1827
    %v2055 = vadd.f32 %v2054, 1.0
    %v2056 = vmul.f32 %v2055, %v1827
    %v2057 = vand.u32 2147483647, %v1827
    %vm2058 = vcmp.lt.f32.partialorder %v2057, 0.0004427343
    %v2059 = vsel %vm2058, %v2056, %v2053
    %v2060 = vadd.f32 %v1828, 1.0
    %v2061 = vlog2.pop %v2060
    %v2062 = vmul.f32 %v2061, 0.6931472
    %v2063 = vmul.f32 -0.5, %v1828
    %v2064 = vadd.f32 %v2063, 1.0
    %v2065 = vmul.f32 %v2064, %v1828
    %v2066 = vand.u32 2147483647, %v1828
    %vm2067 = vcmp.lt.f32.partialorder %v2066, 0.0004427343
    %v2068 = vsel %vm2067, %v2065, %v2062
    %v2069 = vadd.f32 %v1829, 1.0
    %v2070 = vlog2.pop %v2069
    %v2071 = vmul.f32 %v2070, 0.6931472
    %v2072 = vmul.f32 -0.5, %v1829
    %v2073 = vadd.f32 %v2072, 1.0
    %v2074 = vmul.f32 %v2073, %v1829
    %v2075 = vand.u32 2147483647, %v1829
    %vm2076 = vcmp.lt.f32.partialorder %v2075, 0.0004427343
    %v2077 = vsel %vm2076, %v2074, %v2071
    %v2078 = vadd.f32 %v1830, 1.0
    %v2079 = vlog2.pop %v2078
    %v2080 = vmul.f32 %v2079, 0.6931472
    %v2081 = vmul.f32 -0.5, %v1830
    %v2082 = vadd.f32 %v2081, 1.0
    %v2083 = vmul.f32 %v2082, %v1830
    %v2084 = vand.u32 2147483647, %v1830
    %vm2085 = vcmp.lt.f32.partialorder %v2084, 0.0004427343
    %v2086 = vsel %vm2085, %v2083, %v2080
    %v2087 = vadd.f32 %v1831, 1.0
    %v2088 = vlog2.pop %v2087
    %v2089 = vmul.f32 %v2088, 0.6931472
    %v2090 = vmul.f32 -0.5, %v1831
    %v2091 = vadd.f32 %v2090, 1.0
    %v2092 = vmul.f32 %v2091, %v1831
    %v2093 = vand.u32 2147483647, %v1831
    %vm2094 = vcmp.lt.f32.partialorder %v2093, 0.0004427343
    %v2095 = vsel %vm2094, %v2092, %v2089
    %v2096 = vadd.f32 %v1832, 1.0
    %v2097 = vlog2.pop %v2096
    %v2098 = vmul.f32 %v2097, 0.6931472
    %v2099 = vmul.f32 -0.5, %v1832
    %v2100 = vadd.f32 %v2099, 1.0
    %v2101 = vmul.f32 %v2100, %v1832
    %v2102 = vand.u32 2147483647, %v1832
    %vm2103 = vcmp.lt.f32.partialorder %v2102, 0.0004427343
    %v2104 = vsel %vm2103, %v2101, %v2098
    %v2105 = vadd.f32 %v1833, 1.0
    %v2106 = vlog2.pop %v2105
    %v2107 = vmul.f32 %v2106, 0.6931472
    %v2108 = vmul.f32 -0.5, %v1833
    %v2109 = vadd.f32 %v2108, 1.0
    %v2110 = vmul.f32 %v2109, %v1833
    %v2111 = vand.u32 2147483647, %v1833
    %vm2112 = vcmp.lt.f32.partialorder %v2111, 0.0004427343
    %v2113 = vsel %vm2112, %v2110, %v2107
    %v2114 = vadd.f32 %v1834, 1.0
    %v2115 = vlog2.pop %v2114
    %v2116 = vmul.f32 %v2115, 0.6931472
    %v2117 = vmul.f32 -0.5, %v1834
    %v2118 = vadd.f32 %v2117, 1.0
    %v2119 = vmul.f32 %v2118, %v1834
    %v2120 = vand.u32 2147483647, %v1834
    %vm2121 = vcmp.lt.f32.partialorder %v2120, 0.0004427343
    %v2122 = vsel %vm2121, %v2119, %v2116
    %v2123 = vadd.f32 %v1835, 1.0
    %v2124 = vlog2.pop %v2123
    %v2125 = vmul.f32 %v2124, 0.6931472
    %v2126 = vmul.f32 -0.5, %v1835
    %v2127 = vadd.f32 %v2126, 1.0
    %v2128 = vmul.f32 %v2127, %v1835
    %v2129 = vand.u32 2147483647, %v1835
    %vm2130 = vcmp.lt.f32.partialorder %v2129, 0.0004427343
    %v2131 = vsel %vm2130, %v2128, %v2125
    %v2132 = vadd.f32 %v1836, 1.0
    %v2133 = vlog2.pop %v2132
    %v2134 = vmul.f32 %v2133, 0.6931472
    %v2135 = vmul.f32 -0.5, %v1836
    %v2136 = vadd.f32 %v2135, 1.0
    %v2137 = vmul.f32 %v2136, %v1836
    %v2138 = vand.u32 2147483647, %v1836
    %vm2139 = vcmp.lt.f32.partialorder %v2138, 0.0004427343
    %v2140 = vsel %vm2139, %v2137, %v2134
    %v2141 = vadd.f32 %v1837, 1.0
    %v2142 = vlog2.pop %v2141
    %v2143 = vmul.f32 %v2142, 0.6931472
    %v2144 = vmul.f32 -0.5, %v1837
    %v2145 = vadd.f32 %v2144, 1.0
    %v2146 = vmul.f32 %v2145, %v1837
    %v2147 = vand.u32 2147483647, %v1837
    %vm2148 = vcmp.lt.f32.partialorder %v2147, 0.0004427343
    %v2149 = vsel %vm2148, %v2146, %v2143
    %v2150 = vadd.f32 %v1838, 1.0
    %v2151 = vlog2.pop %v2150
    %v2152 = vmul.f32 %v2151, 0.6931472
    %v2153 = vmul.f32 -0.5, %v1838
    %v2154 = vadd.f32 %v2153, 1.0
    %v2155 = vmul.f32 %v2154, %v1838
    %v2156 = vand.u32 2147483647, %v1838
    %vm2157 = vcmp.lt.f32.partialorder %v2156, 0.0004427343
    %v2158 = vsel %vm2157, %v2155, %v2152
    %v2159 = vadd.f32 %v1839, 1.0
    %v2160 = vlog2.pop %v2159
    %v2161 = vmul.f32 %v2160, 0.6931472
    %v2162 = vmul.f32 -0.5, %v1839
    %v2163 = vadd.f32 %v2162, 1.0
    %v2164 = vmul.f32 %v2163, %v1839
    %v2165 = vand.u32 2147483647, %v1839
    %vm2166 = vcmp.lt.f32.partialorder %v2165, 0.0004427343
    %v2167 = vsel %vm2166, %v2164, %v2161
    %v2168 = vadd.f32 %v1840, 1.0
    %v2169 = vlog2.pop %v2168
    %v2170 = vmul.f32 %v2169, 0.6931472
    %v2171 = vmul.f32 -0.5, %v1840
    %v2172 = vadd.f32 %v2171, 1.0
    %v2173 = vmul.f32 %v2172, %v1840
    %v2174 = vand.u32 2147483647, %v1840
    %vm2175 = vcmp.lt.f32.partialorder %v2174, 0.0004427343
    %v2176 = vsel %vm2175, %v2173, %v2170
    %v2177 = vadd.f32 %v1841, 1.0
    %v2178 = vlog2.pop %v2177
    %v2179 = vmul.f32 %v2178, 0.6931472
    %v2180 = vmul.f32 -0.5, %v1841
    %v2181 = vadd.f32 %v2180, 1.0
    %v2182 = vmul.f32 %v2181, %v1841
    %v2183 = vand.u32 2147483647, %v1841
    %vm2184 = vcmp.lt.f32.partialorder %v2183, 0.0004427343
    %v2185 = vsel %vm2184, %v2182, %v2179
    %v2186 = vadd.f32 %v1842, 1.0
    %v2187 = vlog2.pop %v2186
    %v2188 = vmul.f32 %v2187, 0.6931472
    %v2189 = vmul.f32 -0.5, %v1842
    %v2190 = vadd.f32 %v2189, 1.0
    %v2191 = vmul.f32 %v2190, %v1842
    %v2192 = vand.u32 2147483647, %v1842
    %vm2193 = vcmp.lt.f32.partialorder %v2192, 0.0004427343
    %v2194 = vsel %vm2193, %v2191, %v2188
    %v2195 = vadd.f32 %v1843, 1.0
    %v2196 = vlog2.pop %v2195
    %v2197 = vmul.f32 %v2196, 0.6931472
    %v2198 = vmul.f32 -0.5, %v1843
    %v2199 = vadd.f32 %v2198, 1.0
    %v2200 = vmul.f32 %v2199, %v1843
    %v2201 = vand.u32 2147483647, %v1843
    %vm2202 = vcmp.lt.f32.partialorder %v2201, 0.0004427343
    %v2203 = vsel %vm2202, %v2200, %v2197
    %v2204 = vadd.f32 %v1844, 1.0
    %v2205 = vlog2.pop %v2204
    %v2206 = vmul.f32 %v2205, 0.6931472
    %v2207 = vmul.f32 -0.5, %v1844
    %v2208 = vadd.f32 %v2207, 1.0
    %v2209 = vmul.f32 %v2208, %v1844
    %v2210 = vand.u32 2147483647, %v1844
    %vm2211 = vcmp.lt.f32.partialorder %v2210, 0.0004427343
    %v2212 = vsel %vm2211, %v2209, %v2206
    %v2213 = vadd.f32 %v1845, 1.0
    %v2214 = vlog2.pop %v2213
    %v2215 = vmul.f32 %v2214, 0.6931472
    %v2216 = vmul.f32 -0.5, %v1845
    %v2217 = vadd.f32 %v2216, 1.0
    %v2218 = vmul.f32 %v2217, %v1845
    %v2219 = vand.u32 2147483647, %v1845
    %vm2220 = vcmp.lt.f32.partialorder %v2219, 0.0004427343
    %v2221 = vsel %vm2220, %v2218, %v2215
    %v2222 = vadd.f32 %v1846, 1.0
    %v2223 = vlog2.pop %v2222
    %v2224 = vmul.f32 %v2223, 0.6931472
    %v2225 = vmul.f32 -0.5, %v1846
    %v2226 = vadd.f32 %v2225, 1.0
    %v2227 = vmul.f32 %v2226, %v1846
    %v2228 = vand.u32 2147483647, %v1846
    %vm2229 = vcmp.lt.f32.partialorder %v2228, 0.0004427343
    %v2230 = vsel %vm2229, %v2227, %v2224
    %v2231 = vadd.f32 %v1847, 1.0
    %v2232 = vlog2.pop %v2231
    %v2233 = vmul.f32 %v2232, 0.6931472
    %v2234 = vmul.f32 -0.5, %v1847
    %v2235 = vadd.f32 %v2234, 1.0
    %v2236 = vmul.f32 %v2235, %v1847
    %v2237 = vand.u32 2147483647, %v1847
    %vm2238 = vcmp.lt.f32.partialorder %v2237, 0.0004427343
    %v2239 = vsel %vm2238, %v2236, %v2233
    %v2240 = vadd.f32 %v1848, 1.0
    %v2241 = vlog2.pop %v2240
    %v2242 = vmul.f32 %v2241, 0.6931472
    %v2243 = vmul.f32 -0.5, %v1848
    %v2244 = vadd.f32 %v2243, 1.0
    %v2245 = vmul.f32 %v2244, %v1848
    %v2246 = vand.u32 2147483647, %v1848
    %vm2247 = vcmp.lt.f32.partialorder %v2246, 0.0004427343
    %v2248 = vsel %vm2247, %v2245, %v2242
    %v2249 = vadd.f32 %v1849, 1.0
    %v2250 = vlog2.pop %v2249
    %v2251 = vmul.f32 %v2250, 0.6931472
    %v2252 = vmul.f32 -0.5, %v1849
    %v2253 = vadd.f32 %v2252, 1.0
    %v2254 = vmul.f32 %v2253, %v1849
    %v2255 = vand.u32 2147483647, %v1849
    %vm2256 = vcmp.lt.f32.partialorder %v2255, 0.0004427343
    %v2257 = vsel %vm2256, %v2254, %v2251
    %v2258 = vadd.f32 %v1850, 1.0
    %v2259 = vlog2.pop %v2258
    %v2260 = vmul.f32 %v2259, 0.6931472
    %v2261 = vmul.f32 -0.5, %v1850
    %v2262 = vadd.f32 %v2261, 1.0
    %v2263 = vmul.f32 %v2262, %v1850
    %v2264 = vand.u32 2147483647, %v1850
    %vm2265 = vcmp.lt.f32.partialorder %v2264, 0.0004427343
    %v2266 = vsel %vm2265, %v2263, %v2260
    %v2267 = vadd.f32 %v1851, 1.0
    %v2268 = vlog2.pop %v2267
    %v2269 = vmul.f32 %v2268, 0.6931472
    %v2270 = vmul.f32 -0.5, %v1851
    %v2271 = vadd.f32 %v2270, 1.0
    %v2272 = vmul.f32 %v2271, %v1851
    %v2273 = vand.u32 2147483647, %v1851
    %vm2274 = vcmp.lt.f32.partialorder %v2273, 0.0004427343
    %v2275 = vsel %vm2274, %v2272, %v2269
    %v2276 = vadd.f32 %v1852, 1.0
    %v2277 = vlog2.pop %v2276
    %v2278 = vmul.f32 %v2277, 0.6931472
    %v2279 = vmul.f32 -0.5, %v1852
    %v2280 = vadd.f32 %v2279, 1.0
    %v2281 = vmul.f32 %v2280, %v1852
    %v2282 = vand.u32 2147483647, %v1852
    %vm2283 = vcmp.lt.f32.partialorder %v2282, 0.0004427343
    %v2284 = vsel %vm2283, %v2281, %v2278
    %v2285 = vadd.f32 %v1853, 1.0
    %v2286 = vlog2.pop %v2285
    %v2287 = vmul.f32 %v2286, 0.6931472
    %v2288 = vmul.f32 -0.5, %v1853
    %v2289 = vadd.f32 %v2288, 1.0
    %v2290 = vmul.f32 %v2289, %v1853
    %v2291 = vand.u32 2147483647, %v1853
    %vm2292 = vcmp.lt.f32.partialorder %v2291, 0.0004427343
    %v2293 = vsel %vm2292, %v2290, %v2287
    %v2294 = vadd.f32 %v1854, 1.0
    %v2295 = vlog2.pop %v2294
    %v2296 = vmul.f32 %v2295, 0.6931472
    %v2297 = vmul.f32 -0.5, %v1854
    %v2298 = vadd.f32 %v2297, 1.0
    %v2299 = vmul.f32 %v2298, %v1854
    %v2300 = vand.u32 2147483647, %v1854
    %vm2301 = vcmp.lt.f32.partialorder %v2300, 0.0004427343
    %v2302 = vsel %vm2301, %v2299, %v2296
    %v2303 = vadd.f32 %v1855, 1.0
    %v2304 = vlog2.pop %v2303
    %v2305 = vmul.f32 %v2304, 0.6931472
    %v2306 = vmul.f32 -0.5, %v1855
    %v2307 = vadd.f32 %v2306, 1.0
    %v2308 = vmul.f32 %v2307, %v1855
    %v2309 = vand.u32 2147483647, %v1855
    %vm2310 = vcmp.lt.f32.partialorder %v2309, 0.0004427343
    %v2311 = vsel %vm2310, %v2308, %v2305
    %v2312 = vadd.f32 %v1856, 1.0
    %v2313 = vlog2.pop %v2312
    %v2314 = vmul.f32 %v2313, 0.6931472
    %v2315 = vmul.f32 -0.5, %v1856
    %v2316 = vadd.f32 %v2315, 1.0
    %v2317 = vmul.f32 %v2316, %v1856
    %v2318 = vand.u32 2147483647, %v1856
    %vm2319 = vcmp.lt.f32.partialorder %v2318, 0.0004427343
    %v2320 = vsel %vm2319, %v2317, %v2314
    %v2321 = vadd.f32 %v1857, 1.0
    %v2322 = vlog2.pop %v2321
    %v2323 = vmul.f32 %v2322, 0.6931472
    %v2324 = vmul.f32 -0.5, %v1857
    %v2325 = vadd.f32 %v2324, 1.0
    %v2326 = vmul.f32 %v2325, %v1857
    %v2327 = vand.u32 2147483647, %v1857
    %vm2328 = vcmp.lt.f32.partialorder %v2327, 0.0004427343
    %v2329 = vsel %vm2328, %v2326, %v2323
    %v2330 = vadd.f32 %v1858, 1.0
    %v2331 = vlog2.pop %v2330
    %v2332 = vmul.f32 %v2331, 0.6931472
    %v2333 = vmul.f32 -0.5, %v1858
    %v2334 = vadd.f32 %v2333, 1.0
    %v2335 = vmul.f32 %v2334, %v1858
    %v2336 = vand.u32 2147483647, %v1858
    %vm2337 = vcmp.lt.f32.partialorder %v2336, 0.0004427343
    %v2338 = vsel %vm2337, %v2335, %v2332
    %v2339 = vadd.f32 %v1859, 1.0
    %v2340 = vlog2.pop %v2339
    %v2341 = vmul.f32 %v2340, 0.6931472
    %v2342 = vmul.f32 -0.5, %v1859
    %v2343 = vadd.f32 %v2342, 1.0
    %v2344 = vmul.f32 %v2343, %v1859
    %v2345 = vand.u32 2147483647, %v1859
    %vm2346 = vcmp.lt.f32.partialorder %v2345, 0.0004427343
    %v2347 = vsel %vm2346, %v2344, %v2341
    %v2348 = vadd.f32 %v1860, 1.0
    %v2349 = vlog2.pop %v2348
    %v2350 = vmul.f32 %v2349, 0.6931472
    %v2351 = vmul.f32 -0.5, %v1860
    %v2352 = vadd.f32 %v2351, 1.0
    %v2353 = vmul.f32 %v2352, %v1860
    %v2354 = vand.u32 2147483647, %v1860
    %vm2355 = vcmp.lt.f32.partialorder %v2354, 0.0004427343
    %v2356 = vsel %vm2355, %v2353, %v2350
    %v2357 = vadd.f32 %v1861, 1.0
    %v2358 = vlog2.pop %v2357
    %v2359 = vmul.f32 %v2358, 0.6931472
    %v2360 = vmul.f32 -0.5, %v1861
    %v2361 = vadd.f32 %v2360, 1.0
    %v2362 = vmul.f32 %v2361, %v1861
    %v2363 = vand.u32 2147483647, %v1861
    %vm2364 = vcmp.lt.f32.partialorder %v2363, 0.0004427343
    %v2365 = vsel %vm2364, %v2362, %v2359
    %v2366 = vadd.f32 %v1862, 1.0
    %v2367 = vlog2.pop %v2366
    %v2368 = vmul.f32 %v2367, 0.6931472
    %v2369 = vmul.f32 -0.5, %v1862
    %v2370 = vadd.f32 %v2369, 1.0
    %v2371 = vmul.f32 %v2370, %v1862
    %v2372 = vand.u32 2147483647, %v1862
    %vm2373 = vcmp.lt.f32.partialorder %v2372, 0.0004427343
    %v2374 = vsel %vm2373, %v2371, %v2368
    %v2375 = vadd.f32 %v1863, 1.0
    %v2376 = vlog2.pop %v2375
    %v2377 = vmul.f32 %v2376, 0.6931472
    %v2378 = vmul.f32 -0.5, %v1863
    %v2379 = vadd.f32 %v2378, 1.0
    %v2380 = vmul.f32 %v2379, %v1863
    %v2381 = vand.u32 2147483647, %v1863
    %vm2382 = vcmp.lt.f32.partialorder %v2381, 0.0004427343
    %v2383 = vsel %vm2382, %v2380, %v2377
    %v2384 = vadd.f32 %v1864, 1.0
    %v2385 = vlog2.pop %v2384
    %v2386 = vmul.f32 %v2385, 0.6931472
    %v2387 = vmul.f32 -0.5, %v1864
    %v2388 = vadd.f32 %v2387, 1.0
    %v2389 = vmul.f32 %v2388, %v1864
    %v2390 = vand.u32 2147483647, %v1864
    %vm2391 = vcmp.lt.f32.partialorder %v2390, 0.0004427343
    %v2392 = vsel %vm2391, %v2389, %v2386
    %v2393 = vadd.f32 %v1865, 1.0
    %v2394 = vlog2.pop %v2393
    %v2395 = vmul.f32 %v2394, 0.6931472
    %v2396 = vmul.f32 -0.5, %v1865
    %v2397 = vadd.f32 %v2396, 1.0
    %v2398 = vmul.f32 %v2397, %v1865
    %v2399 = vand.u32 2147483647, %v1865
    %vm2400 = vcmp.lt.f32.partialorder %v2399, 0.0004427343
    %v2401 = vsel %vm2400, %v2398, %v2395
    %v2402 = vadd.f32 %v1866, 1.0
    %v2403 = vlog2.pop %v2402
    %v2404 = vmul.f32 %v2403, 0.6931472
    %v2405 = vmul.f32 -0.5, %v1866
    %v2406 = vadd.f32 %v2405, 1.0
    %v2407 = vmul.f32 %v2406, %v1866
    %v2408 = vand.u32 2147483647, %v1866
    %vm2409 = vcmp.lt.f32.partialorder %v2408, 0.0004427343
    %v2410 = vsel %vm2409, %v2407, %v2404
    %v2411 = vadd.f32 %v1867, 1.0
    %v2412 = vlog2.pop %v2411
    %v2413 = vmul.f32 %v2412, 0.6931472
    %v2414 = vmul.f32 -0.5, %v1867
    %v2415 = vadd.f32 %v2414, 1.0
    %v2416 = vmul.f32 %v2415, %v1867
    %v2417 = vand.u32 2147483647, %v1867
    %vm2418 = vcmp.lt.f32.partialorder %v2417, 0.0004427343
    %v2419 = vsel %vm2418, %v2416, %v2413
    %v2420 = vadd.f32 %v1868, 1.0
    %v2421 = vlog2.pop %v2420
    %v2422 = vmul.f32 %v2421, 0.6931472
    %v2423 = vmul.f32 -0.5, %v1868
    %v2424 = vadd.f32 %v2423, 1.0
    %v2425 = vmul.f32 %v2424, %v1868
    %v2426 = vand.u32 2147483647, %v1868
    %vm2427 = vcmp.lt.f32.partialorder %v2426, 0.0004427343
    %v2428 = vsel %vm2427, %v2425, %v2422
    %v2429 = vadd.f32 %v1869, 1.0
    %v2430 = vlog2.pop %v2429
    %v2431 = vmul.f32 %v2430, 0.6931472
    %v2432 = vmul.f32 -0.5, %v1869
    %v2433 = vadd.f32 %v2432, 1.0
    %v2434 = vmul.f32 %v2433, %v1869
    %v2435 = vand.u32 2147483647, %v1869
    %vm2436 = vcmp.lt.f32.partialorder %v2435, 0.0004427343
    %v2437 = vsel %vm2436, %v2434, %v2431
    %v2438 = vadd.f32 %v1870, 1.0
    %v2439 = vlog2.pop %v2438
    %v2440 = vmul.f32 %v2439, 0.6931472
    %v2441 = vmul.f32 -0.5, %v1870
    %v2442 = vadd.f32 %v2441, 1.0
    %v2443 = vmul.f32 %v2442, %v1870
    %v2444 = vand.u32 2147483647, %v1870
    %vm2445 = vcmp.lt.f32.partialorder %v2444, 0.0004427343
    %v2446 = vsel %vm2445, %v2443, %v2440
    %v2447 = vadd.f32 %v1871, 1.0
    %v2448 = vlog2.pop %v2447
    %v2449 = vmul.f32 %v2448, 0.6931472
    %v2450 = vmul.f32 -0.5, %v1871
    %v2451 = vadd.f32 %v2450, 1.0
    %v2452 = vmul.f32 %v2451, %v1871
    %v2453 = vand.u32 2147483647, %v1871
    %vm2454 = vcmp.lt.f32.partialorder %v2453, 0.0004427343
    %v2455 = vsel %vm2454, %v2452, %v2449
    %v2456 = vadd.f32 %v1872, 1.0
    %v2457 = vlog2.pop %v2456
    %v2458 = vmul.f32 %v2457, 0.6931472
    %v2459 = vmul.f32 -0.5, %v1872
    %v2460 = vadd.f32 %v2459, 1.0
    %v2461 = vmul.f32 %v2460, %v1872
    %v2462 = vand.u32 2147483647, %v1872
    %vm2463 = vcmp.lt.f32.partialorder %v2462, 0.0004427343
    %v2464 = vsel %vm2463, %v2461, %v2458
    %v2465 = vadd.f32 %v1873, 1.0
    %v2466 = vlog2.pop %v2465
    %v2467 = vmul.f32 %v2466, 0.6931472
    %v2468 = vmul.f32 -0.5, %v1873
    %v2469 = vadd.f32 %v2468, 1.0
    %v2470 = vmul.f32 %v2469, %v1873
    %v2471 = vand.u32 2147483647, %v1873
    %vm2472 = vcmp.lt.f32.partialorder %v2471, 0.0004427343
    %v2473 = vsel %vm2472, %v2470, %v2467
    %v2474 = vadd.f32 %v1874, 1.0
    %v2475 = vlog2.pop %v2474
    %v2476 = vmul.f32 %v2475, 0.6931472
    %v2477 = vmul.f32 -0.5, %v1874
    %v2478 = vadd.f32 %v2477, 1.0
    %v2479 = vmul.f32 %v2478, %v1874
    %v2480 = vand.u32 2147483647, %v1874
    %vm2481 = vcmp.lt.f32.partialorder %v2480, 0.0004427343
    %v2482 = vsel %vm2481, %v2479, %v2476
    %v2483 = vadd.f32 %v1875, 1.0
    %v2484 = vlog2.pop %v2483
    %v2485 = vmul.f32 %v2484, 0.6931472
    %v2486 = vmul.f32 -0.5, %v1875
    %v2487 = vadd.f32 %v2486, 1.0
    %v2488 = vmul.f32 %v2487, %v1875
    %v2489 = vand.u32 2147483647, %v1875
    %vm2490 = vcmp.lt.f32.partialorder %v2489, 0.0004427343
    %v2491 = vsel %vm2490, %v2488, %v2485
    %v2492 = vadd.f32 %v1876, 1.0
    %v2493 = vlog2.pop %v2492
    %v2494 = vmul.f32 %v2493, 0.6931472
    %v2495 = vmul.f32 -0.5, %v1876
    %v2496 = vadd.f32 %v2495, 1.0
    %v2497 = vmul.f32 %v2496, %v1876
    %v2498 = vand.u32 2147483647, %v1876
    %vm2499 = vcmp.lt.f32.partialorder %v2498, 0.0004427343
    %v2500 = vsel %vm2499, %v2497, %v2494
    %v2501 = vadd.f32 %v1877, 1.0
    %v2502 = vlog2.pop %v2501
    %v2503 = vmul.f32 %v2502, 0.6931472
    %v2504 = vmul.f32 -0.5, %v1877
    %v2505 = vadd.f32 %v2504, 1.0
    %v2506 = vmul.f32 %v2505, %v1877
    %v2507 = vand.u32 2147483647, %v1877
    %vm2508 = vcmp.lt.f32.partialorder %v2507, 0.0004427343
    %v2509 = vsel %vm2508, %v2506, %v2503
    %v2510 = vadd.f32 %v1878, 1.0
    %v2511 = vlog2.pop %v2510
    %v2512 = vmul.f32 %v2511, 0.6931472
    %v2513 = vmul.f32 -0.5, %v1878
    %v2514 = vadd.f32 %v2513, 1.0
    %v2515 = vmul.f32 %v2514, %v1878
    %v2516 = vand.u32 2147483647, %v1878
    %vm2517 = vcmp.lt.f32.partialorder %v2516, 0.0004427343
    %v2518 = vsel %vm2517, %v2515, %v2512
    %v2519 = vadd.f32 %v1879, 1.0
    %v2520 = vlog2.pop %v2519
    %v2521 = vmul.f32 %v2520, 0.6931472
    %v2522 = vmul.f32 -0.5, %v1879
    %v2523 = vadd.f32 %v2522, 1.0
    %v2524 = vmul.f32 %v2523, %v1879
    %v2525 = vand.u32 2147483647, %v1879
    %vm2526 = vcmp.lt.f32.partialorder %v2525, 0.0004427343
    %v2527 = vsel %vm2526, %v2524, %v2521
    %v2528 = vadd.f32 %v1880, 1.0
    %v2529 = vlog2.pop %v2528
    %v2530 = vmul.f32 %v2529, 0.6931472
    %v2531 = vmul.f32 -0.5, %v1880
    %v2532 = vadd.f32 %v2531, 1.0
    %v2533 = vmul.f32 %v2532, %v1880
    %v2534 = vand.u32 2147483647, %v1880
    %vm2535 = vcmp.lt.f32.partialorder %v2534, 0.0004427343
    %v2536 = vsel %vm2535, %v2533, %v2530
    %v2537 = vadd.f32 %v1881, 1.0
    %v2538 = vlog2.pop %v2537
    %v2539 = vmul.f32 %v2538, 0.6931472
    %v2540 = vmul.f32 -0.5, %v1881
    %v2541 = vadd.f32 %v2540, 1.0
    %v2542 = vmul.f32 %v2541, %v1881
    %v2543 = vand.u32 2147483647, %v1881
    %vm2544 = vcmp.lt.f32.partialorder %v2543, 0.0004427343
    %v2545 = vsel %vm2544, %v2542, %v2539
    %v2546 = vadd.f32 %v1882, 1.0
    %v2547 = vlog2.pop %v2546
    %v2548 = vmul.f32 %v2547, 0.6931472
    %v2549 = vmul.f32 -0.5, %v1882
    %v2550 = vadd.f32 %v2549, 1.0
    %v2551 = vmul.f32 %v2550, %v1882
    %v2552 = vand.u32 2147483647, %v1882
    %vm2553 = vcmp.lt.f32.partialorder %v2552, 0.0004427343
    %v2554 = vsel %vm2553, %v2551, %v2548
    %v2555 = vadd.f32 %v1883, 1.0
    %v2556 = vlog2.pop %v2555
    %v2557 = vmul.f32 %v2556, 0.6931472
    %v2558 = vmul.f32 -0.5, %v1883
    %v2559 = vadd.f32 %v2558, 1.0
    %v2560 = vmul.f32 %v2559, %v1883
    %v2561 = vand.u32 2147483647, %v1883
    %vm2562 = vcmp.lt.f32.partialorder %v2561, 0.0004427343
    %v2563 = vsel %vm2562, %v2560, %v2557
    %v2564 = vadd.f32 %v1884, 1.0
    %v2565 = vlog2.pop %v2564
    %v2566 = vmul.f32 %v2565, 0.6931472
    %v2567 = vmul.f32 -0.5, %v1884
    %v2568 = vadd.f32 %v2567, 1.0
    %v2569 = vmul.f32 %v2568, %v1884
    %v2570 = vand.u32 2147483647, %v1884
    %vm2571 = vcmp.lt.f32.partialorder %v2570, 0.0004427343
    %v2572 = vsel %vm2571, %v2569, %v2566
    %v2573 = vadd.f32 %v1885, 1.0
    %v2574 = vlog2.pop %v2573
    %v2575 = vmul.f32 %v2574, 0.6931472
    %v2576 = vmul.f32 -0.5, %v1885
    %v2577 = vadd.f32 %v2576, 1.0
    %v2578 = vmul.f32 %v2577, %v1885
    %v2579 = vand.u32 2147483647, %v1885
    %vm2580 = vcmp.lt.f32.partialorder %v2579, 0.0004427343
    %v2581 = vsel %vm2580, %v2578, %v2575
    %v2582 = vadd.f32 %v1886, 1.0
    %v2583 = vlog2.pop %v2582
    %v2584 = vmul.f32 %v2583, 0.6931472
    %v2585 = vmul.f32 -0.5, %v1886
    %v2586 = vadd.f32 %v2585, 1.0
    %v2587 = vmul.f32 %v2586, %v1886
    %v2588 = vand.u32 2147483647, %v1886
    %vm2589 = vcmp.lt.f32.partialorder %v2588, 0.0004427343
    %v2590 = vsel %vm2589, %v2587, %v2584
    %v2591 = vadd.f32 %v1887, 1.0
    %v2592 = vlog2.pop %v2591
    %v2593 = vmul.f32 %v2592, 0.6931472
    %v2594 = vmul.f32 -0.5, %v1887
    %v2595 = vadd.f32 %v2594, 1.0
    %v2596 = vmul.f32 %v2595, %v1887
    %v2597 = vand.u32 2147483647, %v1887
    %vm2598 = vcmp.lt.f32.partialorder %v2597, 0.0004427343
    %v2599 = vsel %vm2598, %v2596, %v2593
    %v2600 = vadd.f32 %v1888, 1.0
    %v2601 = vlog2.pop %v2600
    %v2602 = vmul.f32 %v2601, 0.6931472
    %v2603 = vmul.f32 -0.5, %v1888
    %v2604 = vadd.f32 %v2603, 1.0
    %v2605 = vmul.f32 %v2604, %v1888
    %v2606 = vand.u32 2147483647, %v1888
    %vm2607 = vcmp.lt.f32.partialorder %v2606, 0.0004427343
    %v2608 = vsel %vm2607, %v2605, %v2602
    %v2609 = vadd.f32 %v1889, 1.0
    %v2610 = vlog2.pop %v2609
    %v2611 = vmul.f32 %v2610, 0.6931472
    %v2612 = vmul.f32 -0.5, %v1889
    %v2613 = vadd.f32 %v2612, 1.0
    %v2614 = vmul.f32 %v2613, %v1889
    %v2615 = vand.u32 2147483647, %v1889
    %vm2616 = vcmp.lt.f32.partialorder %v2615, 0.0004427343
    %v2617 = vsel %vm2616, %v2614, %v2611
    %v2618 = vadd.f32 %v1890, 1.0
    %v2619 = vlog2.pop %v2618
    %v2620 = vmul.f32 %v2619, 0.6931472
    %v2621 = vmul.f32 -0.5, %v1890
    %v2622 = vadd.f32 %v2621, 1.0
    %v2623 = vmul.f32 %v2622, %v1890
    %v2624 = vand.u32 2147483647, %v1890
    %vm2625 = vcmp.lt.f32.partialorder %v2624, 0.0004427343
    %v2626 = vsel %vm2625, %v2623, %v2620
    %v2627 = vadd.f32 %v1891, 1.0
    %v2628 = vlog2.pop %v2627
    %v2629 = vmul.f32 %v2628, 0.6931472
    %v2630 = vmul.f32 -0.5, %v1891
    %v2631 = vadd.f32 %v2630, 1.0
    %v2632 = vmul.f32 %v2631, %v1891
    %v2633 = vand.u32 2147483647, %v1891
    %vm2634 = vcmp.lt.f32.partialorder %v2633, 0.0004427343
    %v2635 = vsel %vm2634, %v2632, %v2629
    %v2636 = vadd.f32 %v1892, 1.0
    %v2637 = vlog2.pop %v2636
    %v2638 = vmul.f32 %v2637, 0.6931472
    %v2639 = vmul.f32 -0.5, %v1892
    %v2640 = vadd.f32 %v2639, 1.0
    %v2641 = vmul.f32 %v2640, %v1892
    %v2642 = vand.u32 2147483647, %v1892
    %vm2643 = vcmp.lt.f32.partialorder %v2642, 0.0004427343
    %v2644 = vsel %vm2643, %v2641, %v2638
    %v2645 = vadd.f32 %v1893, 1.0
    %v2646 = vlog2.pop %v2645
    %v2647 = vmul.f32 %v2646, 0.6931472
    %v2648 = vmul.f32 -0.5, %v1893
    %v2649 = vadd.f32 %v2648, 1.0
    %v2650 = vmul.f32 %v2649, %v1893
    %v2651 = vand.u32 2147483647, %v1893
    %vm2652 = vcmp.lt.f32.partialorder %v2651, 0.0004427343
    %v2653 = vsel %vm2652, %v2650, %v2647
    %v2654 = vadd.f32 %v1894, 1.0
    %v2655 = vlog2.pop %v2654
    %v2656 = vmul.f32 %v2655, 0.6931472
    %v2657 = vmul.f32 -0.5, %v1894
    %v2658 = vadd.f32 %v2657, 1.0
    %v2659 = vmul.f32 %v2658, %v1894
    %v2660 = vand.u32 2147483647, %v1894
    %vm2661 = vcmp.lt.f32.partialorder %v2660, 0.0004427343
    %v2662 = vsel %vm2661, %v2659, %v2656
    %v2663 = vadd.f32 %v1895, 1.0
    %v2664 = vlog2.pop %v2663
    %v2665 = vmul.f32 %v2664, 0.6931472
    %v2666 = vmul.f32 -0.5, %v1895
    %v2667 = vadd.f32 %v2666, 1.0
    %v2668 = vmul.f32 %v2667, %v1895
    %v2669 = vand.u32 2147483647, %v1895
    %vm2670 = vcmp.lt.f32.partialorder %v2669, 0.0004427343
    %v2671 = vsel %vm2670, %v2668, %v2665
    %v2672 = vadd.f32 %v1896, 1.0
    %v2673 = vlog2.pop %v2672
    %v2674 = vmul.f32 %v2673, 0.6931472
    %v2675 = vmul.f32 -0.5, %v1896
    %v2676 = vadd.f32 %v2675, 1.0
    %v2677 = vmul.f32 %v2676, %v1896
    %v2678 = vand.u32 2147483647, %v1896
    %vm2679 = vcmp.lt.f32.partialorder %v2678, 0.0004427343
    %v2680 = vsel %vm2679, %v2677, %v2674
    %v2681 = vadd.f32 %v1897, 1.0
    %v2682 = vlog2.pop %v2681
    %v2683 = vmul.f32 %v2682, 0.6931472
    %v2684 = vmul.f32 -0.5, %v1897
    %v2685 = vadd.f32 %v2684, 1.0
    %v2686 = vmul.f32 %v2685, %v1897
    %v2687 = vand.u32 2147483647, %v1897
    %vm2688 = vcmp.lt.f32.partialorder %v2687, 0.0004427343
    %v2689 = vsel %vm2688, %v2686, %v2683
    %v2690 = vadd.f32 %v1898, 1.0
    %v2691 = vlog2.pop %v2690
    %v2692 = vmul.f32 %v2691, 0.6931472
    %v2693 = vmul.f32 -0.5, %v1898
    %v2694 = vadd.f32 %v2693, 1.0
    %v2695 = vmul.f32 %v2694, %v1898
    %v2696 = vand.u32 2147483647, %v1898
    %vm2697 = vcmp.lt.f32.partialorder %v2696, 0.0004427343
    %v2698 = vsel %vm2697, %v2695, %v2692
    %v2699 = vadd.f32 %v1899, 1.0
    %v2700 = vlog2.pop %v2699
    %v2701 = vmul.f32 %v2700, 0.6931472
    %v2702 = vmul.f32 -0.5, %v1899
    %v2703 = vadd.f32 %v2702, 1.0
    %v2704 = vmul.f32 %v2703, %v1899
    %v2705 = vand.u32 2147483647, %v1899
    %vm2706 = vcmp.lt.f32.partialorder %v2705, 0.0004427343
    %v2707 = vsel %vm2706, %v2704, %v2701
    %v2708 = vadd.f32 %v1900, 1.0
    %v2709 = vlog2.pop %v2708
    %v2710 = vmul.f32 %v2709, 0.6931472
    %v2711 = vmul.f32 -0.5, %v1900
    %v2712 = vadd.f32 %v2711, 1.0
    %v2713 = vmul.f32 %v2712, %v1900
    %v2714 = vand.u32 2147483647, %v1900
    %vm2715 = vcmp.lt.f32.partialorder %v2714, 0.0004427343
    %v2716 = vsel %vm2715, %v2713, %v2710
    %v2717 = vadd.f32 %v1901, 1.0
    %v2718 = vlog2.pop %v2717
    %v2719 = vmul.f32 %v2718, 0.6931472
    %v2720 = vmul.f32 -0.5, %v1901
    %v2721 = vadd.f32 %v2720, 1.0
    %v2722 = vmul.f32 %v2721, %v1901
    %v2723 = vand.u32 2147483647, %v1901
    %vm2724 = vcmp.lt.f32.partialorder %v2723, 0.0004427343
    %v2725 = vsel %vm2724, %v2722, %v2719
    %v2726 = vadd.f32 %v1902, 1.0
    %v2727 = vlog2.pop %v2726
    %v2728 = vmul.f32 %v2727, 0.6931472
    %v2729 = vmul.f32 -0.5, %v1902
    %v2730 = vadd.f32 %v2729, 1.0
    %v2731 = vmul.f32 %v2730, %v1902
    %v2732 = vand.u32 2147483647, %v1902
    %vm2733 = vcmp.lt.f32.partialorder %v2732, 0.0004427343
    %v2734 = vsel %vm2733, %v2731, %v2728
    %v2735 = vadd.f32 %v1903, 1.0
    %v2736 = vlog2.pop %v2735
    %v2737 = vmul.f32 %v2736, 0.6931472
    %v2738 = vmul.f32 -0.5, %v1903
    %v2739 = vadd.f32 %v2738, 1.0
    %v2740 = vmul.f32 %v2739, %v1903
    %v2741 = vand.u32 2147483647, %v1903
    %vm2742 = vcmp.lt.f32.partialorder %v2741, 0.0004427343
    %v2743 = vsel %vm2742, %v2740, %v2737
    %v2744 = vadd.f32 %v1904, 1.0
    %v2745 = vlog2.pop %v2744
    %v2746 = vmul.f32 %v2745, 0.6931472
    %v2747 = vmul.f32 -0.5, %v1904
    %v2748 = vadd.f32 %v2747, 1.0
    %v2749 = vmul.f32 %v2748, %v1904
    %v2750 = vand.u32 2147483647, %v1904
    %vm2751 = vcmp.lt.f32.partialorder %v2750, 0.0004427343
    %v2752 = vsel %vm2751, %v2749, %v2746
    %v2753 = vadd.f32 %v1905, 1.0
    %v2754 = vlog2.pop %v2753
    %v2755 = vmul.f32 %v2754, 0.6931472
    %v2756 = vmul.f32 -0.5, %v1905
    %v2757 = vadd.f32 %v2756, 1.0
    %v2758 = vmul.f32 %v2757, %v1905
    %v2759 = vand.u32 2147483647, %v1905
    %vm2760 = vcmp.lt.f32.partialorder %v2759, 0.0004427343
    %v2761 = vsel %vm2760, %v2758, %v2755
    %v2762 = vadd.f32 %v1906, 1.0
    %v2763 = vlog2.pop %v2762
    %v2764 = vmul.f32 %v2763, 0.6931472
    %v2765 = vmul.f32 -0.5, %v1906
    %v2766 = vadd.f32 %v2765, 1.0
    %v2767 = vmul.f32 %v2766, %v1906
    %v2768 = vand.u32 2147483647, %v1906
    %vm2769 = vcmp.lt.f32.partialorder %v2768, 0.0004427343
    %v2770 = vsel %vm2769, %v2767, %v2764
    %v2771 = vadd.f32 %v1907, 1.0
    %v2772 = vlog2.pop %v2771
    %v2773 = vmul.f32 %v2772, 0.6931472
    %v2774 = vmul.f32 -0.5, %v1907
    %v2775 = vadd.f32 %v2774, 1.0
    %v2776 = vmul.f32 %v2775, %v1907
    %v2777 = vand.u32 2147483647, %v1907
    %vm2778 = vcmp.lt.f32.partialorder %v2777, 0.0004427343
    %v2779 = vsel %vm2778, %v2776, %v2773
    %v2780 = vadd.f32 %v1908, 1.0
    %v2781 = vlog2.pop %v2780
    %v2782 = vmul.f32 %v2781, 0.6931472
    %v2783 = vmul.f32 -0.5, %v1908
    %v2784 = vadd.f32 %v2783, 1.0
    %v2785 = vmul.f32 %v2784, %v1908
    %v2786 = vand.u32 2147483647, %v1908
    %vm2787 = vcmp.lt.f32.partialorder %v2786, 0.0004427343
    %v2788 = vsel %vm2787, %v2785, %v2782
    %v2789 = vadd.f32 %v1909, 1.0
    %v2790 = vlog2.pop %v2789
    %v2791 = vmul.f32 %v2790, 0.6931472
    %v2792 = vmul.f32 -0.5, %v1909
    %v2793 = vadd.f32 %v2792, 1.0
    %v2794 = vmul.f32 %v2793, %v1909
    %v2795 = vand.u32 2147483647, %v1909
    %vm2796 = vcmp.lt.f32.partialorder %v2795, 0.0004427343
    %v2797 = vsel %vm2796, %v2794, %v2791
    %v2798 = vadd.f32 %v1910, 1.0
    %v2799 = vlog2.pop %v2798
    %v2800 = vmul.f32 %v2799, 0.6931472
    %v2801 = vmul.f32 -0.5, %v1910
    %v2802 = vadd.f32 %v2801, 1.0
    %v2803 = vmul.f32 %v2802, %v1910
    %v2804 = vand.u32 2147483647, %v1910
    %vm2805 = vcmp.lt.f32.partialorder %v2804, 0.0004427343
    %v2806 = vsel %vm2805, %v2803, %v2800
    %v2807 = vadd.f32 %v1911, 1.0
    %v2808 = vlog2.pop %v2807
    %v2809 = vmul.f32 %v2808, 0.6931472
    %v2810 = vmul.f32 -0.5, %v1911
    %v2811 = vadd.f32 %v2810, 1.0
    %v2812 = vmul.f32 %v2811, %v1911
    %v2813 = vand.u32 2147483647, %v1911
    %vm2814 = vcmp.lt.f32.partialorder %v2813, 0.0004427343
    %v2815 = vsel %vm2814, %v2812, %v2809
    %v2816 = vadd.f32 %v1912, 1.0
    %v2817 = vlog2.pop %v2816
    %v2818 = vmul.f32 %v2817, 0.6931472
    %v2819 = vmul.f32 -0.5, %v1912
    %v2820 = vadd.f32 %v2819, 1.0
    %v2821 = vmul.f32 %v2820, %v1912
    %v2822 = vand.u32 2147483647, %v1912
    %vm2823 = vcmp.lt.f32.partialorder %v2822, 0.0004427343
    %v2824 = vsel %vm2823, %v2821, %v2818
    %v2825 = vadd.f32 %v1913, 1.0
    %v2826 = vlog2.pop %v2825
    %v2827 = vmul.f32 %v2826, 0.6931472
    %v2828 = vmul.f32 -0.5, %v1913
    %v2829 = vadd.f32 %v2828, 1.0
    %v2830 = vmul.f32 %v2829, %v1913
    %v2831 = vand.u32 2147483647, %v1913
    %vm2832 = vcmp.lt.f32.partialorder %v2831, 0.0004427343
    %v2833 = vsel %vm2832, %v2830, %v2827
    %v2834 = vadd.f32 %v1914, 1.0
    %v2835 = vlog2.pop %v2834
    %v2836 = vmul.f32 %v2835, 0.6931472
    %v2837 = vmul.f32 -0.5, %v1914
    %v2838 = vadd.f32 %v2837, 1.0
    %v2839 = vmul.f32 %v2838, %v1914
    %v2840 = vand.u32 2147483647, %v1914
    %vm2841 = vcmp.lt.f32.partialorder %v2840, 0.0004427343
    %v2842 = vsel %vm2841, %v2839, %v2836
    %v2843 = vadd.f32 %v1915, 1.0
    %v2844 = vlog2.pop %v2843
    %v2845 = vmul.f32 %v2844, 0.6931472
    %v2846 = vmul.f32 -0.5, %v1915
    %v2847 = vadd.f32 %v2846, 1.0
    %v2848 = vmul.f32 %v2847, %v1915
    %v2849 = vand.u32 2147483647, %v1915
    %vm2850 = vcmp.lt.f32.partialorder %v2849, 0.0004427343
    %v2851 = vsel %vm2850, %v2848, %v2845
    %v2852 = vadd.f32 %v1916, 1.0
    %v2853 = vlog2.pop %v2852
    %v2854 = vmul.f32 %v2853, 0.6931472
    %v2855 = vmul.f32 -0.5, %v1916
    %v2856 = vadd.f32 %v2855, 1.0
    %v2857 = vmul.f32 %v2856, %v1916
    %v2858 = vand.u32 2147483647, %v1916
    %vm2859 = vcmp.lt.f32.partialorder %v2858, 0.0004427343
    %v2860 = vsel %vm2859, %v2857, %v2854
    %v2861 = vadd.f32 %v1917, 1.0
    %v2862 = vlog2.pop %v2861
    %v2863 = vmul.f32 %v2862, 0.6931472
    %v2864 = vmul.f32 -0.5, %v1917
    %v2865 = vadd.f32 %v2864, 1.0
    %v2866 = vmul.f32 %v2865, %v1917
    %v2867 = vand.u32 2147483647, %v1917
    %vm2868 = vcmp.lt.f32.partialorder %v2867, 0.0004427343
    %v2869 = vsel %vm2868, %v2866, %v2863
    %v2870 = vadd.f32 %v1918, 1.0
    %v2871 = vlog2.pop %v2870
    %v2872 = vmul.f32 %v2871, 0.6931472
    %v2873 = vmul.f32 -0.5, %v1918
    %v2874 = vadd.f32 %v2873, 1.0
    %v2875 = vmul.f32 %v2874, %v1918
    %v2876 = vand.u32 2147483647, %v1918
    %vm2877 = vcmp.lt.f32.partialorder %v2876, 0.0004427343
    %v2878 = vsel %vm2877, %v2875, %v2872
    %v2879 = vadd.f32 %v1919, 1.0
    %v2880 = vlog2.pop %v2879
    %v2881 = vmul.f32 %v2880, 0.6931472
    %v2882 = vmul.f32 -0.5, %v1919
    %v2883 = vadd.f32 %v2882, 1.0
    %v2884 = vmul.f32 %v2883, %v1919
    %v2885 = vand.u32 2147483647, %v1919
    %vm2886 = vcmp.lt.f32.partialorder %v2885, 0.0004427343
    %v2887 = vsel %vm2886, %v2884, %v2881
    %v2888 = vadd.f32 %v1920, 1.0
    %v2889 = vlog2.pop %v2888
    %v2890 = vmul.f32 %v2889, 0.6931472
    %v2891 = vmul.f32 -0.5, %v1920
    %v2892 = vadd.f32 %v2891, 1.0
    %v2893 = vmul.f32 %v2892, %v1920
    %v2894 = vand.u32 2147483647, %v1920
    %vm2895 = vcmp.lt.f32.partialorder %v2894, 0.0004427343
    %v2896 = vsel %vm2895, %v2893, %v2890
    %v2897 = vadd.f32 %v1921, 1.0
    %v2898 = vlog2.pop %v2897
    %v2899 = vmul.f32 %v2898, 0.6931472
    %v2900 = vmul.f32 -0.5, %v1921
    %v2901 = vadd.f32 %v2900, 1.0
    %v2902 = vmul.f32 %v2901, %v1921
    %v2903 = vand.u32 2147483647, %v1921
    %vm2904 = vcmp.lt.f32.partialorder %v2903, 0.0004427343
    %v2905 = vsel %vm2904, %v2902, %v2899
    %v2906 = vadd.f32 %v1922, 1.0
    %v2907 = vlog2.pop %v2906
    %v2908 = vmul.f32 %v2907, 0.6931472
    %v2909 = vmul.f32 -0.5, %v1922
    %v2910 = vadd.f32 %v2909, 1.0
    %v2911 = vmul.f32 %v2910, %v1922
    %v2912 = vand.u32 2147483647, %v1922
    %vm2913 = vcmp.lt.f32.partialorder %v2912, 0.0004427343
    %v2914 = vsel %vm2913, %v2911, %v2908
    %v2915 = vadd.f32 %v1923, 1.0
    %v2916 = vlog2.pop %v2915
    %v2917 = vmul.f32 %v2916, 0.6931472
    %v2918 = vmul.f32 -0.5, %v1923
    %v2919 = vadd.f32 %v2918, 1.0
    %v2920 = vmul.f32 %v2919, %v1923
    %v2921 = vand.u32 2147483647, %v1923
    %vm2922 = vcmp.lt.f32.partialorder %v2921, 0.0004427343
    %v2923 = vsel %vm2922, %v2920, %v2917
    %v2924 = vadd.f32 %v1924, 1.0
    %v2925 = vlog2.pop %v2924
    %v2926 = vmul.f32 %v2925, 0.6931472
    %v2927 = vmul.f32 -0.5, %v1924
    %v2928 = vadd.f32 %v2927, 1.0
    %v2929 = vmul.f32 %v2928, %v1924
    %v2930 = vand.u32 2147483647, %v1924
    %vm2931 = vcmp.lt.f32.partialorder %v2930, 0.0004427343
    %v2932 = vsel %vm2931, %v2929, %v2926
    %v2933 = vadd.f32 %v1925, 1.0
    %v2934 = vlog2.pop %v2933
    %v2935 = vmul.f32 %v2934, 0.6931472
    %v2936 = vmul.f32 -0.5, %v1925
    %v2937 = vadd.f32 %v2936, 1.0
    %v2938 = vmul.f32 %v2937, %v1925
    %v2939 = vand.u32 2147483647, %v1925
    %vm2940 = vcmp.lt.f32.partialorder %v2939, 0.0004427343
    %v2941 = vsel %vm2940, %v2938, %v2935
    %v2942 = vadd.f32 %v1926, 1.0
    %v2943 = vlog2.pop %v2942
    %v2944 = vmul.f32 %v2943, 0.6931472
    %v2945 = vmul.f32 -0.5, %v1926
    %v2946 = vadd.f32 %v2945, 1.0
    %v2947 = vmul.f32 %v2946, %v1926
    %v2948 = vand.u32 2147483647, %v1926
    %vm2949 = vcmp.lt.f32.partialorder %v2948, 0.0004427343
    %v2950 = vsel %vm2949, %v2947, %v2944
    %v2951 = vadd.f32 %v1927, 1.0
    %v2952 = vlog2.pop %v2951
    %v2953 = vmul.f32 %v2952, 0.6931472
    %v2954 = vmul.f32 -0.5, %v1927
    %v2955 = vadd.f32 %v2954, 1.0
    %v2956 = vmul.f32 %v2955, %v1927
    %v2957 = vand.u32 2147483647, %v1927
    %vm2958 = vcmp.lt.f32.partialorder %v2957, 0.0004427343
    %v2959 = vsel %vm2958, %v2956, %v2953
    %v2960 = vadd.f32 %v1928, 1.0
    %v2961 = vlog2.pop %v2960
    %v2962 = vmul.f32 %v2961, 0.6931472
    %v2963 = vmul.f32 -0.5, %v1928
    %v2964 = vadd.f32 %v2963, 1.0
    %v2965 = vmul.f32 %v2964, %v1928
    %v2966 = vand.u32 2147483647, %v1928
    %vm2967 = vcmp.lt.f32.partialorder %v2966, 0.0004427343
    %v2968 = vsel %vm2967, %v2965, %v2962
    %v2969 = vadd.f32 %v1929, 1.0
    %v2970 = vlog2.pop %v2969
    %v2971 = vmul.f32 %v2970, 0.6931472
    %v2972 = vmul.f32 -0.5, %v1929
    %v2973 = vadd.f32 %v2972, 1.0
    %v2974 = vmul.f32 %v2973, %v1929
    %v2975 = vand.u32 2147483647, %v1929
    %vm2976 = vcmp.lt.f32.partialorder %v2975, 0.0004427343
    %v2977 = vsel %vm2976, %v2974, %v2971
    %v2978 = vadd.f32 %v1930, 1.0
    %v2979 = vlog2.pop %v2978
    %v2980 = vmul.f32 %v2979, 0.6931472
    %v2981 = vmul.f32 -0.5, %v1930
    %v2982 = vadd.f32 %v2981, 1.0
    %v2983 = vmul.f32 %v2982, %v1930
    %v2984 = vand.u32 2147483647, %v1930
    %vm2985 = vcmp.lt.f32.partialorder %v2984, 0.0004427343
    %v2986 = vsel %vm2985, %v2983, %v2980
    %v2987 = vadd.f32 %v1931, 1.0
    %v2988 = vlog2.pop %v2987
    %v2989 = vmul.f32 %v2988, 0.6931472
    %v2990 = vmul.f32 -0.5, %v1931
    %v2991 = vadd.f32 %v2990, 1.0
    %v2992 = vmul.f32 %v2991, %v1931
    %v2993 = vand.u32 2147483647, %v1931
    %vm2994 = vcmp.lt.f32.partialorder %v2993, 0.0004427343
    %v2995 = vsel %vm2994, %v2992, %v2989
    %v2996 = vadd.f32 %v1932, 1.0
    %v2997 = vlog2.pop %v2996
    %v2998 = vmul.f32 %v2997, 0.6931472
    %v2999 = vmul.f32 -0.5, %v1932
    %v3000 = vadd.f32 %v2999, 1.0
    %v3001 = vmul.f32 %v3000, %v1932
    %v3002 = vand.u32 2147483647, %v1932
    %vm3003 = vcmp.lt.f32.partialorder %v3002, 0.0004427343
    %v3004 = vsel %vm3003, %v3001, %v2998
    %v3005 = vadd.f32 %v1933, 1.0
    %v3006 = vlog2.pop %v3005
    %v3007 = vmul.f32 %v3006, 0.6931472
    %v3008 = vmul.f32 -0.5, %v1933
    %v3009 = vadd.f32 %v3008, 1.0
    %v3010 = vmul.f32 %v3009, %v1933
    %v3011 = vand.u32 2147483647, %v1933
    %vm3012 = vcmp.lt.f32.partialorder %v3011, 0.0004427343
    %v3013 = vsel %vm3012, %v3010, %v3007
    %v3014 = vadd.f32 %v1934, 1.0
    %v3015 = vlog2.pop %v3014
    %v3016 = vmul.f32 %v3015, 0.6931472
    %v3017 = vmul.f32 -0.5, %v1934
    %v3018 = vadd.f32 %v3017, 1.0
    %v3019 = vmul.f32 %v3018, %v1934
    %v3020 = vand.u32 2147483647, %v1934
    %vm3021 = vcmp.lt.f32.partialorder %v3020, 0.0004427343
    %v3022 = vsel %vm3021, %v3019, %v3016
    %v3023 = vadd.f32 %v1935, 1.0
    %v3024 = vlog2.pop %v3023
    %v3025 = vmul.f32 %v3024, 0.6931472
    %v3026 = vmul.f32 -0.5, %v1935
    %v3027 = vadd.f32 %v3026, 1.0
    %v3028 = vmul.f32 %v3027, %v1935
    %v3029 = vand.u32 2147483647, %v1935
    %vm3030 = vcmp.lt.f32.partialorder %v3029, 0.0004427343
    %v3031 = vsel %vm3030, %v3028, %v3025
    %v3032 = vadd.f32 %v1936, 1.0
    %v3033 = vlog2.pop %v3032
    %v3034 = vmul.f32 %v3033, 0.6931472
    %v3035 = vmul.f32 -0.5, %v1936
    %v3036 = vadd.f32 %v3035, 1.0
    %v3037 = vmul.f32 %v3036, %v1936
    %v3038 = vand.u32 2147483647, %v1936
    %vm3039 = vcmp.lt.f32.partialorder %v3038, 0.0004427343
    %v3040 = vsel %vm3039, %v3037, %v3034
    %v3041 = vadd.f32 %v1937, 1.0
    %v3042 = vlog2.pop %v3041
    %v3043 = vmul.f32 %v3042, 0.6931472
    %v3044 = vmul.f32 -0.5, %v1937
    %v3045 = vadd.f32 %v3044, 1.0
    %v3046 = vmul.f32 %v3045, %v1937
    %v3047 = vand.u32 2147483647, %v1937
    %vm3048 = vcmp.lt.f32.partialorder %v3047, 0.0004427343
    %v3049 = vsel %vm3048, %v3046, %v3043
    %v3050 = vadd.f32 %v1938, 1.0
    %v3051 = vlog2.pop %v3050
    %v3052 = vmul.f32 %v3051, 0.6931472
    %v3053 = vmul.f32 -0.5, %v1938
    %v3054 = vadd.f32 %v3053, 1.0
    %v3055 = vmul.f32 %v3054, %v1938
    %v3056 = vand.u32 2147483647, %v1938
    %vm3057 = vcmp.lt.f32.partialorder %v3056, 0.0004427343
    %v3058 = vsel %vm3057, %v3055, %v3052
    %v3059 = vadd.f32 %v1939, 1.0
    %v3060 = vlog2.pop %v3059
    %v3061 = vmul.f32 %v3060, 0.6931472
    %v3062 = vmul.f32 -0.5, %v1939
    %v3063 = vadd.f32 %v3062, 1.0
    %v3064 = vmul.f32 %v3063, %v1939
    %v3065 = vand.u32 2147483647, %v1939
    %vm3066 = vcmp.lt.f32.partialorder %v3065, 0.0004427343
    %v3067 = vsel %vm3066, %v3064, %v3061
    %v3068 = vadd.f32 %v1940, 1.0
    %v3069 = vlog2.pop %v3068
    %v3070 = vmul.f32 %v3069, 0.6931472
    %v3071 = vmul.f32 -0.5, %v1940
    %v3072 = vadd.f32 %v3071, 1.0
    %v3073 = vmul.f32 %v3072, %v1940
    %v3074 = vand.u32 2147483647, %v1940
    %vm3075 = vcmp.lt.f32.partialorder %v3074, 0.0004427343
    %v3076 = vsel %vm3075, %v3073, %v3070
    %v3077 = vadd.f32 %v1941, 1.0
    %v3078 = vlog2.pop %v3077
    %v3079 = vmul.f32 %v3078, 0.6931472
    %v3080 = vmul.f32 -0.5, %v1941
    %v3081 = vadd.f32 %v3080, 1.0
    %v3082 = vmul.f32 %v3081, %v1941
    %v3083 = vand.u32 2147483647, %v1941
    %vm3084 = vcmp.lt.f32.partialorder %v3083, 0.0004427343
    %v3085 = vsel %vm3084, %v3082, %v3079
    %v3086 = vadd.f32 %v1942, 1.0
    %v3087 = vlog2.pop %v3086
    %v3088 = vmul.f32 %v3087, 0.6931472
    %v3089 = vmul.f32 -0.5, %v1942
    %v3090 = vadd.f32 %v3089, 1.0
    %v3091 = vmul.f32 %v3090, %v1942
    %v3092 = vand.u32 2147483647, %v1942
    %vm3093 = vcmp.lt.f32.partialorder %v3092, 0.0004427343
    %v3094 = vsel %vm3093, %v3091, %v3088
    %v3223 = vand.u32 %v23, 2147483648
    %v3224 = vand.u32 %v24, 2147483648
    %v3225 = vand.u32 %v25, 2147483648
    %v3226 = vand.u32 %v26, 2147483648
    %v3227 = vand.u32 %v27, 2147483648
    %v3228 = vand.u32 %v28, 2147483648
    %v3229 = vand.u32 %v29, 2147483648
    %v3230 = vand.u32 %v30, 2147483648
    %v3231 = vand.u32 %v31, 2147483648
    %v3232 = vand.u32 %v32, 2147483648
    %v3233 = vand.u32 %v33, 2147483648
    %v3234 = vand.u32 %v34, 2147483648
    %v3235 = vand.u32 %v35, 2147483648
    %v3236 = vand.u32 %v36, 2147483648
    %v3237 = vand.u32 %v37, 2147483648
    %v3238 = vand.u32 %v38, 2147483648
    %v3239 = vand.u32 %v39, 2147483648
    %v3240 = vand.u32 %v40, 2147483648
    %v3241 = vand.u32 %v41, 2147483648
    %v3242 = vand.u32 %v42, 2147483648
    %v3243 = vand.u32 %v43, 2147483648
    %v3244 = vand.u32 %v44, 2147483648
    %v3245 = vand.u32 %v45, 2147483648
    %v3246 = vand.u32 %v46, 2147483648
    %v3247 = vand.u32 %v47, 2147483648
    %v3248 = vand.u32 %v48, 2147483648
    %v3249 = vand.u32 %v49, 2147483648
    %v3250 = vand.u32 %v50, 2147483648
    %v3251 = vand.u32 %v51, 2147483648
    %v3252 = vand.u32 %v52, 2147483648
    %v3253 = vand.u32 %v53, 2147483648
    %v3254 = vand.u32 %v54, 2147483648
    %v3255 = vand.u32 %v55, 2147483648
    %v3256 = vand.u32 %v56, 2147483648
    %v3257 = vand.u32 %v57, 2147483648
    %v3258 = vand.u32 %v58, 2147483648
    %v3259 = vand.u32 %v59, 2147483648
    %v3260 = vand.u32 %v60, 2147483648
    %v3261 = vand.u32 %v61, 2147483648
    %v3262 = vand.u32 %v62, 2147483648
    %v3263 = vand.u32 %v63, 2147483648
    %v3264 = vand.u32 %v64, 2147483648
    %v3265 = vand.u32 %v65, 2147483648
    %v3266 = vand.u32 %v66, 2147483648
    %v3267 = vand.u32 %v67, 2147483648
    %v3268 = vand.u32 %v68, 2147483648
    %v3269 = vand.u32 %v69, 2147483648
    %v3270 = vand.u32 %v70, 2147483648
    %v3271 = vand.u32 %v71, 2147483648
    %v3272 = vand.u32 %v72, 2147483648
    %v3273 = vand.u32 %v73, 2147483648
    %v3274 = vand.u32 %v74, 2147483648
    %v3275 = vand.u32 %v75, 2147483648
    %v3276 = vand.u32 %v76, 2147483648
    %v3277 = vand.u32 %v77, 2147483648
    %v3278 = vand.u32 %v78, 2147483648
    %v3279 = vand.u32 %v79, 2147483648
    %v3280 = vand.u32 %v80, 2147483648
    %v3281 = vand.u32 %v81, 2147483648
    %v3282 = vand.u32 %v82, 2147483648
    %v3283 = vand.u32 %v83, 2147483648
    %v3284 = vand.u32 %v84, 2147483648
    %v3285 = vand.u32 %v85, 2147483648
    %v3286 = vand.u32 %v86, 2147483648
    %v3287 = vand.u32 %v87, 2147483648
    %v3288 = vand.u32 %v88, 2147483648
    %v3289 = vand.u32 %v89, 2147483648
    %v3290 = vand.u32 %v90, 2147483648
    %v3291 = vand.u32 %v91, 2147483648
    %v3292 = vand.u32 %v92, 2147483648
    %v3293 = vand.u32 %v93, 2147483648
    %v3294 = vand.u32 %v94, 2147483648
    %v3295 = vand.u32 %v95, 2147483648
    %v3296 = vand.u32 %v96, 2147483648
    %v3297 = vand.u32 %v97, 2147483648
    %v3298 = vand.u32 %v98, 2147483648
    %v3299 = vand.u32 %v99, 2147483648
    %v3300 = vand.u32 %v100, 2147483648
    %v3301 = vand.u32 %v101, 2147483648
    %v3302 = vand.u32 %v102, 2147483648
    %v3303 = vand.u32 %v103, 2147483648
    %v3304 = vand.u32 %v104, 2147483648
    %v3305 = vand.u32 %v105, 2147483648
    %v3306 = vand.u32 %v106, 2147483648
    %v3307 = vand.u32 %v107, 2147483648
    %v3308 = vand.u32 %v108, 2147483648
    %v3309 = vand.u32 %v109, 2147483648
    %v3310 = vand.u32 %v110, 2147483648
    %v3311 = vand.u32 %v111, 2147483648
    %v3312 = vand.u32 %v112, 2147483648
    %v3313 = vand.u32 %v113, 2147483648
    %v3314 = vand.u32 %v114, 2147483648
    %v3315 = vand.u32 %v115, 2147483648
    %v3316 = vand.u32 %v116, 2147483648
    %v3317 = vand.u32 %v117, 2147483648
    %v3318 = vand.u32 %v118, 2147483648
    %v3319 = vand.u32 %v119, 2147483648
    %v3320 = vand.u32 %v120, 2147483648
    %v3321 = vand.u32 %v121, 2147483648
    %v3322 = vand.u32 %v122, 2147483648
    %v3323 = vand.u32 %v123, 2147483648
    %v3324 = vand.u32 %v124, 2147483648
    %v3325 = vand.u32 %v125, 2147483648
    %v3326 = vand.u32 %v126, 2147483648
    %v3327 = vand.u32 %v127, 2147483648
    %v3328 = vand.u32 %v128, 2147483648
    %v3329 = vand.u32 %v129, 2147483648
    %v3330 = vand.u32 %v130, 2147483648
    %v3331 = vand.u32 %v131, 2147483648
    %v3332 = vand.u32 %v132, 2147483648
    %v3333 = vand.u32 %v133, 2147483648
    %v3334 = vand.u32 %v134, 2147483648
    %v3335 = vand.u32 %v135, 2147483648
    %v3336 = vand.u32 %v136, 2147483648
    %v3337 = vand.u32 %v137, 2147483648
    %v3338 = vand.u32 %v138, 2147483648
    %v3339 = vand.u32 %v139, 2147483648
    %v3340 = vand.u32 %v140, 2147483648
    %v3341 = vand.u32 %v141, 2147483648
    %v3342 = vand.u32 %v142, 2147483648
    %v3343 = vand.u32 %v143, 2147483648
    %v3344 = vand.u32 %v144, 2147483648
    %v3345 = vand.u32 %v145, 2147483648
    %v3346 = vand.u32 %v146, 2147483648
    %v3347 = vand.u32 %v147, 2147483648
    %v3348 = vand.u32 %v148, 2147483648
    %v3349 = vand.u32 %v149, 2147483648
    %v3350 = vand.u32 %v150, 2147483648
    %v3479 = vor.u32 %v1951, %v3223
    %v3480 = vor.u32 %v1960, %v3224
    %v3481 = vor.u32 %v1969, %v3225
    %v3482 = vor.u32 %v1978, %v3226
    %v3483 = vor.u32 %v1987, %v3227
    %v3484 = vor.u32 %v1996, %v3228
    %v3485 = vor.u32 %v2005, %v3229
    %v3486 = vor.u32 %v2014, %v3230
    %v3487 = vor.u32 %v2023, %v3231
    %v3488 = vor.u32 %v2032, %v3232
    %v3489 = vor.u32 %v2041, %v3233
    %v3490 = vor.u32 %v2050, %v3234
    %v3491 = vor.u32 %v2059, %v3235
    %v3492 = vor.u32 %v2068, %v3236
    %v3493 = vor.u32 %v2077, %v3237
    %v3494 = vor.u32 %v2086, %v3238
    %v3495 = vor.u32 %v2095, %v3239
    %v3496 = vor.u32 %v2104, %v3240
    %v3497 = vor.u32 %v2113, %v3241
    %v3498 = vor.u32 %v2122, %v3242
    %v3499 = vor.u32 %v2131, %v3243
    %v3500 = vor.u32 %v2140, %v3244
    %v3501 = vor.u32 %v2149, %v3245
    %v3502 = vor.u32 %v2158, %v3246
    %v3503 = vor.u32 %v2167, %v3247
    %v3504 = vor.u32 %v2176, %v3248
    %v3505 = vor.u32 %v2185, %v3249
    %v3506 = vor.u32 %v2194, %v3250
    %v3507 = vor.u32 %v2203, %v3251
    %v3508 = vor.u32 %v2212, %v3252
    %v3509 = vor.u32 %v2221, %v3253
    %v3510 = vor.u32 %v2230, %v3254
    %v3511 = vor.u32 %v2239, %v3255
    %v3512 = vor.u32 %v2248, %v3256
    %v3513 = vor.u32 %v2257, %v3257
    %v3514 = vor.u32 %v2266, %v3258
    %v3515 = vor.u32 %v2275, %v3259
    %v3516 = vor.u32 %v2284, %v3260
    %v3517 = vor.u32 %v2293, %v3261
    %v3518 = vor.u32 %v2302, %v3262
    %v3519 = vor.u32 %v2311, %v3263
    %v3520 = vor.u32 %v2320, %v3264
    %v3521 = vor.u32 %v2329, %v3265
    %v3522 = vor.u32 %v2338, %v3266
    %v3523 = vor.u32 %v2347, %v3267
    %v3524 = vor.u32 %v2356, %v3268
    %v3525 = vor.u32 %v2365, %v3269
    %v3526 = vor.u32 %v2374, %v3270
    %v3527 = vor.u32 %v2383, %v3271
    %v3528 = vor.u32 %v2392, %v3272
    %v3529 = vor.u32 %v2401, %v3273
    %v3530 = vor.u32 %v2410, %v3274
    %v3531 = vor.u32 %v2419, %v3275
    %v3532 = vor.u32 %v2428, %v3276
    %v3533 = vor.u32 %v2437, %v3277
    %v3534 = vor.u32 %v2446, %v3278
    %v3535 = vor.u32 %v2455, %v3279
    %v3536 = vor.u32 %v2464, %v3280
    %v3537 = vor.u32 %v2473, %v3281
    %v3538 = vor.u32 %v2482, %v3282
    %v3539 = vor.u32 %v2491, %v3283
    %v3540 = vor.u32 %v2500, %v3284
    %v3541 = vor.u32 %v2509, %v3285
    %v3542 = vor.u32 %v2518, %v3286
    %v3543 = vor.u32 %v2527, %v3287
    %v3544 = vor.u32 %v2536, %v3288
    %v3545 = vor.u32 %v2545, %v3289
    %v3546 = vor.u32 %v2554, %v3290
    %v3547 = vor.u32 %v2563, %v3291
    %v3548 = vor.u32 %v2572, %v3292
    %v3549 = vor.u32 %v2581, %v3293
    %v3550 = vor.u32 %v2590, %v3294
    %v3551 = vor.u32 %v2599, %v3295
    %v3552 = vor.u32 %v2608, %v3296
    %v3553 = vor.u32 %v2617, %v3297
    %v3554 = vor.u32 %v2626, %v3298
    %v3555 = vor.u32 %v2635, %v3299
    %v3556 = vor.u32 %v2644, %v3300
    %v3557 = vor.u32 %v2653, %v3301
    %v3558 = vor.u32 %v2662, %v3302
    %v3559 = vor.u32 %v2671, %v3303
    %v3560 = vor.u32 %v2680, %v3304
    %v3561 = vor.u32 %v2689, %v3305
    %v3562 = vor.u32 %v2698, %v3306
    %v3563 = vor.u32 %v2707, %v3307
    %v3564 = vor.u32 %v2716, %v3308
    %v3565 = vor.u32 %v2725, %v3309
    %v3566 = vor.u32 %v2734, %v3310
    %v3567 = vor.u32 %v2743, %v3311
    %v3568 = vor.u32 %v2752, %v3312
    %v3569 = vor.u32 %v2761, %v3313
    %v3570 = vor.u32 %v2770, %v3314
    %v3571 = vor.u32 %v2779, %v3315
    %v3572 = vor.u32 %v2788, %v3316
    %v3573 = vor.u32 %v2797, %v3317
    %v3574 = vor.u32 %v2806, %v3318
    %v3575 = vor.u32 %v2815, %v3319
    %v3576 = vor.u32 %v2824, %v3320
    %v3577 = vor.u32 %v2833, %v3321
    %v3578 = vor.u32 %v2842, %v3322
    %v3579 = vor.u32 %v2851, %v3323
    %v3580 = vor.u32 %v2860, %v3324
    %v3581 = vor.u32 %v2869, %v3325
    %v3582 = vor.u32 %v2878, %v3326
    %v3583 = vor.u32 %v2887, %v3327
    %v3584 = vor.u32 %v2896, %v3328
    %v3585 = vor.u32 %v2905, %v3329
    %v3586 = vor.u32 %v2914, %v3330
    %v3587 = vor.u32 %v2923, %v3331
    %v3588 = vor.u32 %v2932, %v3332
    %v3589 = vor.u32 %v2941, %v3333
    %v3590 = vor.u32 %v2950, %v3334
    %v3591 = vor.u32 %v2959, %v3335
    %v3592 = vor.u32 %v2968, %v3336
    %v3593 = vor.u32 %v2977, %v3337
    %v3594 = vor.u32 %v2986, %v3338
    %v3595 = vor.u32 %v2995, %v3339
    %v3596 = vor.u32 %v3004, %v3340
    %v3597 = vor.u32 %v3013, %v3341
    %v3598 = vor.u32 %v3022, %v3342
    %v3599 = vor.u32 %v3031, %v3343
    %v3600 = vor.u32 %v3040, %v3344
    %v3601 = vor.u32 %v3049, %v3345
    %v3602 = vor.u32 %v3058, %v3346
    %v3603 = vor.u32 %v3067, %v3347
    %v3604 = vor.u32 %v3076, %v3348
    %v3605 = vor.u32 %v3085, %v3349
    %v3606 = vor.u32 %v3094, %v3350
    %3735 = vst [vmem:[#allocation5] sm:$0xff] %v3479
    %3736 = vst [vmem:[#allocation5 + $0x8] sm:$0xff] %v3480
    %3737 = vst [vmem:[#allocation5 + $0x10] sm:$0xff] %v3481
    %3738 = vst [vmem:[#allocation5 + $0x18] sm:$0xff] %v3482
    %3739 = vst [vmem:[#allocation5 + $0x20] sm:$0xff] %v3483
    %3740 = vst [vmem:[#allocation5 + $0x28] sm:$0xff] %v3484
    %3741 = vst [vmem:[#allocation5 + $0x30] sm:$0xff] %v3485
    %3742 = vst [vmem:[#allocation5 + $0x38] sm:$0xff] %v3486
    %3743 = vst [vmem:[#allocation5 + $0x40] sm:$0xff] %v3487
    %3744 = vst [vmem:[#allocation5 + $0x48] sm:$0xff] %v3488
    %3745 = vst [vmem:[#allocation5 + $0x50] sm:$0xff] %v3489
    %3746 = vst [vmem:[#allocation5 + $0x58] sm:$0xff] %v3490
    %3747 = vst [vmem:[#allocation5 + $0x60] sm:$0xff] %v3491
    %3748 = vst [vmem:[#allocation5 + $0x68] sm:$0xff] %v3492
    %3749 = vst [vmem:[#allocation5 + $0x70] sm:$0xff] %v3493
    %3750 = vst [vmem:[#allocation5 + $0x78] sm:$0xff] %v3494
    %3751 = vst [vmem:[#allocation5 + $0x80] sm:$0xff] %v3495
    %3752 = vst [vmem:[#allocation5 + $0x88] sm:$0xff] %v3496
    %3753 = vst [vmem:[#allocation5 + $0x90] sm:$0xff] %v3497
    %3754 = vst [vmem:[#allocation5 + $0x98] sm:$0xff] %v3498
    %3755 = vst [vmem:[#allocation5 + $0xa0] sm:$0xff] %v3499
    %3756 = vst [vmem:[#allocation5 + $0xa8] sm:$0xff] %v3500
    %3757 = vst [vmem:[#allocation5 + $0xb0] sm:$0xff] %v3501
    %3758 = vst [vmem:[#allocation5 + $0xb8] sm:$0xff] %v3502
    %3759 = vst [vmem:[#allocation5 + $0xc0] sm:$0xff] %v3503
    %3760 = vst [vmem:[#allocation5 + $0xc8] sm:$0xff] %v3504
    %3761 = vst [vmem:[#allocation5 + $0xd0] sm:$0xff] %v3505
    %3762 = vst [vmem:[#allocation5 + $0xd8] sm:$0xff] %v3506
    %3763 = vst [vmem:[#allocation5 + $0xe0] sm:$0xff] %v3507
    %3764 = vst [vmem:[#allocation5 + $0xe8] sm:$0xff] %v3508
    %3765 = vst [vmem:[#allocation5 + $0xf0] sm:$0xff] %v3509
    %3766 = vst [vmem:[#allocation5 + $0xf8] sm:$0xff] %v3510
    %3767 = vst [vmem:[#allocation5 + $0x100] sm:$0xff] %v3511
    %3768 = vst [vmem:[#allocation5 + $0x108] sm:$0xff] %v3512
    %3769 = vst [vmem:[#allocation5 + $0x110] sm:$0xff] %v3513
    %3770 = vst [vmem:[#allocation5 + $0x118] sm:$0xff] %v3514
    %3771 = vst [vmem:[#allocation5 + $0x120] sm:$0xff] %v3515
    %3772 = vst [vmem:[#allocation5 + $0x128] sm:$0xff] %v3516
    %3773 = vst [vmem:[#allocation5 + $0x130] sm:$0xff] %v3517
    %3774 = vst [vmem:[#allocation5 + $0x138] sm:$0xff] %v3518
    %3775 = vst [vmem:[#allocation5 + $0x140] sm:$0xff] %v3519
    %3776 = vst [vmem:[#allocation5 + $0x148] sm:$0xff] %v3520
    %3777 = vst [vmem:[#allocation5 + $0x150] sm:$0xff] %v3521
    %3778 = vst [vmem:[#allocation5 + $0x158] sm:$0xff] %v3522
    %3779 = vst [vmem:[#allocation5 + $0x160] sm:$0xff] %v3523
    %3780 = vst [vmem:[#allocation5 + $0x168] sm:$0xff] %v3524
    %3781 = vst [vmem:[#allocation5 + $0x170] sm:$0xff] %v3525
    %3782 = vst [vmem:[#allocation5 + $0x178] sm:$0xff] %v3526
    %3783 = vst [vmem:[#allocation5 + $0x180] sm:$0xff] %v3527
    %3784 = vst [vmem:[#allocation5 + $0x188] sm:$0xff] %v3528
    %3785 = vst [vmem:[#allocation5 + $0x190] sm:$0xff] %v3529
    %3786 = vst [vmem:[#allocation5 + $0x198] sm:$0xff] %v3530
    %3787 = vst [vmem:[#allocation5 + $0x1a0] sm:$0xff] %v3531
    %3788 = vst [vmem:[#allocation5 + $0x1a8] sm:$0xff] %v3532
    %3789 = vst [vmem:[#allocation5 + $0x1b0] sm:$0xff] %v3533
    %3790 = vst [vmem:[#allocation5 + $0x1b8] sm:$0xff] %v3534
    %3791 = vst [vmem:[#allocation5 + $0x1c0] sm:$0xff] %v3535
    %3792 = vst [vmem:[#allocation5 + $0x1c8] sm:$0xff] %v3536
    %3793 = vst [vmem:[#allocation5 + $0x1d0] sm:$0xff] %v3537
    %3794 = vst [vmem:[#allocation5 + $0x1d8] sm:$0xff] %v3538
    %3795 = vst [vmem:[#allocation5 + $0x1e0] sm:$0xff] %v3539
    %3796 = vst [vmem:[#allocation5 + $0x1e8] sm:$0xff] %v3540
    %3797 = vst [vmem:[#allocation5 + $0x1f0] sm:$0xff] %v3541
    %3798 = vst [vmem:[#allocation5 + $0x1f8] sm:$0xff] %v3542
    %3799 = vst [vmem:[#allocation5 + $0x200] sm:$0xff] %v3543
    %3800 = vst [vmem:[#allocation5 + $0x208] sm:$0xff] %v3544
    %3801 = vst [vmem:[#allocation5 + $0x210] sm:$0xff] %v3545
    %3802 = vst [vmem:[#allocation5 + $0x218] sm:$0xff] %v3546
    %3803 = vst [vmem:[#allocation5 + $0x220] sm:$0xff] %v3547
    %3804 = vst [vmem:[#allocation5 + $0x228] sm:$0xff] %v3548
    %3805 = vst [vmem:[#allocation5 + $0x230] sm:$0xff] %v3549
    %3806 = vst [vmem:[#allocation5 + $0x238] sm:$0xff] %v3550
    %3807 = vst [vmem:[#allocation5 + $0x240] sm:$0xff] %v3551
    %3808 = vst [vmem:[#allocation5 + $0x248] sm:$0xff] %v3552
    %3809 = vst [vmem:[#allocation5 + $0x250] sm:$0xff] %v3553
    %3810 = vst [vmem:[#allocation5 + $0x258] sm:$0xff] %v3554
    %3811 = vst [vmem:[#allocation5 + $0x260] sm:$0xff] %v3555
    %3812 = vst [vmem:[#allocation5 + $0x268] sm:$0xff] %v3556
    %3813 = vst [vmem:[#allocation5 + $0x270] sm:$0xff] %v3557
    %3814 = vst [vmem:[#allocation5 + $0x278] sm:$0xff] %v3558
    %3815 = vst [vmem:[#allocation5 + $0x280] sm:$0xff] %v3559
    %3816 = vst [vmem:[#allocation5 + $0x288] sm:$0xff] %v3560
    %3817 = vst [vmem:[#allocation5 + $0x290] sm:$0xff] %v3561
    %3818 = vst [vmem:[#allocation5 + $0x298] sm:$0xff] %v3562
    %3819 = vst [vmem:[#allocation5 + $0x2a0] sm:$0xff] %v3563
    %3820 = vst [vmem:[#allocation5 + $0x2a8] sm:$0xff] %v3564
    %3821 = vst [vmem:[#allocation5 + $0x2b0] sm:$0xff] %v3565
    %3822 = vst [vmem:[#allocation5 + $0x2b8] sm:$0xff] %v3566
    %3823 = vst [vmem:[#allocation5 + $0x2c0] sm:$0xff] %v3567
    %3824 = vst [vmem:[#allocation5 + $0x2c8] sm:$0xff] %v3568
    %3825 = vst [vmem:[#allocation5 + $0x2d0] sm:$0xff] %v3569
    %3826 = vst [vmem:[#allocation5 + $0x2d8] sm:$0xff] %v3570
    %3827 = vst [vmem:[#allocation5 + $0x2e0] sm:$0xff] %v3571
    %3828 = vst [vmem:[#allocation5 + $0x2e8] sm:$0xff] %v3572
    %3829 = vst [vmem:[#allocation5 + $0x2f0] sm:$0xff] %v3573
    %3830 = vst [vmem:[#allocation5 + $0x2f8] sm:$0xff] %v3574
    %3831 = vst [vmem:[#allocation5 + $0x300] sm:$0xff] %v3575
    %3832 = vst [vmem:[#allocation5 + $0x308] sm:$0xff] %v3576
    %3833 = vst [vmem:[#allocation5 + $0x310] sm:$0xff] %v3577
    %3834 = vst [vmem:[#allocation5 + $0x318] sm:$0xff] %v3578
    %3835 = vst [vmem:[#allocation5 + $0x320] sm:$0xff] %v3579
    %3836 = vst [vmem:[#allocation5 + $0x328] sm:$0xff] %v3580
    %3837 = vst [vmem:[#allocation5 + $0x330] sm:$0xff] %v3581
    %3838 = vst [vmem:[#allocation5 + $0x338] sm:$0xff] %v3582
    %3839 = vst [vmem:[#allocation5 + $0x340] sm:$0xff] %v3583
    %3840 = vst [vmem:[#allocation5 + $0x348] sm:$0xff] %v3584
    %3841 = vst [vmem:[#allocation5 + $0x350] sm:$0xff] %v3585
    %3842 = vst [vmem:[#allocation5 + $0x358] sm:$0xff] %v3586
    %3843 = vst [vmem:[#allocation5 + $0x360] sm:$0xff] %v3587
    %3844 = vst [vmem:[#allocation5 + $0x368] sm:$0xff] %v3588
    %3845 = vst [vmem:[#allocation5 + $0x370] sm:$0xff] %v3589
    %3846 = vst [vmem:[#allocation5 + $0x378] sm:$0xff] %v3590
    %3847 = vst [vmem:[#allocation5 + $0x380] sm:$0xff] %v3591
    %3848 = vst [vmem:[#allocation5 + $0x388] sm:$0xff] %v3592
    %3849 = vst [vmem:[#allocation5 + $0x390] sm:$0xff] %v3593
    %3850 = vst [vmem:[#allocation5 + $0x398] sm:$0xff] %v3594
    %3851 = vst [vmem:[#allocation5 + $0x3a0] sm:$0xff] %v3595
    %3852 = vst [vmem:[#allocation5 + $0x3a8] sm:$0xff] %v3596
    %3853 = vst [vmem:[#allocation5 + $0x3b0] sm:$0xff] %v3597
    %3854 = vst [vmem:[#allocation5 + $0x3b8] sm:$0xff] %v3598
    %3855 = vst [vmem:[#allocation5 + $0x3c0] sm:$0xff] %v3599
    %3856 = vst [vmem:[#allocation5 + $0x3c8] sm:$0xff] %v3600
    %3857 = vst [vmem:[#allocation5 + $0x3d0] sm:$0xff] %v3601
    %3858 = vst [vmem:[#allocation5 + $0x3d8] sm:$0xff] %v3602
    %3859 = vst [vmem:[#allocation5 + $0x3e0] sm:$0xff] %v3603
    %3860 = vst [vmem:[#allocation5 + $0x3e8] sm:$0xff] %v3604
    %3861 = vst [vmem:[#allocation5 + $0x3f0] sm:$0xff] %v3605
    %3862 = vst [vmem:[#allocation5 + $0x3f8] sm:$0xff] %v3606
    // Predicated region
    $region10: #{tpu_custom_call.1} parent=1 // pred_check
      _
    $region11: #{tpu_custom_call.1} parent=1 // pred_check_branch
      %3864 = sbr.rel (0) target = $region13
    $region12: #{tpu_custom_call.1} parent=1 // pred_region
      %s3866 = ssub.s32 16384, 16384
      %3867 = vsyncadd [#allocation4], %s3866
      %s3868 = sshll.u32 [#allocation5], 4
      %s3869 = int_to_ptr.vmem [resolvable:$true] %s3868
      %3874 = dma.vmem_to_hbm [thread:$0]  %s3869, 16384, %s1, [#allocation4], 4096, 4096, 256
    $region13: #{tpu_custom_call.1} parent=1 // pred_fallthru
      _
    // Predicated region
    $region14: #{tpu_custom_call.1} parent=1 // pred_check
      _
    $region15: #{tpu_custom_call.1} parent=1 // pred_check_branch
      %3876 = sbr.rel (0) target = $region17
    $region16: #{tpu_custom_call.1} parent=1 // pred_region
      %3877 = dma.done [#allocation4], 16384
    $region17: #{tpu_custom_call.1} parent=1 // pred_fallthru
      _
    %3878 = vsyncpa [#allocation3], 1
    %3879 = vsyncpa [#allocation4], 1

</llo_original>
